<compile_context>
chip_gen: v6e
topology: v6e:2x2x1
jax: 0.10.0
libtpu: 0.0.40
codegen_flags: <defaults>
</compile_context>

<pallas_src>
import functools
import math

import jax
import jax.numpy as jnp
from jax.experimental import pallas as pl
from jax.experimental.pallas import tpu as pltpu

_VMEM_LIMIT = 32 * 1024 * 1024           # safe explicit scoped-VMEM budget on v5e/v6e/v7x
_NT = (((1,), (1,)), ((), ()))           # A @ B.T  (contract last dims)
_NN = (((1,), (0,)), ((), ()))           # A @ B


def _pick_tile(dim, candidates):
    """Largest candidate that evenly divides `dim`; fall back to the full dim
    (a full-dim block is always a legal TPU block shape)."""
    for c in candidates:
        if c <= dim and dim % c == 0:
            return c
    return dim


def _cparams(sem):
    return pltpu.CompilerParams(dimension_semantics=sem,
                                vmem_limit_bytes=_VMEM_LIMIT)


# --------------------------------------------------------------------------- fused QKV projection
def _qkv_kernel(x_ref, w_ref, b_ref, q_ref, k_ref, v_ref, acc_ref, *, d, scale):
    @pl.when(pl.program_id(1) == 0)
    def _init():
        acc_ref[...] = jnp.zeros_like(acc_ref)

    acc_ref[...] += jnp.dot(x_ref[...], w_ref[...],
                            preferred_element_type=jnp.float32)

    @pl.when(pl.program_id(1) == pl.num_programs(1) - 1)
    def _finalize():
        y = acc_ref[...] + b_ref[...].astype(jnp.float32)
        # 1/sqrt(head_dim) folded into q here (free: done once at finalize).
        q_ref[...] = (y[:, 0 * d:1 * d] * scale).astype(q_ref.dtype)
        k_ref[...] = y[:, 1 * d:2 * d].astype(k_ref.dtype)
        v_ref[...] = y[:, 2 * d:3 * d].astype(v_ref.dtype)


def qkv_proj(x, qkv_w, qkv_b, *, scale):
    """x:[M,D] bf16 @ qkv_w:[D,3D] bf16 + qkv_b -> (q,k,v) each [M,D] bf16.
    q is pre-scaled by 1/sqrt(head_dim).  No transposes needed downstream."""
    M, D = x.shape
    N3 = qkv_w.shape[1]
    tm = _pick_tile(M, (512, 256, 128, 64, 32, 16, 8))
    tk = _pick_tile(D, (2048, 1024, 768, 512, 256, 128))
    grid = (M // tm, D // tk)
    cost = pl.CostEstimate(
        flops=2 * M * D * N3, transcendentals=0,
        bytes_accessed=(M * D + D * N3 + M * N3) * x.dtype.itemsize + N3 * 4)
    out = jax.ShapeDtypeStruct((M, D), x.dtype)
    return pl.pallas_call(
        functools.partial(_qkv_kernel, d=D, scale=scale),
        out_shape=(out, out, out),
        grid=grid,
        in_specs=[
            pl.BlockSpec((tm, tk), lambda i, kk: (i, kk)),
            pl.BlockSpec((tk, N3), lambda i, kk: (kk, 0)),
            pl.BlockSpec((1, N3), lambda i, kk: (0, 0)),
        ],
        out_specs=(
            pl.BlockSpec((tm, D), lambda i, kk: (i, 0)),
            pl.BlockSpec((tm, D), lambda i, kk: (i, 0)),
            pl.BlockSpec((tm, D), lambda i, kk: (i, 0)),
        ),
        scratch_shapes=[pltpu.VMEM((tm, N3), jnp.float32)],
        compiler_params=_cparams(("parallel", "arbitrary")),
        cost_estimate=cost,
    )(x, qkv_w, qkv_b.reshape(1, N3))


# --------------------------------------------------------------------------- flash-style multi-head attention
def _flash_attn_kernel(q_ref, k_ref, v_ref, mask_ref, o_ref,
                       m_scr, l_scr, acc_scr, *, num_heads, head_dim):
    ki = pl.program_id(2)

    @pl.when(ki == 0)
    def _init():
        m_scr[...] = jnp.full_like(m_scr, -jnp.inf)
        l_scr[...] = jnp.zeros_like(l_scr)
        acc_scr[...] = jnp.zeros_like(acc_scr)

    mask = mask_ref[...].astype(jnp.float32)                      # (1, tk)

    # Static per-head loop over column slices of the merged-head layout; avoids
    # any [B,H,L,Dh] transpose in HBM and keeps the final store lane-dense.
    for h in range(num_heads):
        c0, c1 = h * head_dim, (h + 1) * head_dim
        q_h = q_ref[:, c0:c1]                                     # (tq, Dh) bf16, pre-scaled
        k_h = k_ref[:, c0:c1]                                     # (tk, Dh)
        v_h = v_ref[:, c0:c1]                                     # (tk, Dh)

        s = jax.lax.dot_general(q_h, k_h, _NT,
                                preferred_element_type=jnp.float32)   # (tq, tk) f32
        s = s + mask

        m_prev = m_scr[:, h:h + 1]
        m_new = jnp.maximum(m_prev, jnp.max(s, axis=-1, keepdims=True))
        alpha = jnp.exp(m_prev - m_new)
        p = jnp.exp(s - m_new)
        l_scr[:, h:h + 1] = alpha * l_scr[:, h:h + 1] + jnp.sum(p, axis=-1, keepdims=True)
        pv = jax.lax.dot_general(p.astype(v_h.dtype), v_h, _NN,
                                 preferred_element_type=jnp.float32)  # (tq, Dh)
        acc_scr[:, c0:c1] = alpha * acc_scr[:, c0:c1] + pv
        m_scr[:, h:h + 1] = m_new

    @pl.when(ki == pl.num_programs(2) - 1)
    def _finalize():
        for h in range(num_heads):
            c0, c1 = h * head_dim, (h + 1) * head_dim
            acc_scr[:, c0:c1] = acc_scr[:, c0:c1] / l_scr[:, h:h + 1]   # exact softmax norm
        o_ref[...] = acc_scr[...].astype(o_ref.dtype)                   # lane-dense (tq, D) store


def flash_attention(q, k, v, mask_add, *, num_heads):
    """q,k,v: [B,L,D] merged-head layout (q pre-scaled); mask_add: [B,1,L] additive.
    Returns context [B,L,D] in merged-head layout (no transposes)."""
    B, L, D = q.shape
    Dh = D // num_heads
    tq = _pick_tile(L, (256, 128, 64, 32, 16, 8))
    tk = _pick_tile(L, (512, 256, 128))
    grid = (B, L // tq, L // tk)
    cost = pl.CostEstimate(
        flops=4 * B * L * L * D,
        transcendentals=2 * B * num_heads * L * L,
        bytes_accessed=4 * B * L * D * q.dtype.itemsize + B * L * 4)
    return pl.pallas_call(
        functools.partial(_flash_attn_kernel, num_heads=num_heads, head_dim=Dh),
        out_shape=jax.ShapeDtypeStruct((B, L, D), q.dtype),
        grid=grid,
        in_specs=[
            pl.BlockSpec((None, tq, D), lambda b, qi, ki: (b, qi, 0)),
            pl.BlockSpec((None, tk, D), lambda b, qi, ki: (b, ki, 0)),
            pl.BlockSpec((None, tk, D), lambda b, qi, ki: (b, ki, 0)),
            pl.BlockSpec((None, 1, tk), lambda b, qi, ki: (b, 0, ki)),
        ],
        out_specs=pl.BlockSpec((None, tq, D), lambda b, qi, ki: (b, qi, 0)),
        scratch_shapes=[
            pltpu.VMEM((tq, num_heads), jnp.float32),     # running max per head
            pltpu.VMEM((tq, num_heads), jnp.float32),     # running denom per head
            pltpu.VMEM((tq, D), jnp.float32),             # lane-dense accumulator
        ],
        compiler_params=_cparams(("parallel", "parallel", "arbitrary")),
        cost_estimate=cost,
    )(q, k, v, mask_add)


# --------------------------------------------------------------------------- matmul + bias + residual + LayerNorm
def _dense_res_ln_kernel(x_ref, w_ref, b_ref, r_ref, g_ref, bb_ref, o_ref, acc_ref, *, eps):
    @pl.when(pl.program_id(1) == 0)
    def _init():
        acc_ref[...] = jnp.zeros_like(acc_ref)

    acc_ref[...] += jnp.dot(x_ref[...], w_ref[...],
                            preferred_element_type=jnp.float32)

    @pl.when(pl.program_id(1) == pl.num_programs(1) - 1)
    def _finalize():
        y = (acc_ref[...] + b_ref[...].astype(jnp.float32)
             + r_ref[...].astype(jnp.float32))
        mu = jnp.mean(y, axis=-1, keepdims=True)
        var = jnp.mean(jnp.square(y - mu), axis=-1, keepdims=True)
        yn = (y - mu) * jax.lax.rsqrt(var + eps)
        o_ref[...] = (yn * g_ref[...].astype(jnp.float32)
                      + bb_ref[...].astype(jnp.float32)).astype(o_ref.dtype)


def dense_res_ln(x, w, b, residual, gamma, beta, eps=1e-12):
    """LayerNorm(x @ w + b + residual); full-width N, reduction tiled (collapses when K small)."""
    M, K = x.shape
    N = w.shape[1]
    tm = _pick_tile(M, (512, 256, 128, 64, 32, 16, 8))
    tk = _pick_tile(K, (2048, 1024, 768, 512, 256, 128))
    grid = (M // tm, K // tk)
    cost = pl.CostEstimate(
        flops=2 * M * N * K + 10 * M * N, transcendentals=M,
        bytes_accessed=(M * K + K * N + 2 * M * N) * x.dtype.itemsize + 3 * N * 4)
    return pl.pallas_call(
        functools.partial(_dense_res_ln_kernel, eps=eps),
        out_shape=jax.ShapeDtypeStruct((M, N), x.dtype),
        grid=grid,
        in_specs=[
            pl.BlockSpec((tm, tk), lambda i, kk: (i, kk)),
            pl.BlockSpec((tk, N), lambda i, kk: (kk, 0)),
            pl.BlockSpec((1, N), lambda i, kk: (0, 0)),
            pl.BlockSpec((tm, N), lambda i, kk: (i, 0)),
            pl.BlockSpec((1, N), lambda i, kk: (0, 0)),
            pl.BlockSpec((1, N), lambda i, kk: (0, 0)),
        ],
        out_specs=pl.BlockSpec((tm, N), lambda i, kk: (i, 0)),
        scratch_shapes=[pltpu.VMEM((tm, N), jnp.float32)],
        compiler_params=_cparams(("parallel", "arbitrary")),
        cost_estimate=cost,
    )(x, w, b.reshape(1, N), residual, gamma.reshape(1, N), beta.reshape(1, N))


# --------------------------------------------------------------------------- fully fused FFN (GELU intermediate stays in VMEM)
def _ffn_kernel(x_ref, w1_ref, b1_ref, w2_ref, b2_ref, g_ref, bb_ref, o_ref,
                acc_ref, *, eps):
    @pl.when(pl.program_id(1) == 0)
    def _init():
        acc_ref[...] = jnp.zeros_like(acc_ref)

    h = jnp.dot(x_ref[...], w1_ref[...], preferred_element_type=jnp.float32)
    h = h + b1_ref[...].astype(jnp.float32)
    # TODO(synk): torch BERT GELU is erf-based; tanh approximation used because
    # erf lowering is not guaranteed in Mosaic (difference ~1e-3).
    h = jax.nn.gelu(h, approximate=True)
    acc_ref[...] += jnp.dot(h.astype(w2_ref.dtype), w2_ref[...],
                            preferred_element_type=jnp.float32)

    @pl.when(pl.program_id(1) == pl.num_programs(1) - 1)
    def _finalize():
        y = (acc_ref[...] + b2_ref[...].astype(jnp.float32)
             + x_ref[...].astype(jnp.float32))           # residual == FFN input tile
        mu = jnp.mean(y, axis=-1, keepdims=True)
        var = jnp.mean(jnp.square(y - mu), axis=-1, keepdims=True)
        yn = (y - mu) * jax.lax.rsqrt(var + eps)
        o_ref[...] = (yn * g_ref[...].astype(jnp.float32)
                      + bb_ref[...].astype(jnp.float32)).astype(o_ref.dtype)


def ffn_res_ln(x, w1, b1, w2, b2, gamma, beta, eps=1e-12):
    """LayerNorm(gelu(x @ w1 + b1) @ w2 + b2 + x) in one pallas_call; the
    [tm, intermediate] activation never touches HBM."""
    M, D = x.shape
    I = w1.shape[1]
    tm = _pick_tile(M, (512, 256, 128, 64, 32, 16, 8))
    ti = _pick_tile(I, (1024, 512, 256, 128))
    grid = (M // tm, I // ti)
    cost = pl.CostEstimate(
        flops=4 * M * D * I + 10 * M * D, transcendentals=M * I + M,
        bytes_accessed=(2 * M * D + 2 * D * I) * x.dtype.itemsize + (I + 3 * D) * 4)
    return pl.pallas_call(
        functools.partial(_ffn_kernel, eps=eps),
        out_shape=jax.ShapeDtypeStruct((M, D), x.dtype),
        grid=grid,
        in_specs=[
            pl.BlockSpec((tm, D), lambda i, j: (i, 0)),
            pl.BlockSpec((D, ti), lambda i, j: (0, j)),
            pl.BlockSpec((1, ti), lambda i, j: (0, j)),
            pl.BlockSpec((ti, D), lambda i, j: (j, 0)),
            pl.BlockSpec((1, D), lambda i, j: (0, 0)),
            pl.BlockSpec((1, D), lambda i, j: (0, 0)),
            pl.BlockSpec((1, D), lambda i, j: (0, 0)),
        ],
        out_specs=pl.BlockSpec((tm, D), lambda i, j: (i, 0)),
        scratch_shapes=[pltpu.VMEM((tm, D), jnp.float32)],
        compiler_params=_cparams(("parallel", "arbitrary")),
        cost_estimate=cost,
    )(x, w1, b1.reshape(1, I), w2, b2.reshape(1, D),
      gamma.reshape(1, D), beta.reshape(1, D))


# --------------------------------------------------------------------------- fused word_transform(tanh) + word_word_weight
def _word_mlp_kernel(x_ref, w1_ref, b1_ref, w2_ref, b2_ref, o_ref):
    t = jnp.dot(x_ref[...], w1_ref[...], preferred_element_type=jnp.float32)
    t = jnp.tanh(t + b1_ref[...].astype(jnp.float32))
    y = jnp.dot(t.astype(w2_ref.dtype), w2_ref[...],
                preferred_element_type=jnp.float32)
    o_ref[...] = (y + b2_ref[...].astype(jnp.float32)).astype(o_ref.dtype)


def word_mlp(x, w1, b1, w2, b2):
    """word_word_weight(tanh(word_transform(x))): [Mw,Dw] -> [Mw,D], single HBM pass."""
    Mw, Dw = x.shape
    D = w1.shape[1]
    tm = _pick_tile(Mw, (512, 256, 128, 64, 32, 16, 8))
    grid = (Mw // tm,)
    # TODO(synk): if word_embed_dim < 128 the (tm, Dw) input blocks are lane-sparse;
    # zero-padding Dw to 128 would feed the MXU better.
    return pl.pallas_call(
        _word_mlp_kernel,
        out_shape=jax.ShapeDtypeStruct((Mw, D), x.dtype),
        grid=grid,
        in_specs=[
            pl.BlockSpec((tm, Dw), lambda i: (i, 0)),
            pl.BlockSpec((Dw, D), lambda i: (0, 0)),
            pl.BlockSpec((1, D), lambda i: (0, 0)),
            pl.BlockSpec((D, D), lambda i: (0, 0)),
            pl.BlockSpec((1, D), lambda i: (0, 0)),
        ],
        out_specs=pl.BlockSpec((tm, D), lambda i: (i, 0)),
        compiler_params=_cparams(("parallel",)),
    )(x, w1, b1.reshape(1, D), w2, b2.reshape(1, D))


# --------------------------------------------------------------------------- lexicon word-attention fusion + residual + LayerNorm
def _word_fusion_ln_kernel(lo_ref, wo_ref, wm_ref, aw_ref, g_ref, b_ref, o_ref, *, eps):
    lo = lo_ref[...]                                          # (tm, D) bf16
    wo = wo_ref[...].astype(jnp.float32)                      # (tm, W, D)
    wm = wm_ref[...].astype(jnp.float32)                      # (tm, W)

    tmp = jnp.dot(lo, aw_ref[...], preferred_element_type=jnp.float32)    # (tm, D)
    alpha = jnp.sum(tmp[:, None, :] * wo, axis=-1)                         # (tm, W)
    alpha = alpha + (1.0 - wm) * (-10000.0)
    alpha = alpha - jnp.max(alpha, axis=-1, keepdims=True)
    p = jnp.exp(alpha)
    p = p / jnp.sum(p, axis=-1, keepdims=True)                             # exact softmax
    weighted = jnp.sum(p[:, :, None] * wo, axis=1)                         # (tm, D)

    y = lo.astype(jnp.float32) + weighted
    mu = jnp.mean(y, axis=-1, keepdims=True)
    var = jnp.mean(jnp.square(y - mu), axis=-1, keepdims=True)
    yn = (y - mu) * jax.lax.rsqrt(var + eps)
    o_ref[...] = (yn * g_ref[...].astype(jnp.float32)
                  + b_ref[...].astype(jnp.float32)).astype(o_ref.dtype)


def word_fusion_ln(layer_out, word_out, word_mask, attn_W, gamma, beta, eps=1e-12):
    M, D = layer_out.shape
    W = word_out.shape[1]
    # tm capped at 128: the (tm, W, D) f32 word block dominates VMEM (v5e's 16 MiB default).
    tm = _pick_tile(M, (128, 64, 32, 16, 8))
    grid = (M // tm,)
    return pl.pallas_call(
        functools.partial(_word_fusion_ln_kernel, eps=eps),
        out_shape=jax.ShapeDtypeStruct((M, D), layer_out.dtype),
        grid=grid,
        in_specs=[
            pl.BlockSpec((tm, D), lambda i: (i, 0)),
            pl.BlockSpec((tm, W, D), lambda i: (i, 0, 0)),
            pl.BlockSpec((tm, W), lambda i: (i, 0)),
            pl.BlockSpec((D, D), lambda i: (0, 0)),
            pl.BlockSpec((1, D), lambda i: (0, 0)),
            pl.BlockSpec((1, D), lambda i: (0, 0)),
        ],
        out_specs=pl.BlockSpec((tm, D), lambda i: (i, 0)),
        compiler_params=_cparams(("parallel",)),
    )(layer_out, word_out, word_mask, attn_W, gamma.reshape(1, D), beta.reshape(1, D))


# --------------------------------------------------------------------------- model glue
def bert_layer_forward(p, hidden, attn_mask_add, word_emb, word_mask, cfg, has_word_attn):
    B, L, D = hidden.shape
    H = cfg["num_attention_heads"]
    Dh = D // H
    bf16 = jnp.bfloat16
    x2 = hidden.reshape(B * L, D)                       # bf16

    # --- self attention: fused QKV projection, 1/sqrt(Dh) folded into q ---
    q, k, v = qkv_proj(x2, p["qkv_w"].astype(bf16), p["qkv_b"],
                       scale=1.0 / math.sqrt(Dh))
    ctx = flash_attention(q.reshape(B, L, D), k.reshape(B, L, D), v.reshape(B, L, D),
                          attn_mask_add.reshape(B, 1, L), num_heads=H)
    ctx2 = ctx.reshape(B * L, D)                        # free reshape; no transposes anywhere

    attn_out = dense_res_ln(ctx2, p["ao_w"].astype(bf16), p["ao_b"], x2,
                            p["aln_g"], p["aln_b"])

    # --- feed forward (intermediate never leaves VMEM) ---
    layer_out = ffn_res_ln(attn_out, p["i_w"].astype(bf16), p["i_b"],
                           p["o_w"].astype(bf16), p["o_b"],
                           p["oln_g"], p["oln_b"])

    # --- lexicon word attention fusion (only layers in add_layers) ---
    if has_word_attn:
        _, _, W, Dw = word_emb.shape
        we = word_emb.reshape(B * L * W, Dw).astype(bf16)
        wo = word_mlp(we, p["wt_w"].astype(bf16), p["wt_b"],
                      p["ww_w"].astype(bf16), p["ww_b"])
        layer_out = word_fusion_ln(layer_out, wo.reshape(B * L, W, D),
                                   word_mask.reshape(B * L, W),
                                   p["attn_W"].astype(bf16),
                                   p["fln_g"], p["fln_b"])

    return layer_out.reshape(B, L, D)


def bert_encoder_forward(params, hidden, attn_mask_add, word_emb, word_mask, cfg):
    out_dtype = hidden.dtype
    # bf16 activations between kernels (f32 accumulation / LN inside kernels).
    h = hidden.astype(jnp.bfloat16)
    for i in range(cfg["num_hidden_layers"]):
        h = bert_layer_forward(
            params[i], h, attn_mask_add, word_emb, word_mask, cfg,
            has_word_attn=(i in cfg["add_layers"]),
        )
    return h.astype(out_dtype)


# --------------------------------------------------------------------------- param init
def init_params(key, cfg):
    D = cfg["hidden_size"]
    I = cfg["intermediate_size"]
    Dw = cfg["word_embed_dim"]
    std = cfg["initializer_range"]

    def lin(k, fan_in, fan_out):
        return jax.random.normal(k, (fan_in, fan_out), jnp.float32) * std

    params = []
    for i in range(cfg["num_hidden_layers"]):
        key, *ks = jax.random.split(key, 12)
        p = {
            # fused QKV weight [D, 3D] (== concat of the three torch Linear weights)
            "qkv_w": jnp.concatenate([lin(ks[0], D, D), lin(ks[1], D, D), lin(ks[2], D, D)], axis=1),
            "qkv_b": jnp.zeros((3 * D,), jnp.float32),
            "ao_w": lin(ks[3], D, D), "ao_b": jnp.zeros((D,), jnp.float32),
            "aln_g": jnp.ones((D,), jnp.float32), "aln_b": jnp.zeros((D,), jnp.float32),
            "i_w": lin(ks[4], D, I), "i_b": jnp.zeros((I,), jnp.float32),
            "o_w": lin(ks[5], I, D), "o_b": jnp.zeros((D,), jnp.float32),
            "oln_g": jnp.ones((D,), jnp.float32), "oln_b": jnp.zeros((D,), jnp.float32),
        }
        if i in cfg["add_layers"]:
            p.update({
                "wt_w": lin(ks[6], Dw, D), "wt_b": jnp.zeros((D,), jnp.float32),
                "ww_w": lin(ks[7], D, D), "ww_b": jnp.zeros((D,), jnp.float32),
                "attn_W": lin(ks[8], D, D),
                "fln_g": jnp.ones((D,), jnp.float32), "fln_b": jnp.zeros((D,), jnp.float32),
            })
        params.append(p)
    return params


# --------------------------------------------------------------------------- main
if __name__ == "__main__":
    cfg = {
        "num_hidden_layers": 2,
        "add_layers": (1,),            # layers with lexicon word attention
        "hidden_size": 32,
        "num_attention_heads": 4,
        "intermediate_size": 64,
        "word_embed_dim": 16,
        "initializer_range": 0.02,
    }
    B, L, W = 2, 8, 4
    D, Dw = cfg["hidden_size"], cfg["word_embed_dim"]

    key = jax.random.PRNGKey(0)
    key, k_h, k_w, k_p = jax.random.split(key, 4)

    hidden_states = jax.random.normal(k_h, (B, L, D), jnp.float32)
    # binary attention mask (last 2 tokens of batch 1 padded) -> additive extended mask
    attn_mask = jnp.ones((B, L), jnp.float32).at[1, -2:].set(0.0)
    attn_mask_add = (1.0 - attn_mask)[:, None, None, :] * -10000.0        # [B,1,1,L]
    input_word_embeddings = jax.random.normal(k_w, (B, L, W, Dw), jnp.float32)
    input_word_mask = jnp.ones((B, L, W), jnp.float32).at[:, :, -1].set(0.0)

    params = init_params(k_p, cfg)

    fwd = jax.jit(functools.partial(bert_encoder_forward, cfg=cfg))
    out = fwd(params, hidden_states, attn_mask_add, input_word_embeddings, input_word_mask)
    out = jax.block_until_ready(out)

    assert out.shape == (B, L, D) and out.dtype == jnp.float32
    assert bool(jnp.all(jnp.isfinite(out)))
    print("KERNEL_OK")
</pallas_src>

<mosaic_0001>
module attributes {stable_mosaic.version = 11 : i64} {
  func.func @_qkv_kernel(%arg0: i32, %arg1: i32, %arg2: memref<16x32xbf16, #tpu.memory_space<vmem>>, %arg3: memref<32x96xbf16, #tpu.memory_space<vmem>>, %arg4: memref<1x96xf32, #tpu.memory_space<vmem>>, %arg5: memref<16x32xbf16, #tpu.memory_space<vmem>>, %arg6: memref<16x32xbf16, #tpu.memory_space<vmem>>, %arg7: memref<16x32xbf16, #tpu.memory_space<vmem>>, %arg8: memref<16x96xf32, #tpu.memory_space<vmem>>) attributes {dimension_semantics = [#tpu.dimension_semantics<parallel>, #tpu.dimension_semantics<arbitrary>], iteration_bounds = array<i64: 1, 1>, scalar_prefetch = 0 : i64, scratch_operands = 1 : i64, tpu.core_type = #tpu.core_type<tc>, window_params = [{transform_indices = @transform_0, window_bounds = array<i64: 16, 32>}, {transform_indices = @transform_1, window_bounds = array<i64: 32, 96>}, {pipeline_mode = #tpu.pipeline_mode<synchronous>, transform_indices = @transform_2, window_bounds = array<i64: 1, 96>}, {transform_indices = @transform_3, window_bounds = array<i64: 16, 32>}, {transform_indices = @transform_4, window_bounds = array<i64: 16, 32>}, {transform_indices = @transform_5, window_bounds = array<i64: 16, 32>}]} {
    %c0_i32 = arith.constant 0 : i32
    %0 = arith.cmpi eq, %arg1, %c0_i32 : i32
    %1 = arith.extui %0 : i1 to i32
    %c0_i32_0 = arith.constant 0 : i32
    %2 = arith.cmpi ne, %1, %c0_i32_0 : i32
    scf.if %2 {
      %cst_10 = arith.constant 0.000000e+00 : f32
      %12 = vector.broadcast %cst_10 : f32 to vector<16x96xf32>
      %c0_11 = arith.constant 0 : index
      %c0_12 = arith.constant 0 : index
      %13 = vector.load %arg8[%c0_11, %c0_12] : memref<16x96xf32, #tpu.memory_space<vmem>>, vector<16x96xf32>
      tpu.vector_store %arg8[%c0_11, %c0_12], %12 {strides = array<i32>} : memref<16x96xf32, #tpu.memory_space<vmem>>, vector<16x96xf32>,
    } else {
    }
    %c0 = arith.constant 0 : index
    %c0_1 = arith.constant 0 : index
    %3 = vector.load %arg8[%c0, %c0_1] : memref<16x96xf32, #tpu.memory_space<vmem>>, vector<16x96xf32>
    %c0_2 = arith.constant 0 : index
    %c0_3 = arith.constant 0 : index
    %4 = vector.load %arg2[%c0_2, %c0_3] : memref<16x32xbf16, #tpu.memory_space<vmem>>, vector<16x32xbf16>
    %c0_4 = arith.constant 0 : index
    %c0_5 = arith.constant 0 : index
    %5 = vector.load %arg3[%c0_4, %c0_5] : memref<32x96xbf16, #tpu.memory_space<vmem>>, vector<32x96xbf16>
    %cst = arith.constant dense<0.000000e+00> : vector<16x96xf32>
    %6 = tpu.matmul %4, %5, %cst {dimension_numbers = #tpu.dot_dimension_numbers<[1], [0], [0], [1], [0, 0, 1, 1], [], []>} : vector<16x32xbf16>, vector<32x96xbf16>, vector<16x96xf32> -> vector<16x96xf32>
    %7 = arith.addf %3, %6 : vector<16x96xf32>
    %c0_6 = arith.constant 0 : index
    %c0_7 = arith.constant 0 : index
    %8 = vector.load %arg8[%c0_6, %c0_7] : memref<16x96xf32, #tpu.memory_space<vmem>>, vector<16x96xf32>
    tpu.vector_store %arg8[%c0_6, %c0_7], %7 {strides = array<i32>} : memref<16x96xf32, #tpu.memory_space<vmem>>, vector<16x96xf32>,
    %c0_i32_8 = arith.constant 0 : i32
    %9 = arith.cmpi eq, %arg1, %c0_i32_8 : i32
    %10 = arith.extui %9 : i1 to i32
    %c0_i32_9 = arith.constant 0 : i32
    %11 = arith.cmpi ne, %10, %c0_i32_9 : i32
    scf.if %11 {
      %c0_10 = arith.constant 0 : index
      %c0_11 = arith.constant 0 : index
      %12 = vector.load %arg8[%c0_10, %c0_11] : memref<16x96xf32, #tpu.memory_space<vmem>>, vector<16x96xf32>
      %c0_12 = arith.constant 0 : index
      %c0_13 = arith.constant 0 : index
      %13 = vector.load %arg4[%c0_12, %c0_13] : memref<1x96xf32, #tpu.memory_space<vmem>>, vector<1x96xf32>
      %14 = vector.broadcast %13 : vector<1x96xf32> to vector<16x96xf32>
      %15 = arith.addf %12, %14 : vector<16x96xf32>
      %16 = vector.extract_strided_slice %15 {offsets = [0, 0], sizes = [16, 32], strides = [1, 1]} : vector<16x96xf32> to vector<16x32xf32>
      %cst_14 = arith.constant 0.353553385 : f32
      %17 = vector.broadcast %cst_14 : f32 to vector<16x32xf32>
      %18 = arith.mulf %16, %17 : vector<16x32xf32>
      %19 = arith.truncf %18 : vector<16x32xf32> to vector<16x32xbf16>
      %c0_15 = arith.constant 0 : index
      %c0_16 = arith.constant 0 : index
      %20 = vector.load %arg5[%c0_15, %c0_16] : memref<16x32xbf16, #tpu.memory_space<vmem>>, vector<16x32xbf16>
      tpu.vector_store %arg5[%c0_15, %c0_16], %19 {strides = array<i32>} : memref<16x32xbf16, #tpu.memory_space<vmem>>, vector<16x32xbf16>,
      %21 = vector.extract_strided_slice %15 {offsets = [0, 32], sizes = [16, 32], strides = [1, 1]} : vector<16x96xf32> to vector<16x32xf32>
      %22 = arith.truncf %21 : vector<16x32xf32> to vector<16x32xbf16>
      %c0_17 = arith.constant 0 : index
      %c0_18 = arith.constant 0 : index
      %23 = vector.load %arg6[%c0_17, %c0_18] : memref<16x32xbf16, #tpu.memory_space<vmem>>, vector<16x32xbf16>
      tpu.vector_store %arg6[%c0_17, %c0_18], %22 {strides = array<i32>} : memref<16x32xbf16, #tpu.memory_space<vmem>>, vector<16x32xbf16>,
      %24 = vector.extract_strided_slice %15 {offsets = [0, 64], sizes = [16, 32], strides = [1, 1]} : vector<16x96xf32> to vector<16x32xf32>
      %25 = arith.truncf %24 : vector<16x32xf32> to vector<16x32xbf16>
      %c0_19 = arith.constant 0 : index
      %c0_20 = arith.constant 0 : index
      %26 = vector.load %arg7[%c0_19, %c0_20] : memref<16x32xbf16, #tpu.memory_space<vmem>>, vector<16x32xbf16>
      tpu.vector_store %arg7[%c0_19, %c0_20], %25 {strides = array<i32>} : memref<16x32xbf16, #tpu.memory_space<vmem>>, vector<16x32xbf16>,
    } else {
    }
    return
  }
  func.func @transform_0(%arg0: i32, %arg1: i32) -> (i32, i32) {
    %c0_i32 = arith.constant 0 : i32
    return %arg0, %arg1 : i32, i32
  }
  func.func @transform_1(%arg0: i32, %arg1: i32) -> (i32, i32) {
    %c0_i32 = arith.constant 0 : i32
    %c0_i32_0 = arith.constant 0 : i32
    return %arg1, %c0_i32 : i32, i32
  }
  func.func @transform_2(%arg0: i32, %arg1: i32) -> (i32, i32) {
    %c0_i32 = arith.constant 0 : i32
    %c0_i32_0 = arith.constant 0 : i32
    %c0_i32_1 = arith.constant 0 : i32
    return %c0_i32, %c0_i32_0 : i32, i32
  }
  func.func @transform_3(%arg0: i32, %arg1: i32) -> (i32, i32) {
    %c0_i32 = arith.constant 0 : i32
    %c0_i32_0 = arith.constant 0 : i32
    return %arg0, %c0_i32 : i32, i32
  }
  func.func @transform_4(%arg0: i32, %arg1: i32) -> (i32, i32) {
    %c0_i32 = arith.constant 0 : i32
    %c0_i32_0 = arith.constant 0 : i32
    return %arg0, %c0_i32 : i32, i32
  }
  func.func @transform_5(%arg0: i32, %arg1: i32) -> (i32, i32) {
    %c0_i32 = arith.constant 0 : i32
    %c0_i32_0 = arith.constant 0 : i32
    return %arg0, %c0_i32 : i32, i32
  }
}

module attributes {stable_mosaic.version = 11 : i64} {
  func.func @_flash_attn_kernel(%arg0: i32, %arg1: i32, %arg2: i32, %arg3: memref<1x8x32xbf16, #tpu.memory_space<vmem>>, %arg4: memref<1x8x32xbf16, #tpu.memory_space<vmem>>, %arg5: memref<1x8x32xbf16, #tpu.memory_space<vmem>>, %arg6: memref<1x1x8xf32, #tpu.memory_space<vmem>>, %arg7: memref<1x8x32xbf16, #tpu.memory_space<vmem>>, %arg8: memref<8x4xf32, #tpu.memory_space<vmem>>, %arg9: memref<8x4xf32, #tpu.memory_space<vmem>>, %arg10: memref<8x32xf32, #tpu.memory_space<vmem>>) attributes {dimension_semantics = [#tpu.dimension_semantics<parallel>, #tpu.dimension_semantics<parallel>, #tpu.dimension_semantics<arbitrary>], iteration_bounds = array<i64: 2, 1, 1>, scalar_prefetch = 0 : i64, scratch_operands = 3 : i64, tpu.core_type = #tpu.core_type<tc>, window_params = [{transform_indices = @transform_0, window_bounds = array<i64: 1, 8, 32>}, {transform_indices = @transform_1, window_bounds = array<i64: 1, 8, 32>}, {transform_indices = @transform_2, window_bounds = array<i64: 1, 8, 32>}, {transform_indices = @transform_3, window_bounds = array<i64: 1, 1, 8>}, {transform_indices = @transform_4, window_bounds = array<i64: 1, 8, 32>}]} {
    %c0_i32 = arith.constant 0 : i32
    %0 = arith.cmpi eq, %arg2, %c0_i32 : i32
    %1 = arith.extui %0 : i1 to i32
    %c0_i32_0 = arith.constant 0 : i32
    %2 = arith.cmpi ne, %1, %c0_i32_0 : i32
    scf.if %2 {
      %cst_98 = arith.constant 0xFF800000 : f32
      %136 = vector.broadcast %cst_98 : f32 to vector<8x4xf32>
      %c0_99 = arith.constant 0 : index
      %c0_100 = arith.constant 0 : index
      %137 = vector.load %arg8[%c0_99, %c0_100] : memref<8x4xf32, #tpu.memory_space<vmem>>, vector<8x4xf32>
      tpu.vector_store %arg8[%c0_99, %c0_100], %136 {strides = array<i32>} : memref<8x4xf32, #tpu.memory_space<vmem>>, vector<8x4xf32>,
      %cst_101 = arith.constant 0.000000e+00 : f32
      %138 = vector.broadcast %cst_101 : f32 to vector<8x4xf32>
      %c0_102 = arith.constant 0 : index
      %c0_103 = arith.constant 0 : index
      %139 = vector.load %arg9[%c0_102, %c0_103] : memref<8x4xf32, #tpu.memory_space<vmem>>, vector<8x4xf32>
      tpu.vector_store %arg9[%c0_102, %c0_103], %138 {strides = array<i32>} : memref<8x4xf32, #tpu.memory_space<vmem>>, vector<8x4xf32>,
      %cst_104 = arith.constant 0.000000e+00 : f32
      %140 = vector.broadcast %cst_104 : f32 to vector<8x32xf32>
      %c0_105 = arith.constant 0 : index
      %c0_106 = arith.constant 0 : index
      %141 = vector.load %arg10[%c0_105, %c0_106] : memref<8x32xf32, #tpu.memory_space<vmem>>, vector<8x32xf32>
      tpu.vector_store %arg10[%c0_105, %c0_106], %140 {strides = array<i32>} : memref<8x32xf32, #tpu.memory_space<vmem>>, vector<8x32xf32>,
    } else {
    }
    %c0 = arith.constant 0 : index
    %c0_1 = arith.constant 0 : index
    %c0_2 = arith.constant 0 : index
    %3 = vector.load %arg6[%c0, %c0_1, %c0_2] : memref<1x1x8xf32, #tpu.memory_space<vmem>>, vector<1x1x8xf32>
    %4 = vector.shape_cast %3 : vector<1x1x8xf32> to vector<1x8xf32>
    %c0_3 = arith.constant 0 : index
    %c0_4 = arith.constant 0 : index
    %c0_5 = arith.constant 0 : index
    %5 = vector.load %arg3[%c0_3, %c0_4, %c0_5] : memref<1x8x32xbf16, #tpu.memory_space<vmem>>, vector<1x8x8xbf16>
    %6 = vector.shape_cast %5 : vector<1x8x8xbf16> to vector<8x8xbf16>
    %c0_6 = arith.constant 0 : index
    %c0_7 = arith.constant 0 : index
    %c0_8 = arith.constant 0 : index
    %7 = vector.load %arg4[%c0_6, %c0_7, %c0_8] : memref<1x8x32xbf16, #tpu.memory_space<vmem>>, vector<1x8x8xbf16>
    %8 = vector.shape_cast %7 : vector<1x8x8xbf16> to vector<8x8xbf16>
    %c0_9 = arith.constant 0 : index
    %c0_10 = arith.constant 0 : index
    %c0_11 = arith.constant 0 : index
    %9 = vector.load %arg5[%c0_9, %c0_10, %c0_11] : memref<1x8x32xbf16, #tpu.memory_space<vmem>>, vector<1x8x8xbf16>
    %10 = vector.shape_cast %9 : vector<1x8x8xbf16> to vector<8x8xbf16>
    %cst = arith.constant dense<0.000000e+00> : vector<8x8xf32>
    %11 = tpu.matmul %6, %8, %cst {dimension_numbers = #tpu.dot_dimension_numbers<[1], [1], [0], [0], [0, 0, 1, 0], [], []>} : vector<8x8xbf16>, vector<8x8xbf16>, vector<8x8xf32> -> vector<8x8xf32>
    %12 = vector.broadcast %4 : vector<1x8xf32> to vector<8x8xf32>
    %13 = arith.addf %11, %12 : vector<8x8xf32>
    %c0_12 = arith.constant 0 : index
    %c0_13 = arith.constant 0 : index
    %14 = vector.load %arg8[%c0_12, %c0_13] : memref<8x4xf32, #tpu.memory_space<vmem>>, vector<8x1xf32>
    %cst_14 = arith.constant dense<0xFF800000> : vector<8xf32>
    %15 = vector.multi_reduction <maximumf>, %13, %cst_14 [1] : vector<8x8xf32> to vector<8xf32>
    %16 = vector.shape_cast %15 : vector<8xf32> to vector<8x1xf32>
    %17 = arith.maximumf %14, %16 : vector<8x1xf32>
    %18 = arith.subf %14, %17 : vector<8x1xf32>
    %19 = math.exp %18 : vector<8x1xf32>
    %20 = vector.broadcast %17 : vector<8x1xf32> to vector<8x8xf32>
    %21 = arith.subf %13, %20 : vector<8x8xf32>
    %22 = math.exp %21 : vector<8x8xf32>
    %c0_15 = arith.constant 0 : index
    %c0_16 = arith.constant 0 : index
    %23 = vector.load %arg9[%c0_15, %c0_16] : memref<8x4xf32, #tpu.memory_space<vmem>>, vector<8x1xf32>
    %24 = arith.mulf %19, %23 : vector<8x1xf32>
    %cst_17 = arith.constant dense<0.000000e+00> : vector<8xf32>
    %25 = vector.multi_reduction <add>, %22, %cst_17 [1] : vector<8x8xf32> to vector<8xf32>
    %26 = vector.shape_cast %25 : vector<8xf32> to vector<8x1xf32>
    %27 = arith.addf %24, %26 : vector<8x1xf32>
    %c0_18 = arith.constant 0 : index
    %c0_19 = arith.constant 0 : index
    %28 = vector.load %arg9[%c0_18, %c0_19] : memref<8x4xf32, #tpu.memory_space<vmem>>, vector<8x1xf32>
    tpu.vector_store %arg9[%c0_18, %c0_19], %27 {strides = array<i32>} : memref<8x4xf32, #tpu.memory_space<vmem>>, vector<8x1xf32>,
    %29 = arith.truncf %22 : vector<8x8xf32> to vector<8x8xbf16>
    %cst_20 = arith.constant dense<0.000000e+00> : vector<8x8xf32>
    %30 = tpu.matmul %29, %10, %cst_20 {dimension_numbers = #tpu.dot_dimension_numbers<[1], [0], [0], [1], [0, 0, 1, 1], [], []>} : vector<8x8xbf16>, vector<8x8xbf16>, vector<8x8xf32> -> vector<8x8xf32>
    %c0_21 = arith.constant 0 : index
    %c0_22 = arith.constant 0 : index
    %31 = vector.load %arg10[%c0_21, %c0_22] : memref<8x32xf32, #tpu.memory_space<vmem>>, vector<8x8xf32>
    %32 = vector.broadcast %19 : vector<8x1xf32> to vector<8x8xf32>
    %33 = arith.mulf %32, %31 : vector<8x8xf32>
    %34 = arith.addf %33, %30 : vector<8x8xf32>
    %c0_23 = arith.constant 0 : index
    %c0_24 = arith.constant 0 : index
    %35 = vector.load %arg10[%c0_23, %c0_24] : memref<8x32xf32, #tpu.memory_space<vmem>>, vector<8x8xf32>
    tpu.vector_store %arg10[%c0_23, %c0_24], %34 {strides = array<i32>} : memref<8x32xf32, #tpu.memory_space<vmem>>, vector<8x8xf32>,
    %c0_25 = arith.constant 0 : index
    %c0_26 = arith.constant 0 : index
    %36 = vector.load %arg8[%c0_25, %c0_26] : memref<8x4xf32, #tpu.memory_space<vmem>>, vector<8x1xf32>
    tpu.vector_store %arg8[%c0_25, %c0_26], %17 {strides = array<i32>} : memref<8x4xf32, #tpu.memory_space<vmem>>, vector<8x1xf32>,
    %c0_27 = arith.constant 0 : index
    %c0_28 = arith.constant 0 : index
    %c8 = arith.constant 8 : index
    %37 = vector.load %arg3[%c0_27, %c0_28, %c8] : memref<1x8x32xbf16, #tpu.memory_space<vmem>>, vector<1x8x8xbf16>
    %38 = vector.shape_cast %37 : vector<1x8x8xbf16> to vector<8x8xbf16>
    %c0_29 = arith.constant 0 : index
    %c0_30 = arith.constant 0 : index
    %c8_31 = arith.constant 8 : index
    %39 = vector.load %arg4[%c0_29, %c0_30, %c8_31] : memref<1x8x32xbf16, #tpu.memory_space<vmem>>, vector<1x8x8xbf16>
    %40 = vector.shape_cast %39 : vector<1x8x8xbf16> to vector<8x8xbf16>
    %c0_32 = arith.constant 0 : index
    %c0_33 = arith.constant 0 : index
    %c8_34 = arith.constant 8 : index
    %41 = vector.load %arg5[%c0_32, %c0_33, %c8_34] : memref<1x8x32xbf16, #tpu.memory_space<vmem>>, vector<1x8x8xbf16>
    %42 = vector.shape_cast %41 : vector<1x8x8xbf16> to vector<8x8xbf16>
    %cst_35 = arith.constant dense<0.000000e+00> : vector<8x8xf32>
    %43 = tpu.matmul %38, %40, %cst_35 {dimension_numbers = #tpu.dot_dimension_numbers<[1], [1], [0], [0], [0, 0, 1, 0], [], []>} : vector<8x8xbf16>, vector<8x8xbf16>, vector<8x8xf32> -> vector<8x8xf32>
    %44 = vector.broadcast %4 : vector<1x8xf32> to vector<8x8xf32>
    %45 = arith.addf %43, %44 : vector<8x8xf32>
    %c0_36 = arith.constant 0 : index
    %c1 = arith.constant 1 : index
    %46 = vector.load %arg8[%c0_36, %c1] : memref<8x4xf32, #tpu.memory_space<vmem>>, vector<8x1xf32>
    %cst_37 = arith.constant dense<0xFF800000> : vector<8xf32>
    %47 = vector.multi_reduction <maximumf>, %45, %cst_37 [1] : vector<8x8xf32> to vector<8xf32>
    %48 = vector.shape_cast %47 : vector<8xf32> to vector<8x1xf32>
    %49 = arith.maximumf %46, %48 : vector<8x1xf32>
    %50 = arith.subf %46, %49 : vector<8x1xf32>
    %51 = math.exp %50 : vector<8x1xf32>
    %52 = vector.broadcast %49 : vector<8x1xf32> to vector<8x8xf32>
    %53 = arith.subf %45, %52 : vector<8x8xf32>
    %54 = math.exp %53 : vector<8x8xf32>
    %c0_38 = arith.constant 0 : index
    %c1_39 = arith.constant 1 : index
    %55 = vector.load %arg9[%c0_38, %c1_39] : memref<8x4xf32, #tpu.memory_space<vmem>>, vector<8x1xf32>
    %56 = arith.mulf %51, %55 : vector<8x1xf32>
    %cst_40 = arith.constant dense<0.000000e+00> : vector<8xf32>
    %57 = vector.multi_reduction <add>, %54, %cst_40 [1] : vector<8x8xf32> to vector<8xf32>
    %58 = vector.shape_cast %57 : vector<8xf32> to vector<8x1xf32>
    %59 = arith.addf %56, %58 : vector<8x1xf32>
    %c0_41 = arith.constant 0 : index
    %c1_42 = arith.constant 1 : index
    %60 = vector.load %arg9[%c0_41, %c1_42] : memref<8x4xf32, #tpu.memory_space<vmem>>, vector<8x1xf32>
    tpu.vector_store %arg9[%c0_41, %c1_42], %59 {strides = array<i32>} : memref<8x4xf32, #tpu.memory_space<vmem>>, vector<8x1xf32>,
    %61 = arith.truncf %54 : vector<8x8xf32> to vector<8x8xbf16>
    %cst_43 = arith.constant dense<0.000000e+00> : vector<8x8xf32>
    %62 = tpu.matmul %61, %42, %cst_43 {dimension_numbers = #tpu.dot_dimension_numbers<[1], [0], [0], [1], [0, 0, 1, 1], [], []>} : vector<8x8xbf16>, vector<8x8xbf16>, vector<8x8xf32> -> vector<8x8xf32>
    %c0_44 = arith.constant 0 : index
    %c8_45 = arith.constant 8 : index
    %63 = vector.load %arg10[%c0_44, %c8_45] : memref<8x32xf32, #tpu.memory_space<vmem>>, vector<8x8xf32>
    %64 = vector.broadcast %51 : vector<8x1xf32> to vector<8x8xf32>
    %65 = arith.mulf %64, %63 : vector<8x8xf32>
    %66 = arith.addf %65, %62 : vector<8x8xf32>
    %c0_46 = arith.constant 0 : index
    %c8_47 = arith.constant 8 : index
    %67 = vector.load %arg10[%c0_46, %c8_47] : memref<8x32xf32, #tpu.memory_space<vmem>>, vector<8x8xf32>
    tpu.vector_store %arg10[%c0_46, %c8_47], %66 {strides = array<i32>} : memref<8x32xf32, #tpu.memory_space<vmem>>, vector<8x8xf32>,
    %c0_48 = arith.constant 0 : index
    %c1_49 = arith.constant 1 : index
    %68 = vector.load %arg8[%c0_48, %c1_49] : memref<8x4xf32, #tpu.memory_space<vmem>>, vector<8x1xf32>
    tpu.vector_store %arg8[%c0_48, %c1_49], %49 {strides = array<i32>} : memref<8x4xf32, #tpu.memory_space<vmem>>, vector<8x1xf32>,
    %c0_50 = arith.constant 0 : index
    %c0_51 = arith.constant 0 : index
    %c16 = arith.constant 16 : index
    %69 = vector.load %arg3[%c0_50, %c0_51, %c16] : memref<1x8x32xbf16, #tpu.memory_space<vmem>>, vector<1x8x8xbf16>
    %70 = vector.shape_cast %69 : vector<1x8x8xbf16> to vector<8x8xbf16>
    %c0_52 = arith.constant 0 : index
    %c0_53 = arith.constant 0 : index
    %c16_54 = arith.constant 16 : index
    %71 = vector.load %arg4[%c0_52, %c0_53, %c16_54] : memref<1x8x32xbf16, #tpu.memory_space<vmem>>, vector<1x8x8xbf16>
    %72 = vector.shape_cast %71 : vector<1x8x8xbf16> to vector<8x8xbf16>
    %c0_55 = arith.constant 0 : index
    %c0_56 = arith.constant 0 : index
    %c16_57 = arith.constant 16 : index
    %73 = vector.load %arg5[%c0_55, %c0_56, %c16_57] : memref<1x8x32xbf16, #tpu.memory_space<vmem>>, vector<1x8x8xbf16>
    %74 = vector.shape_cast %73 : vector<1x8x8xbf16> to vector<8x8xbf16>
    %cst_58 = arith.constant dense<0.000000e+00> : vector<8x8xf32>
    %75 = tpu.matmul %70, %72, %cst_58 {dimension_numbers = #tpu.dot_dimension_numbers<[1], [1], [0], [0], [0, 0, 1, 0], [], []>} : vector<8x8xbf16>, vector<8x8xbf16>, vector<8x8xf32> -> vector<8x8xf32>
    %76 = vector.broadcast %4 : vector<1x8xf32> to vector<8x8xf32>
    %77 = arith.addf %75, %76 : vector<8x8xf32>
    %c0_59 = arith.constant 0 : index
    %c2 = arith.constant 2 : index
    %78 = vector.load %arg8[%c0_59, %c2] : memref<8x4xf32, #tpu.memory_space<vmem>>, vector<8x1xf32>
    %cst_60 = arith.constant dense<0xFF800000> : vector<8xf32>
    %79 = vector.multi_reduction <maximumf>, %77, %cst_60 [1] : vector<8x8xf32> to vector<8xf32>
    %80 = vector.shape_cast %79 : vector<8xf32> to vector<8x1xf32>
    %81 = arith.maximumf %78, %80 : vector<8x1xf32>
    %82 = arith.subf %78, %81 : vector<8x1xf32>
    %83 = math.exp %82 : vector<8x1xf32>
    %84 = vector.broadcast %81 : vector<8x1xf32> to vector<8x8xf32>
    %85 = arith.subf %77, %84 : vector<8x8xf32>
    %86 = math.exp %85 : vector<8x8xf32>
    %c0_61 = arith.constant 0 : index
    %c2_62 = arith.constant 2 : index
    %87 = vector.load %arg9[%c0_61, %c2_62] : memref<8x4xf32, #tpu.memory_space<vmem>>, vector<8x1xf32>
    %88 = arith.mulf %83, %87 : vector<8x1xf32>
    %cst_63 = arith.constant dense<0.000000e+00> : vector<8xf32>
    %89 = vector.multi_reduction <add>, %86, %cst_63 [1] : vector<8x8xf32> to vector<8xf32>
    %90 = vector.shape_cast %89 : vector<8xf32> to vector<8x1xf32>
    %91 = arith.addf %88, %90 : vector<8x1xf32>
    %c0_64 = arith.constant 0 : index
    %c2_65 = arith.constant 2 : index
    %92 = vector.load %arg9[%c0_64, %c2_65] : memref<8x4xf32, #tpu.memory_space<vmem>>, vector<8x1xf32>
    tpu.vector_store %arg9[%c0_64, %c2_65], %91 {strides = array<i32>} : memref<8x4xf32, #tpu.memory_space<vmem>>, vector<8x1xf32>,
    %93 = arith.truncf %86 : vector<8x8xf32> to vector<8x8xbf16>
    %cst_66 = arith.constant dense<0.000000e+00> : vector<8x8xf32>
    %94 = tpu.matmul %93, %74, %cst_66 {dimension_numbers = #tpu.dot_dimension_numbers<[1], [0], [0], [1], [0, 0, 1, 1], [], []>} : vector<8x8xbf16>, vector<8x8xbf16>, vector<8x8xf32> -> vector<8x8xf32>
    %c0_67 = arith.constant 0 : index
    %c16_68 = arith.constant 16 : index
    %95 = vector.load %arg10[%c0_67, %c16_68] : memref<8x32xf32, #tpu.memory_space<vmem>>, vector<8x8xf32>
    %96 = vector.broadcast %83 : vector<8x1xf32> to vector<8x8xf32>
    %97 = arith.mulf %96, %95 : vector<8x8xf32>
    %98 = arith.addf %97, %94 : vector<8x8xf32>
    %c0_69 = arith.constant 0 : index
    %c16_70 = arith.constant 16 : index
    %99 = vector.load %arg10[%c0_69, %c16_70] : memref<8x32xf32, #tpu.memory_space<vmem>>, vector<8x8xf32>
    tpu.vector_store %arg10[%c0_69, %c16_70], %98 {strides = array<i32>} : memref<8x32xf32, #tpu.memory_space<vmem>>, vector<8x8xf32>,
    %c0_71 = arith.constant 0 : index
    %c2_72 = arith.constant 2 : index
    %100 = vector.load %arg8[%c0_71, %c2_72] : memref<8x4xf32, #tpu.memory_space<vmem>>, vector<8x1xf32>
    tpu.vector_store %arg8[%c0_71, %c2_72], %81 {strides = array<i32>} : memref<8x4xf32, #tpu.memory_space<vmem>>, vector<8x1xf32>,
    %c0_73 = arith.constant 0 : index
    %c0_74 = arith.constant 0 : index
    %c24 = arith.constant 24 : index
    %101 = vector.load %arg3[%c0_73, %c0_74, %c24] : memref<1x8x32xbf16, #tpu.memory_space<vmem>>, vector<1x8x8xbf16>
    %102 = vector.shape_cast %101 : vector<1x8x8xbf16> to vector<8x8xbf16>
    %c0_75 = arith.constant 0 : index
    %c0_76 = arith.constant 0 : index
    %c24_77 = arith.constant 24 : index
    %103 = vector.load %arg4[%c0_75, %c0_76, %c24_77] : memref<1x8x32xbf16, #tpu.memory_space<vmem>>, vector<1x8x8xbf16>
    %104 = vector.shape_cast %103 : vector<1x8x8xbf16> to vector<8x8xbf16>
    %c0_78 = arith.constant 0 : index
    %c0_79 = arith.constant 0 : index
    %c24_80 = arith.constant 24 : index
    %105 = vector.load %arg5[%c0_78, %c0_79, %c24_80] : memref<1x8x32xbf16, #tpu.memory_space<vmem>>, vector<1x8x8xbf16>
    %106 = vector.shape_cast %105 : vector<1x8x8xbf16> to vector<8x8xbf16>
    %cst_81 = arith.constant dense<0.000000e+00> : vector<8x8xf32>
    %107 = tpu.matmul %102, %104, %cst_81 {dimension_numbers = #tpu.dot_dimension_numbers<[1], [1], [0], [0], [0, 0, 1, 0], [], []>} : vector<8x8xbf16>, vector<8x8xbf16>, vector<8x8xf32> -> vector<8x8xf32>
    %108 = vector.broadcast %4 : vector<1x8xf32> to vector<8x8xf32>
    %109 = arith.addf %107, %108 : vector<8x8xf32>
    %c0_82 = arith.constant 0 : index
    %c3 = arith.constant 3 : index
    %110 = vector.load %arg8[%c0_82, %c3] : memref<8x4xf32, #tpu.memory_space<vmem>>, vector<8x1xf32>
    %cst_83 = arith.constant dense<0xFF800000> : vector<8xf32>
    %111 = vector.multi_reduction <maximumf>, %109, %cst_83 [1] : vector<8x8xf32> to vector<8xf32>
    %112 = vector.shape_cast %111 : vector<8xf32> to vector<8x1xf32>
    %113 = arith.maximumf %110, %112 : vector<8x1xf32>
    %114 = arith.subf %110, %113 : vector<8x1xf32>
    %115 = math.exp %114 : vector<8x1xf32>
    %116 = vector.broadcast %113 : vector<8x1xf32> to vector<8x8xf32>
    %117 = arith.subf %109, %116 : vector<8x8xf32>
    %118 = math.exp %117 : vector<8x8xf32>
    %c0_84 = arith.constant 0 : index
    %c3_85 = arith.constant 3 : index
    %119 = vector.load %arg9[%c0_84, %c3_85] : memref<8x4xf32, #tpu.memory_space<vmem>>, vector<8x1xf32>
    %120 = arith.mulf %115, %119 : vector<8x1xf32>
    %cst_86 = arith.constant dense<0.000000e+00> : vector<8xf32>
    %121 = vector.multi_reduction <add>, %118, %cst_86 [1] : vector<8x8xf32> to vector<8xf32>
    %122 = vector.shape_cast %121 : vector<8xf32> to vector<8x1xf32>
    %123 = arith.addf %120, %122 : vector<8x1xf32>
    %c0_87 = arith.constant 0 : index
    %c3_88 = arith.constant 3 : index
    %124 = vector.load %arg9[%c0_87, %c3_88] : memref<8x4xf32, #tpu.memory_space<vmem>>, vector<8x1xf32>
    tpu.vector_store %arg9[%c0_87, %c3_88], %123 {strides = array<i32>} : memref<8x4xf32, #tpu.memory_space<vmem>>, vector<8x1xf32>,
    %125 = arith.truncf %118 : vector<8x8xf32> to vector<8x8xbf16>
    %cst_89 = arith.constant dense<0.000000e+00> : vector<8x8xf32>
    %126 = tpu.matmul %125, %106, %cst_89 {dimension_numbers = #tpu.dot_dimension_numbers<[1], [0], [0], [1], [0, 0, 1, 1], [], []>} : vector<8x8xbf16>, vector<8x8xbf16>, vector<8x8xf32> -> vector<8x8xf32>
    %c0_90 = arith.constant 0 : index
    %c24_91 = arith.constant 24 : index
    %127 = vector.load %arg10[%c0_90, %c24_91] : memref<8x32xf32, #tpu.memory_space<vmem>>, vector<8x8xf32>
    %128 = vector.broadcast %115 : vector<8x1xf32> to vector<8x8xf32>
    %129 = arith.mulf %128, %127 : vector<8x8xf32>
    %130 = arith.addf %129, %126 : vector<8x8xf32>
    %c0_92 = arith.constant 0 : index
    %c24_93 = arith.constant 24 : index
    %131 = vector.load %arg10[%c0_92, %c24_93] : memref<8x32xf32, #tpu.memory_space<vmem>>, vector<8x8xf32>
    tpu.vector_store %arg10[%c0_92, %c24_93], %130 {strides = array<i32>} : memref<8x32xf32, #tpu.memory_space<vmem>>, vector<8x8xf32>,
    %c0_94 = arith.constant 0 : index
    %c3_95 = arith.constant 3 : index
    %132 = vector.load %arg8[%c0_94, %c3_95] : memref<8x4xf32, #tpu.memory_space<vmem>>, vector<8x1xf32>
    tpu.vector_store %arg8[%c0_94, %c3_95], %113 {strides = array<i32>} : memref<8x4xf32, #tpu.memory_space<vmem>>, vector<8x1xf32>,
    %c0_i32_96 = arith.constant 0 : i32
    %133 = arith.cmpi eq, %arg2, %c0_i32_96 : i32
    %134 = arith.extui %133 : i1 to i32
    %c0_i32_97 = arith.constant 0 : i32
    %135 = arith.cmpi ne, %134, %c0_i32_97 : i32
    scf.if %135 {
      %c0_98 = arith.constant 0 : index
      %c0_99 = arith.constant 0 : index
      %136 = vector.load %arg10[%c0_98, %c0_99] : memref<8x32xf32, #tpu.memory_space<vmem>>, vector<8x8xf32>
      %c0_100 = arith.constant 0 : index
      %c0_101 = arith.constant 0 : index
      %137 = vector.load %arg9[%c0_100, %c0_101] : memref<8x4xf32, #tpu.memory_space<vmem>>, vector<8x1xf32>
      %138 = vector.broadcast %137 : vector<8x1xf32> to vector<8x8xf32>
      %139 = arith.divf %136, %138 : vector<8x8xf32>
      %c0_102 = arith.constant 0 : index
      %c0_103 = arith.constant 0 : index
      %140 = vector.load %arg10[%c0_102, %c0_103] : memref<8x32xf32, #tpu.memory_space<vmem>>, vector<8x8xf32>
      tpu.vector_store %arg10[%c0_102, %c0_103], %139 {strides = array<i32>} : memref<8x32xf32, #tpu.memory_space<vmem>>, vector<8x8xf32>,
      %c0_104 = arith.constant 0 : index
      %c8_105 = arith.constant 8 : index
      %141 = vector.load %arg10[%c0_104, %c8_105] : memref<8x32xf32, #tpu.memory_space<vmem>>, vector<8x8xf32>
      %c0_106 = arith.constant 0 : index
      %c1_107 = arith.constant 1 : index
      %142 = vector.load %arg9[%c0_106, %c1_107] : memref<8x4xf32, #tpu.memory_space<vmem>>, vector<8x1xf32>
      %143 = vector.broadcast %142 : vector<8x1xf32> to vector<8x8xf32>
      %144 = arith.divf %141, %143 : vector<8x8xf32>
      %c0_108 = arith.constant 0 : index
      %c8_109 = arith.constant 8 : index
      %145 = vector.load %arg10[%c0_108, %c8_109] : memref<8x32xf32, #tpu.memory_space<vmem>>, vector<8x8xf32>
      tpu.vector_store %arg10[%c0_108, %c8_109], %144 {strides = array<i32>} : memref<8x32xf32, #tpu.memory_space<vmem>>, vector<8x8xf32>,
      %c0_110 = arith.constant 0 : index
      %c16_111 = arith.constant 16 : index
      %146 = vector.load %arg10[%c0_110, %c16_111] : memref<8x32xf32, #tpu.memory_space<vmem>>, vector<8x8xf32>
      %c0_112 = arith.constant 0 : index
      %c2_113 = arith.constant 2 : index
      %147 = vector.load %arg9[%c0_112, %c2_113] : memref<8x4xf32, #tpu.memory_space<vmem>>, vector<8x1xf32>
      %148 = vector.broadcast %147 : vector<8x1xf32> to vector<8x8xf32>
      %149 = arith.divf %146, %148 : vector<8x8xf32>
      %c0_114 = arith.constant 0 : index
      %c16_115 = arith.constant 16 : index
      %150 = vector.load %arg10[%c0_114, %c16_115] : memref<8x32xf32, #tpu.memory_space<vmem>>, vector<8x8xf32>
      tpu.vector_store %arg10[%c0_114, %c16_115], %149 {strides = array<i32>} : memref<8x32xf32, #tpu.memory_space<vmem>>, vector<8x8xf32>,
      %c0_116 = arith.constant 0 : index
      %c24_117 = arith.constant 24 : index
      %151 = vector.load %arg10[%c0_116, %c24_117] : memref<8x32xf32, #tpu.memory_space<vmem>>, vector<8x8xf32>
      %c0_118 = arith.constant 0 : index
      %c3_119 = arith.constant 3 : index
      %152 = vector.load %arg9[%c0_118, %c3_119] : memref<8x4xf32, #tpu.memory_space<vmem>>, vector<8x1xf32>
      %153 = vector.broadcast %152 : vector<8x1xf32> to vector<8x8xf32>
      %154 = arith.divf %151, %153 : vector<8x8xf32>
      %c0_120 = arith.constant 0 : index
      %c24_121 = arith.constant 24 : index
      %155 = vector.load %arg10[%c0_120, %c24_121] : memref<8x32xf32, #tpu.memory_space<vmem>>, vector<8x8xf32>
      tpu.vector_store %arg10[%c0_120, %c24_121], %154 {strides = array<i32>} : memref<8x32xf32, #tpu.memory_space<vmem>>, vector<8x8xf32>,
      %c0_122 = arith.constant 0 : index
      %c0_123 = arith.constant 0 : index
      %156 = vector.load %arg10[%c0_122, %c0_123] : memref<8x32xf32, #tpu.memory_space<vmem>>, vector<8x32xf32>
      %157 = arith.truncf %156 : vector<8x32xf32> to vector<8x32xbf16>
      %c0_124 = arith.constant 0 : index
      %c0_125 = arith.constant 0 : index
      %c0_126 = arith.constant 0 : index
      %158 = vector.load %arg7[%c0_124, %c0_125, %c0_126] : memref<1x8x32xbf16, #tpu.memory_space<vmem>>, vector<1x8x32xbf16>
      %159 = vector.shape_cast %158 : vector<1x8x32xbf16> to vector<8x32xbf16>
      %160 = vector.shape_cast %157 : vector<8x32xbf16> to vector<1x8x32xbf16>
      tpu.vector_store %arg7[%c0_124, %c0_125, %c0_126], %160 {strides = array<i32>} : memref<1x8x32xbf16, #tpu.memory_space<vmem>>, vector<1x8x32xbf16>,
    } else {
    }
    return
  }
  func.func @transform_0(%arg0: i32, %arg1: i32, %arg2: i32) -> (i32, i32, i32) {
    %c0_i32 = arith.constant 0 : i32
    %c0_i32_0 = arith.constant 0 : i32
    return %arg0, %arg1, %c0_i32 : i32, i32, i32
  }
  func.func @transform_1(%arg0: i32, %arg1: i32, %arg2: i32) -> (i32, i32, i32) {
    %c0_i32 = arith.constant 0 : i32
    %c0_i32_0 = arith.constant 0 : i32
    return %arg0, %arg2, %c0_i32 : i32, i32, i32
  }
  func.func @transform_2(%arg0: i32, %arg1: i32, %arg2: i32) -> (i32, i32, i32) {
    %c0_i32 = arith.constant 0 : i32
    %c0_i32_0 = arith.constant 0 : i32
    return %arg0, %arg2, %c0_i32 : i32, i32, i32
  }
  func.func @transform_3(%arg0: i32, %arg1: i32, %arg2: i32) -> (i32, i32, i32) {
    %c0_i32 = arith.constant 0 : i32
    %c0_i32_0 = arith.constant 0 : i32
    return %arg0, %c0_i32, %arg2 : i32, i32, i32
  }
  func.func @transform_4(%arg0: i32, %arg1: i32, %arg2: i32) -> (i32, i32, i32) {
    %c0_i32 = arith.constant 0 : i32
    %c0_i32_0 = arith.constant 0 : i32
    return %arg0, %arg1, %c0_i32 : i32, i32, i32
  }
}

module attributes {stable_mosaic.version = 11 : i64} {
  func.func @_dense_res_ln_kernel(%arg0: i32, %arg1: i32, %arg2: memref<16x32xbf16, #tpu.memory_space<vmem>>, %arg3: memref<32x32xbf16, #tpu.memory_space<vmem>>, %arg4: memref<1x32xf32, #tpu.memory_space<vmem>>, %arg5: memref<16x32xbf16, #tpu.memory_space<vmem>>, %arg6: memref<1x32xf32, #tpu.memory_space<vmem>>, %arg7: memref<1x32xf32, #tpu.memory_space<vmem>>, %arg8: memref<16x32xbf16, #tpu.memory_space<vmem>>, %arg9: memref<16x32xf32, #tpu.memory_space<vmem>>) attributes {dimension_semantics = [#tpu.dimension_semantics<parallel>, #tpu.dimension_semantics<arbitrary>], iteration_bounds = array<i64: 1, 1>, scalar_prefetch = 0 : i64, scratch_operands = 1 : i64, tpu.core_type = #tpu.core_type<tc>, window_params = [{transform_indices = @transform_0, window_bounds = array<i64: 16, 32>}, {transform_indices = @transform_1, window_bounds = array<i64: 32, 32>}, {pipeline_mode = #tpu.pipeline_mode<synchronous>, transform_indices = @transform_2, window_bounds = array<i64: 1, 32>}, {transform_indices = @transform_3, window_bounds = array<i64: 16, 32>}, {pipeline_mode = #tpu.pipeline_mode<synchronous>, transform_indices = @transform_4, window_bounds = array<i64: 1, 32>}, {pipeline_mode = #tpu.pipeline_mode<synchronous>, transform_indices = @transform_5, window_bounds = array<i64: 1, 32>}, {transform_indices = @transform_6, window_bounds = array<i64: 16, 32>}]} {
    %c0_i32 = arith.constant 0 : i32
    %0 = arith.cmpi eq, %arg1, %c0_i32 : i32
    %1 = arith.extui %0 : i1 to i32
    %c0_i32_0 = arith.constant 0 : i32
    %2 = arith.cmpi ne, %1, %c0_i32_0 : i32
    scf.if %2 {
      %cst_10 = arith.constant 0.000000e+00 : f32
      %12 = vector.broadcast %cst_10 : f32 to vector<16x32xf32>
      %c0_11 = arith.constant 0 : index
      %c0_12 = arith.constant 0 : index
      %13 = vector.load %arg9[%c0_11, %c0_12] : memref<16x32xf32, #tpu.memory_space<vmem>>, vector<16x32xf32>
      tpu.vector_store %arg9[%c0_11, %c0_12], %12 {strides = array<i32>} : memref<16x32xf32, #tpu.memory_space<vmem>>, vector<16x32xf32>,
    } else {
    }
    %c0 = arith.constant 0 : index
    %c0_1 = arith.constant 0 : index
    %3 = vector.load %arg9[%c0, %c0_1] : memref<16x32xf32, #tpu.memory_space<vmem>>, vector<16x32xf32>
    %c0_2 = arith.constant 0 : index
    %c0_3 = arith.constant 0 : index
    %4 = vector.load %arg2[%c0_2, %c0_3] : memref<16x32xbf16, #tpu.memory_space<vmem>>, vector<16x32xbf16>
    %c0_4 = arith.constant 0 : index
    %c0_5 = arith.constant 0 : index
    %5 = vector.load %arg3[%c0_4, %c0_5] : memref<32x32xbf16, #tpu.memory_space<vmem>>, vector<32x32xbf16>
    %cst = arith.constant dense<0.000000e+00> : vector<16x32xf32>
    %6 = tpu.matmul %4, %5, %cst {dimension_numbers = #tpu.dot_dimension_numbers<[1], [0], [0], [1], [0, 0, 1, 1], [], []>} : vector<16x32xbf16>, vector<32x32xbf16>, vector<16x32xf32> -> vector<16x32xf32>
    %7 = arith.addf %3, %6 : vector<16x32xf32>
    %c0_6 = arith.constant 0 : index
    %c0_7 = arith.constant 0 : index
    %8 = vector.load %arg9[%c0_6, %c0_7] : memref<16x32xf32, #tpu.memory_space<vmem>>, vector<16x32xf32>
    tpu.vector_store %arg9[%c0_6, %c0_7], %7 {strides = array<i32>} : memref<16x32xf32, #tpu.memory_space<vmem>>, vector<16x32xf32>,
    %c0_i32_8 = arith.constant 0 : i32
    %9 = arith.cmpi eq, %arg1, %c0_i32_8 : i32
    %10 = arith.extui %9 : i1 to i32
    %c0_i32_9 = arith.constant 0 : i32
    %11 = arith.cmpi ne, %10, %c0_i32_9 : i32
    scf.if %11 {
      %c0_10 = arith.constant 0 : index
      %c0_11 = arith.constant 0 : index
      %12 = vector.load %arg9[%c0_10, %c0_11] : memref<16x32xf32, #tpu.memory_space<vmem>>, vector<16x32xf32>
      %c0_12 = arith.constant 0 : index
      %c0_13 = arith.constant 0 : index
      %13 = vector.load %arg4[%c0_12, %c0_13] : memref<1x32xf32, #tpu.memory_space<vmem>>, vector<1x32xf32>
      %14 = vector.broadcast %13 : vector<1x32xf32> to vector<16x32xf32>
      %15 = arith.addf %12, %14 : vector<16x32xf32>
      %c0_14 = arith.constant 0 : index
      %c0_15 = arith.constant 0 : index
      %16 = vector.load %arg5[%c0_14, %c0_15] : memref<16x32xbf16, #tpu.memory_space<vmem>>, vector<16x32xbf16>
      %17 = arith.extf %16 : vector<16x32xbf16> to vector<16x32xf32>
      %18 = arith.addf %15, %17 : vector<16x32xf32>
      %cst_16 = arith.constant dense<0.000000e+00> : vector<16xf32>
      %19 = vector.multi_reduction <add>, %18, %cst_16 [1] : vector<16x32xf32> to vector<16xf32>
      %20 = vector.shape_cast %19 : vector<16xf32> to vector<16x1xf32>
      %cst_17 = arith.constant 3.200000e+01 : f32
      %21 = vector.broadcast %cst_17 : f32 to vector<16x1xf32>
      %22 = arith.divf %20, %21 : vector<16x1xf32>
      %23 = vector.broadcast %22 : vector<16x1xf32> to vector<16x32xf32>
      %24 = arith.subf %18, %23 : vector<16x32xf32>
      %25 = arith.mulf %24, %24 : vector<16x32xf32>
      %cst_18 = arith.constant dense<0.000000e+00> : vector<16xf32>
      %26 = vector.multi_reduction <add>, %25, %cst_18 [1] : vector<16x32xf32> to vector<16xf32>
      %27 = vector.shape_cast %26 : vector<16xf32> to vector<16x1xf32>
      %cst_19 = arith.constant 3.200000e+01 : f32
      %28 = vector.broadcast %cst_19 : f32 to vector<16x1xf32>
      %29 = arith.divf %27, %28 : vector<16x1xf32>
      %30 = vector.broadcast %22 : vector<16x1xf32> to vector<16x32xf32>
      %31 = arith.subf %18, %30 : vector<16x32xf32>
      %cst_20 = arith.constant 9.99999996E-13 : f32
      %32 = vector.broadcast %cst_20 : f32 to vector<16x1xf32>
      %33 = arith.addf %29, %32 : vector<16x1xf32>
      %34 = math.rsqrt %33 : vector<16x1xf32>
      %35 = vector.broadcast %34 : vector<16x1xf32> to vector<16x32xf32>
      %36 = arith.mulf %31, %35 : vector<16x32xf32>
      %c0_21 = arith.constant 0 : index
      %c0_22 = arith.constant 0 : index
      %37 = vector.load %arg6[%c0_21, %c0_22] : memref<1x32xf32, #tpu.memory_space<vmem>>, vector<1x32xf32>
      %38 = vector.broadcast %37 : vector<1x32xf32> to vector<16x32xf32>
      %39 = arith.mulf %36, %38 : vector<16x32xf32>
      %c0_23 = arith.constant 0 : index
      %c0_24 = arith.constant 0 : index
      %40 = vector.load %arg7[%c0_23, %c0_24] : memref<1x32xf32, #tpu.memory_space<vmem>>, vector<1x32xf32>
      %41 = vector.broadcast %40 : vector<1x32xf32> to vector<16x32xf32>
      %42 = arith.addf %39, %41 : vector<16x32xf32>
      %43 = arith.truncf %42 : vector<16x32xf32> to vector<16x32xbf16>
      %c0_25 = arith.constant 0 : index
      %c0_26 = arith.constant 0 : index
      %44 = vector.load %arg8[%c0_25, %c0_26] : memref<16x32xbf16, #tpu.memory_space<vmem>>, vector<16x32xbf16>
      tpu.vector_store %arg8[%c0_25, %c0_26], %43 {strides = array<i32>} : memref<16x32xbf16, #tpu.memory_space<vmem>>, vector<16x32xbf16>,
    } else {
    }
    return
  }
  func.func @transform_0(%arg0: i32, %arg1: i32) -> (i32, i32) {
    %c0_i32 = arith.constant 0 : i32
    return %arg0, %arg1 : i32, i32
  }
  func.func @transform_1(%arg0: i32, %arg1: i32) -> (i32, i32) {
    %c0_i32 = arith.constant 0 : i32
    %c0_i32_0 = arith.constant 0 : i32
    return %arg1, %c0_i32 : i32, i32
  }
  func.func @transform_2(%arg0: i32, %arg1: i32) -> (i32, i32) {
    %c0_i32 = arith.constant 0 : i32
    %c0_i32_0 = arith.constant 0 : i32
    %c0_i32_1 = arith.constant 0 : i32
    return %c0_i32, %c0_i32_0 : i32, i32
  }
  func.func @transform_3(%arg0: i32, %arg1: i32) -> (i32, i32) {
    %c0_i32 = arith.constant 0 : i32
    %c0_i32_0 = arith.constant 0 : i32
    return %arg0, %c0_i32 : i32, i32
  }
  func.func @transform_4(%arg0: i32, %arg1: i32) -> (i32, i32) {
    %c0_i32 = arith.constant 0 : i32
    %c0_i32_0 = arith.constant 0 : i32
    %c0_i32_1 = arith.constant 0 : i32
    return %c0_i32, %c0_i32_0 : i32, i32
  }
  func.func @transform_5(%arg0: i32, %arg1: i32) -> (i32, i32) {
    %c0_i32 = arith.constant 0 : i32
    %c0_i32_0 = arith.constant 0 : i32
    %c0_i32_1 = arith.constant 0 : i32
    return %c0_i32, %c0_i32_0 : i32, i32
  }
  func.func @transform_6(%arg0: i32, %arg1: i32) -> (i32, i32) {
    %c0_i32 = arith.constant 0 : i32
    %c0_i32_0 = arith.constant 0 : i32
    return %arg0, %c0_i32 : i32, i32
  }
}

module attributes {stable_mosaic.version = 11 : i64} {
  func.func @_ffn_kernel(%arg0: i32, %arg1: i32, %arg2: memref<16x32xbf16, #tpu.memory_space<vmem>>, %arg3: memref<32x64xbf16, #tpu.memory_space<vmem>>, %arg4: memref<1x64xf32, #tpu.memory_space<vmem>>, %arg5: memref<64x32xbf16, #tpu.memory_space<vmem>>, %arg6: memref<1x32xf32, #tpu.memory_space<vmem>>, %arg7: memref<1x32xf32, #tpu.memory_space<vmem>>, %arg8: memref<1x32xf32, #tpu.memory_space<vmem>>, %arg9: memref<16x32xbf16, #tpu.memory_space<vmem>>, %arg10: memref<16x32xf32, #tpu.memory_space<vmem>>) attributes {dimension_semantics = [#tpu.dimension_semantics<parallel>, #tpu.dimension_semantics<arbitrary>], iteration_bounds = array<i64: 1, 1>, scalar_prefetch = 0 : i64, scratch_operands = 1 : i64, tpu.core_type = #tpu.core_type<tc>, window_params = [{transform_indices = @transform_0, window_bounds = array<i64: 16, 32>}, {transform_indices = @transform_1, window_bounds = array<i64: 32, 64>}, {transform_indices = @transform_2, window_bounds = array<i64: 1, 64>}, {transform_indices = @transform_3, window_bounds = array<i64: 64, 32>}, {pipeline_mode = #tpu.pipeline_mode<synchronous>, transform_indices = @transform_4, window_bounds = array<i64: 1, 32>}, {pipeline_mode = #tpu.pipeline_mode<synchronous>, transform_indices = @transform_5, window_bounds = array<i64: 1, 32>}, {pipeline_mode = #tpu.pipeline_mode<synchronous>, transform_indices = @transform_6, window_bounds = array<i64: 1, 32>}, {transform_indices = @transform_7, window_bounds = array<i64: 16, 32>}]} {
    %c0_i32 = arith.constant 0 : i32
    %0 = arith.cmpi eq, %arg1, %c0_i32 : i32
    %1 = arith.extui %0 : i1 to i32
    %c0_i32_0 = arith.constant 0 : i32
    %2 = arith.cmpi ne, %1, %c0_i32_0 : i32
    scf.if %2 {
      %cst_19 = arith.constant 0.000000e+00 : f32
      %31 = vector.broadcast %cst_19 : f32 to vector<16x32xf32>
      %c0_20 = arith.constant 0 : index
      %c0_21 = arith.constant 0 : index
      %32 = vector.load %arg10[%c0_20, %c0_21] : memref<16x32xf32, #tpu.memory_space<vmem>>, vector<16x32xf32>
      tpu.vector_store %arg10[%c0_20, %c0_21], %31 {strides = array<i32>} : memref<16x32xf32, #tpu.memory_space<vmem>>, vector<16x32xf32>,
    } else {
    }
    %c0 = arith.constant 0 : index
    %c0_1 = arith.constant 0 : index
    %3 = vector.load %arg2[%c0, %c0_1] : memref<16x32xbf16, #tpu.memory_space<vmem>>, vector<16x32xbf16>
    %c0_2 = arith.constant 0 : index
    %c0_3 = arith.constant 0 : index
    %4 = vector.load %arg3[%c0_2, %c0_3] : memref<32x64xbf16, #tpu.memory_space<vmem>>, vector<32x64xbf16>
    %cst = arith.constant dense<0.000000e+00> : vector<16x64xf32>
    %5 = tpu.matmul %3, %4, %cst {dimension_numbers = #tpu.dot_dimension_numbers<[1], [0], [0], [1], [0, 0, 1, 1], [], []>} : vector<16x32xbf16>, vector<32x64xbf16>, vector<16x64xf32> -> vector<16x64xf32>
    %c0_4 = arith.constant 0 : index
    %c0_5 = arith.constant 0 : index
    %6 = vector.load %arg4[%c0_4, %c0_5] : memref<1x64xf32, #tpu.memory_space<vmem>>, vector<1x64xf32>
    %7 = vector.broadcast %6 : vector<1x64xf32> to vector<16x64xf32>
    %8 = arith.addf %5, %7 : vector<16x64xf32>
    %9 = arith.mulf %8, %8 : vector<16x64xf32>
    %10 = arith.mulf %8, %9 : vector<16x64xf32>
    %cst_6 = arith.constant 4.471500e-02 : f32
    %11 = vector.broadcast %cst_6 : f32 to vector<16x64xf32>
    %12 = arith.mulf %11, %10 : vector<16x64xf32>
    %13 = arith.addf %8, %12 : vector<16x64xf32>
    %cst_7 = arith.constant 0.797884583 : f32
    %14 = vector.broadcast %cst_7 : f32 to vector<16x64xf32>
    %15 = arith.mulf %14, %13 : vector<16x64xf32>
    %16 = math.tanh %15 : vector<16x64xf32>
    %cst_8 = arith.constant 1.000000e+00 : f32
    %17 = vector.broadcast %cst_8 : f32 to vector<16x64xf32>
    %18 = arith.addf %17, %16 : vector<16x64xf32>
    %cst_9 = arith.constant 5.000000e-01 : f32
    %19 = vector.broadcast %cst_9 : f32 to vector<16x64xf32>
    %20 = arith.mulf %19, %18 : vector<16x64xf32>
    %21 = arith.mulf %8, %20 : vector<16x64xf32>
    %c0_10 = arith.constant 0 : index
    %c0_11 = arith.constant 0 : index
    %22 = vector.load %arg10[%c0_10, %c0_11] : memref<16x32xf32, #tpu.memory_space<vmem>>, vector<16x32xf32>
    %23 = arith.truncf %21 : vector<16x64xf32> to vector<16x64xbf16>
    %c0_12 = arith.constant 0 : index
    %c0_13 = arith.constant 0 : index
    %24 = vector.load %arg5[%c0_12, %c0_13] : memref<64x32xbf16, #tpu.memory_space<vmem>>, vector<64x32xbf16>
    %cst_14 = arith.constant dense<0.000000e+00> : vector<16x32xf32>
    %25 = tpu.matmul %23, %24, %cst_14 {dimension_numbers = #tpu.dot_dimension_numbers<[1], [0], [0], [1], [0, 0, 1, 1], [], []>} : vector<16x64xbf16>, vector<64x32xbf16>, vector<16x32xf32> -> vector<16x32xf32>
    %26 = arith.addf %22, %25 : vector<16x32xf32>
    %c0_15 = arith.constant 0 : index
    %c0_16 = arith.constant 0 : index
    %27 = vector.load %arg10[%c0_15, %c0_16] : memref<16x32xf32, #tpu.memory_space<vmem>>, vector<16x32xf32>
    tpu.vector_store %arg10[%c0_15, %c0_16], %26 {strides = array<i32>} : memref<16x32xf32, #tpu.memory_space<vmem>>, vector<16x32xf32>,
    %c0_i32_17 = arith.constant 0 : i32
    %28 = arith.cmpi eq, %arg1, %c0_i32_17 : i32
    %29 = arith.extui %28 : i1 to i32
    %c0_i32_18 = arith.constant 0 : i32
    %30 = arith.cmpi ne, %29, %c0_i32_18 : i32
    scf.if %30 {
      %c0_19 = arith.constant 0 : index
      %c0_20 = arith.constant 0 : index
      %31 = vector.load %arg10[%c0_19, %c0_20] : memref<16x32xf32, #tpu.memory_space<vmem>>, vector<16x32xf32>
      %c0_21 = arith.constant 0 : index
      %c0_22 = arith.constant 0 : index
      %32 = vector.load %arg6[%c0_21, %c0_22] : memref<1x32xf32, #tpu.memory_space<vmem>>, vector<1x32xf32>
      %33 = vector.broadcast %32 : vector<1x32xf32> to vector<16x32xf32>
      %34 = arith.addf %31, %33 : vector<16x32xf32>
      %c0_23 = arith.constant 0 : index
      %c0_24 = arith.constant 0 : index
      %35 = vector.load %arg2[%c0_23, %c0_24] : memref<16x32xbf16, #tpu.memory_space<vmem>>, vector<16x32xbf16>
      %36 = arith.extf %35 : vector<16x32xbf16> to vector<16x32xf32>
      %37 = arith.addf %34, %36 : vector<16x32xf32>
      %cst_25 = arith.constant dense<0.000000e+00> : vector<16xf32>
      %38 = vector.multi_reduction <add>, %37, %cst_25 [1] : vector<16x32xf32> to vector<16xf32>
      %39 = vector.shape_cast %38 : vector<16xf32> to vector<16x1xf32>
      %cst_26 = arith.constant 3.200000e+01 : f32
      %40 = vector.broadcast %cst_26 : f32 to vector<16x1xf32>
      %41 = arith.divf %39, %40 : vector<16x1xf32>
      %42 = vector.broadcast %41 : vector<16x1xf32> to vector<16x32xf32>
      %43 = arith.subf %37, %42 : vector<16x32xf32>
      %44 = arith.mulf %43, %43 : vector<16x32xf32>
      %cst_27 = arith.constant dense<0.000000e+00> : vector<16xf32>
      %45 = vector.multi_reduction <add>, %44, %cst_27 [1] : vector<16x32xf32> to vector<16xf32>
      %46 = vector.shape_cast %45 : vector<16xf32> to vector<16x1xf32>
      %cst_28 = arith.constant 3.200000e+01 : f32
      %47 = vector.broadcast %cst_28 : f32 to vector<16x1xf32>
      %48 = arith.divf %46, %47 : vector<16x1xf32>
      %49 = vector.broadcast %41 : vector<16x1xf32> to vector<16x32xf32>
      %50 = arith.subf %37, %49 : vector<16x32xf32>
      %cst_29 = arith.constant 9.99999996E-13 : f32
      %51 = vector.broadcast %cst_29 : f32 to vector<16x1xf32>
      %52 = arith.addf %48, %51 : vector<16x1xf32>
      %53 = math.rsqrt %52 : vector<16x1xf32>
      %54 = vector.broadcast %53 : vector<16x1xf32> to vector<16x32xf32>
      %55 = arith.mulf %50, %54 : vector<16x32xf32>
      %c0_30 = arith.constant 0 : index
      %c0_31 = arith.constant 0 : index
      %56 = vector.load %arg7[%c0_30, %c0_31] : memref<1x32xf32, #tpu.memory_space<vmem>>, vector<1x32xf32>
      %57 = vector.broadcast %56 : vector<1x32xf32> to vector<16x32xf32>
      %58 = arith.mulf %55, %57 : vector<16x32xf32>
      %c0_32 = arith.constant 0 : index
      %c0_33 = arith.constant 0 : index
      %59 = vector.load %arg8[%c0_32, %c0_33] : memref<1x32xf32, #tpu.memory_space<vmem>>, vector<1x32xf32>
      %60 = vector.broadcast %59 : vector<1x32xf32> to vector<16x32xf32>
      %61 = arith.addf %58, %60 : vector<16x32xf32>
      %62 = arith.truncf %61 : vector<16x32xf32> to vector<16x32xbf16>
      %c0_34 = arith.constant 0 : index
      %c0_35 = arith.constant 0 : index
      %63 = vector.load %arg9[%c0_34, %c0_35] : memref<16x32xbf16, #tpu.memory_space<vmem>>, vector<16x32xbf16>
      tpu.vector_store %arg9[%c0_34, %c0_35], %62 {strides = array<i32>} : memref<16x32xbf16, #tpu.memory_space<vmem>>, vector<16x32xbf16>,
    } else {
    }
    return
  }
  func.func @transform_0(%arg0: i32, %arg1: i32) -> (i32, i32) {
    %c0_i32 = arith.constant 0 : i32
    %c0_i32_0 = arith.constant 0 : i32
    return %arg0, %c0_i32 : i32, i32
  }
  func.func @transform_1(%arg0: i32, %arg1: i32) -> (i32, i32) {
    %c0_i32 = arith.constant 0 : i32
    %c0_i32_0 = arith.constant 0 : i32
    return %c0_i32, %arg1 : i32, i32
  }
  func.func @transform_2(%arg0: i32, %arg1: i32) -> (i32, i32) {
    %c0_i32 = arith.constant 0 : i32
    %c0_i32_0 = arith.constant 0 : i32
    return %c0_i32, %arg1 : i32, i32
  }
  func.func @transform_3(%arg0: i32, %arg1: i32) -> (i32, i32) {
    %c0_i32 = arith.constant 0 : i32
    %c0_i32_0 = arith.constant 0 : i32
    return %arg1, %c0_i32 : i32, i32
  }
  func.func @transform_4(%arg0: i32, %arg1: i32) -> (i32, i32) {
    %c0_i32 = arith.constant 0 : i32
    %c0_i32_0 = arith.constant 0 : i32
    %c0_i32_1 = arith.constant 0 : i32
    return %c0_i32, %c0_i32_0 : i32, i32
  }
  func.func @transform_5(%arg0: i32, %arg1: i32) -> (i32, i32) {
    %c0_i32 = arith.constant 0 : i32
    %c0_i32_0 = arith.constant 0 : i32
    %c0_i32_1 = arith.constant 0 : i32
    return %c0_i32, %c0_i32_0 : i32, i32
  }
  func.func @transform_6(%arg0: i32, %arg1: i32) -> (i32, i32) {
    %c0_i32 = arith.constant 0 : i32
    %c0_i32_0 = arith.constant 0 : i32
    %c0_i32_1 = arith.constant 0 : i32
    return %c0_i32, %c0_i32_0 : i32, i32
  }
  func.func @transform_7(%arg0: i32, %arg1: i32) -> (i32, i32) {
    %c0_i32 = arith.constant 0 : i32
    %c0_i32_0 = arith.constant 0 : i32
    return %arg0, %c0_i32 : i32, i32
  }
}

module attributes {stable_mosaic.version = 11 : i64} {
  func.func @_word_mlp_kernel(%arg0: i32, %arg1: memref<64x16xbf16, #tpu.memory_space<vmem>>, %arg2: memref<16x32xbf16, #tpu.memory_space<vmem>>, %arg3: memref<1x32xf32, #tpu.memory_space<vmem>>, %arg4: memref<32x32xbf16, #tpu.memory_space<vmem>>, %arg5: memref<1x32xf32, #tpu.memory_space<vmem>>, %arg6: memref<64x32xbf16, #tpu.memory_space<vmem>>) attributes {dimension_semantics = [#tpu.dimension_semantics<parallel>], iteration_bounds = array<i64: 1>, scalar_prefetch = 0 : i64, scratch_operands = 0 : i64, tpu.core_type = #tpu.core_type<tc>, window_params = [{transform_indices = @transform_0, window_bounds = array<i64: 64, 16>}, {pipeline_mode = #tpu.pipeline_mode<synchronous>, transform_indices = @transform_1, window_bounds = array<i64: 16, 32>}, {pipeline_mode = #tpu.pipeline_mode<synchronous>, transform_indices = @transform_2, window_bounds = array<i64: 1, 32>}, {pipeline_mode = #tpu.pipeline_mode<synchronous>, transform_indices = @transform_3, window_bounds = array<i64: 32, 32>}, {pipeline_mode = #tpu.pipeline_mode<synchronous>, transform_indices = @transform_4, window_bounds = array<i64: 1, 32>}, {transform_indices = @transform_5, window_bounds = array<i64: 64, 32>}]} {
    %c0 = arith.constant 0 : index
    %c0_0 = arith.constant 0 : index
    %0 = vector.load %arg1[%c0, %c0_0] : memref<64x16xbf16, #tpu.memory_space<vmem>>, vector<64x16xbf16>
    %c0_1 = arith.constant 0 : index
    %c0_2 = arith.constant 0 : index
    %1 = vector.load %arg2[%c0_1, %c0_2] : memref<16x32xbf16, #tpu.memory_space<vmem>>, vector<16x32xbf16>
    %cst = arith.constant dense<0.000000e+00> : vector<64x32xf32>
    %2 = tpu.matmul %0, %1, %cst {dimension_numbers = #tpu.dot_dimension_numbers<[1], [0], [0], [1], [0, 0, 1, 1], [], []>} : vector<64x16xbf16>, vector<16x32xbf16>, vector<64x32xf32> -> vector<64x32xf32>
    %c0_3 = arith.constant 0 : index
    %c0_4 = arith.constant 0 : index
    %3 = vector.load %arg3[%c0_3, %c0_4] : memref<1x32xf32, #tpu.memory_space<vmem>>, vector<1x32xf32>
    %4 = vector.broadcast %3 : vector<1x32xf32> to vector<64x32xf32>
    %5 = arith.addf %2, %4 : vector<64x32xf32>
    %6 = math.tanh %5 : vector<64x32xf32>
    %7 = arith.truncf %6 : vector<64x32xf32> to vector<64x32xbf16>
    %c0_5 = arith.constant 0 : index
    %c0_6 = arith.constant 0 : index
    %8 = vector.load %arg4[%c0_5, %c0_6] : memref<32x32xbf16, #tpu.memory_space<vmem>>, vector<32x32xbf16>
    %cst_7 = arith.constant dense<0.000000e+00> : vector<64x32xf32>
    %9 = tpu.matmul %7, %8, %cst_7 {dimension_numbers = #tpu.dot_dimension_numbers<[1], [0], [0], [1], [0, 0, 1, 1], [], []>} : vector<64x32xbf16>, vector<32x32xbf16>, vector<64x32xf32> -> vector<64x32xf32>
    %c0_8 = arith.constant 0 : index
    %c0_9 = arith.constant 0 : index
    %10 = vector.load %arg5[%c0_8, %c0_9] : memref<1x32xf32, #tpu.memory_space<vmem>>, vector<1x32xf32>
    %11 = vector.broadcast %10 : vector<1x32xf32> to vector<64x32xf32>
    %12 = arith.addf %9, %11 : vector<64x32xf32>
    %13 = arith.truncf %12 : vector<64x32xf32> to vector<64x32xbf16>
    %c0_10 = arith.constant 0 : index
    %c0_11 = arith.constant 0 : index
    %14 = vector.load %arg6[%c0_10, %c0_11] : memref<64x32xbf16, #tpu.memory_space<vmem>>, vector<64x32xbf16>
    tpu.vector_store %arg6[%c0_10, %c0_11], %13 {strides = array<i32>} : memref<64x32xbf16, #tpu.memory_space<vmem>>, vector<64x32xbf16>,
    return
  }
  func.func @transform_0(%arg0: i32) -> (i32, i32) {
    %c0_i32 = arith.constant 0 : i32
    %c0_i32_0 = arith.constant 0 : i32
    return %arg0, %c0_i32 : i32, i32
  }
  func.func @transform_1(%arg0: i32) -> (i32, i32) {
    %c0_i32 = arith.constant 0 : i32
    %c0_i32_0 = arith.constant 0 : i32
    %c0_i32_1 = arith.constant 0 : i32
    return %c0_i32, %c0_i32_0 : i32, i32
  }
  func.func @transform_2(%arg0: i32) -> (i32, i32) {
    %c0_i32 = arith.constant 0 : i32
    %c0_i32_0 = arith.constant 0 : i32
    %c0_i32_1 = arith.constant 0 : i32
    return %c0_i32, %c0_i32_0 : i32, i32
  }
  func.func @transform_3(%arg0: i32) -> (i32, i32) {
    %c0_i32 = arith.constant 0 : i32
    %c0_i32_0 = arith.constant 0 : i32
    %c0_i32_1 = arith.constant 0 : i32
    return %c0_i32, %c0_i32_0 : i32, i32
  }
  func.func @transform_4(%arg0: i32) -> (i32, i32) {
    %c0_i32 = arith.constant 0 : i32
    %c0_i32_0 = arith.constant 0 : i32
    %c0_i32_1 = arith.constant 0 : i32
    return %c0_i32, %c0_i32_0 : i32, i32
  }
  func.func @transform_5(%arg0: i32) -> (i32, i32) {
    %c0_i32 = arith.constant 0 : i32
    %c0_i32_0 = arith.constant 0 : i32
    return %arg0, %c0_i32 : i32, i32
  }
}

module attributes {stable_mosaic.version = 11 : i64} {
  func.func @_word_fusion_ln_kernel(%arg0: i32, %arg1: memref<16x32xbf16, #tpu.memory_space<vmem>>, %arg2: memref<16x4x32xbf16, #tpu.memory_space<vmem>>, %arg3: memref<16x4xf32, #tpu.memory_space<vmem>>, %arg4: memref<32x32xbf16, #tpu.memory_space<vmem>>, %arg5: memref<1x32xf32, #tpu.memory_space<vmem>>, %arg6: memref<1x32xf32, #tpu.memory_space<vmem>>, %arg7: memref<16x32xbf16, #tpu.memory_space<vmem>>) attributes {dimension_semantics = [#tpu.dimension_semantics<parallel>], iteration_bounds = array<i64: 1>, scalar_prefetch = 0 : i64, scratch_operands = 0 : i64, tpu.core_type = #tpu.core_type<tc>, window_params = [{transform_indices = @transform_0, window_bounds = array<i64: 16, 32>}, {transform_indices = @transform_1, window_bounds = array<i64: 16, 4, 32>}, {transform_indices = @transform_2, window_bounds = array<i64: 16, 4>}, {pipeline_mode = #tpu.pipeline_mode<synchronous>, transform_indices = @transform_3, window_bounds = array<i64: 32, 32>}, {pipeline_mode = #tpu.pipeline_mode<synchronous>, transform_indices = @transform_4, window_bounds = array<i64: 1, 32>}, {pipeline_mode = #tpu.pipeline_mode<synchronous>, transform_indices = @transform_5, window_bounds = array<i64: 1, 32>}, {transform_indices = @transform_6, window_bounds = array<i64: 16, 32>}]} {
    %c0 = arith.constant 0 : index
    %c0_0 = arith.constant 0 : index
    %0 = vector.load %arg1[%c0, %c0_0] : memref<16x32xbf16, #tpu.memory_space<vmem>>, vector<16x32xbf16>
    %c0_1 = arith.constant 0 : index
    %c0_2 = arith.constant 0 : index
    %c0_3 = arith.constant 0 : index
    %1 = vector.load %arg2[%c0_1, %c0_2, %c0_3] : memref<16x4x32xbf16, #tpu.memory_space<vmem>>, vector<16x4x32xbf16>
    %2 = arith.extf %1 : vector<16x4x32xbf16> to vector<16x4x32xf32>
    %c0_4 = arith.constant 0 : index
    %c0_5 = arith.constant 0 : index
    %3 = vector.load %arg3[%c0_4, %c0_5] : memref<16x4xf32, #tpu.memory_space<vmem>>, vector<16x4xf32>
    %c0_6 = arith.constant 0 : index
    %c0_7 = arith.constant 0 : index
    %4 = vector.load %arg4[%c0_6, %c0_7] : memref<32x32xbf16, #tpu.memory_space<vmem>>, vector<32x32xbf16>
    %cst = arith.constant dense<0.000000e+00> : vector<16x32xf32>
    %5 = tpu.matmul %0, %4, %cst {dimension_numbers = #tpu.dot_dimension_numbers<[1], [0], [0], [1], [0, 0, 1, 1], [], []>} : vector<16x32xbf16>, vector<32x32xbf16>, vector<16x32xf32> -> vector<16x32xf32>
    %6 = vector.shape_cast %5 : vector<16x32xf32> to vector<16x1x32xf32>
    %7 = vector.broadcast %6 : vector<16x1x32xf32> to vector<16x4x32xf32>
    %8 = arith.mulf %7, %2 : vector<16x4x32xf32>
    %cst_8 = arith.constant dense<0.000000e+00> : vector<16x4xf32>
    %9 = vector.multi_reduction <add>, %8, %cst_8 [2] : vector<16x4x32xf32> to vector<16x4xf32>
    %cst_9 = arith.constant 1.000000e+00 : f32
    %10 = vector.broadcast %cst_9 : f32 to vector<16x4xf32>
    %11 = arith.subf %10, %3 : vector<16x4xf32>
    %cst_10 = arith.constant -1.000000e+04 : f32
    %12 = vector.broadcast %cst_10 : f32 to vector<16x4xf32>
    %13 = arith.mulf %11, %12 : vector<16x4xf32>
    %14 = arith.addf %9, %13 : vector<16x4xf32>
    %cst_11 = arith.constant dense<0xFF800000> : vector<16xf32>
    %15 = vector.multi_reduction <maximumf>, %14, %cst_11 [1] : vector<16x4xf32> to vector<16xf32>
    %16 = vector.shape_cast %15 : vector<16xf32> to vector<16x1xf32>
    %17 = vector.broadcast %16 : vector<16x1xf32> to vector<16x4xf32>
    %18 = arith.subf %14, %17 : vector<16x4xf32>
    %19 = math.exp %18 : vector<16x4xf32>
    %cst_12 = arith.constant dense<0.000000e+00> : vector<16xf32>
    %20 = vector.multi_reduction <add>, %19, %cst_12 [1] : vector<16x4xf32> to vector<16xf32>
    %21 = vector.shape_cast %20 : vector<16xf32> to vector<16x1xf32>
    %22 = vector.broadcast %21 : vector<16x1xf32> to vector<16x4xf32>
    %23 = arith.divf %19, %22 : vector<16x4xf32>
    %24 = vector.shape_cast %23 : vector<16x4xf32> to vector<16x4x1xf32>
    %25 = vector.broadcast %24 : vector<16x4x1xf32> to vector<16x4x32xf32>
    %26 = arith.mulf %25, %2 : vector<16x4x32xf32>
    %cst_13 = arith.constant dense<0.000000e+00> : vector<16x32xf32>
    %27 = vector.multi_reduction <add>, %26, %cst_13 [1] : vector<16x4x32xf32> to vector<16x32xf32>
    %28 = arith.extf %0 : vector<16x32xbf16> to vector<16x32xf32>
    %29 = arith.addf %28, %27 : vector<16x32xf32>
    %cst_14 = arith.constant dense<0.000000e+00> : vector<16xf32>
    %30 = vector.multi_reduction <add>, %29, %cst_14 [1] : vector<16x32xf32> to vector<16xf32>
    %31 = vector.shape_cast %30 : vector<16xf32> to vector<16x1xf32>
    %cst_15 = arith.constant 3.200000e+01 : f32
    %32 = vector.broadcast %cst_15 : f32 to vector<16x1xf32>
    %33 = arith.divf %31, %32 : vector<16x1xf32>
    %34 = vector.broadcast %33 : vector<16x1xf32> to vector<16x32xf32>
    %35 = arith.subf %29, %34 : vector<16x32xf32>
    %36 = arith.mulf %35, %35 : vector<16x32xf32>
    %cst_16 = arith.constant dense<0.000000e+00> : vector<16xf32>
    %37 = vector.multi_reduction <add>, %36, %cst_16 [1] : vector<16x32xf32> to vector<16xf32>
    %38 = vector.shape_cast %37 : vector<16xf32> to vector<16x1xf32>
    %cst_17 = arith.constant 3.200000e+01 : f32
    %39 = vector.broadcast %cst_17 : f32 to vector<16x1xf32>
    %40 = arith.divf %38, %39 : vector<16x1xf32>
    %41 = vector.broadcast %33 : vector<16x1xf32> to vector<16x32xf32>
    %42 = arith.subf %29, %41 : vector<16x32xf32>
    %cst_18 = arith.constant 9.99999996E-13 : f32
    %43 = vector.broadcast %cst_18 : f32 to vector<16x1xf32>
    %44 = arith.addf %40, %43 : vector<16x1xf32>
    %45 = math.rsqrt %44 : vector<16x1xf32>
    %46 = vector.broadcast %45 : vector<16x1xf32> to vector<16x32xf32>
    %47 = arith.mulf %42, %46 : vector<16x32xf32>
    %c0_19 = arith.constant 0 : index
    %c0_20 = arith.constant 0 : index
    %48 = vector.load %arg5[%c0_19, %c0_20] : memref<1x32xf32, #tpu.memory_space<vmem>>, vector<1x32xf32>
    %49 = vector.broadcast %48 : vector<1x32xf32> to vector<16x32xf32>
    %50 = arith.mulf %47, %49 : vector<16x32xf32>
    %c0_21 = arith.constant 0 : index
    %c0_22 = arith.constant 0 : index
    %51 = vector.load %arg6[%c0_21, %c0_22] : memref<1x32xf32, #tpu.memory_space<vmem>>, vector<1x32xf32>
    %52 = vector.broadcast %51 : vector<1x32xf32> to vector<16x32xf32>
    %53 = arith.addf %50, %52 : vector<16x32xf32>
    %54 = arith.truncf %53 : vector<16x32xf32> to vector<16x32xbf16>
    %c0_23 = arith.constant 0 : index
    %c0_24 = arith.constant 0 : index
    %55 = vector.load %arg7[%c0_23, %c0_24] : memref<16x32xbf16, #tpu.memory_space<vmem>>, vector<16x32xbf16>
    tpu.vector_store %arg7[%c0_23, %c0_24], %54 {strides = array<i32>} : memref<16x32xbf16, #tpu.memory_space<vmem>>, vector<16x32xbf16>,
    return
  }
  func.func @transform_0(%arg0: i32) -> (i32, i32) {
    %c0_i32 = arith.constant 0 : i32
    %c0_i32_0 = arith.constant 0 : i32
    return %arg0, %c0_i32 : i32, i32
  }
  func.func @transform_1(%arg0: i32) -> (i32, i32, i32) {
    %c0_i32 = arith.constant 0 : i32
    %c0_i32_0 = arith.constant 0 : i32
    %c0_i32_1 = arith.constant 0 : i32
    return %arg0, %c0_i32, %c0_i32_0 : i32, i32, i32
  }
  func.func @transform_2(%arg0: i32) -> (i32, i32) {
    %c0_i32 = arith.constant 0 : i32
    %c0_i32_0 = arith.constant 0 : i32
    return %arg0, %c0_i32 : i32, i32
  }
  func.func @transform_3(%arg0: i32) -> (i32, i32) {
    %c0_i32 = arith.constant 0 : i32
    %c0_i32_0 = arith.constant 0 : i32
    %c0_i32_1 = arith.constant 0 : i32
    return %c0_i32, %c0_i32_0 : i32, i32
  }
  func.func @transform_4(%arg0: i32) -> (i32, i32) {
    %c0_i32 = arith.constant 0 : i32
    %c0_i32_0 = arith.constant 0 : i32
    %c0_i32_1 = arith.constant 0 : i32
    return %c0_i32, %c0_i32_0 : i32, i32
  }
  func.func @transform_5(%arg0: i32) -> (i32, i32) {
    %c0_i32 = arith.constant 0 : i32
    %c0_i32_0 = arith.constant 0 : i32
    %c0_i32_1 = arith.constant 0 : i32
    return %c0_i32, %c0_i32_0 : i32, i32
  }
  func.func @transform_6(%arg0: i32) -> (i32, i32) {
    %c0_i32 = arith.constant 0 : i32
    %c0_i32_0 = arith.constant 0 : i32
    return %arg0, %c0_i32 : i32, i32
  }
}

</mosaic_0001>

<llo_original>
// kernel: bert_encoder_forward.12
$region0: #{bert_encoder_forward.12}
  #allocation0 [shape = 'u32[]', space=smem, size = 0x4, offset = 0x4, fixed_abs, tag = 'smem constant byte address 0x4 - core index']
  #allocation1 [shape = 'u32[144,128]{1,0:T(1,128)}', space=vmem, size = 0x12000, scoped, tag = 'internal scratch']
  #allocation2 [shape = 'f32[16,32]{1,0:T(8,128)}', space=vmem, size = 0x2000, scoped, tag = 'scratch operand']
  %s0 = inlined_call_operand.vmem [shape: bf16[16,32], index: 0, kind: input, shape index: {}]
  %s1 = inlined_call_operand.vmem [shape: bf16[32,32], index: 1, kind: input, shape index: {}]
  %s2 = inlined_call_operand.vmem [shape: f32[1,32], index: 2, kind: input, shape index: {}]
  %s3 = inlined_call_operand.vmem [shape: bf16[16,32], index: 3, kind: input, shape index: {}]
  %s4 = inlined_call_operand.vmem [shape: f32[1,32], index: 4, kind: input, shape index: {}]
  %s5 = inlined_call_operand.vmem [shape: f32[1,32], index: 5, kind: input, shape index: {}]
  %s6 = inlined_call_operand.vmem [shape: bf16[16,32], index: 6, kind: output, shape index: {}]
  %s7 = sld [smem:[#allocation0]]
  $region42: #{bert_encoder_forward.12} parent=0
    _
  %s9 = ssub.s32 1, %s7
  %s10 = scalar_select 0, %s9, %s7
  // Predicated region
  $region2: #{bert_encoder_forward.12} parent=0 // pred_check
    _
  $region3: #{bert_encoder_forward.12} parent=0 // pred_check_branch
    %12 = sbr.rel (0) target = $region5
  $region4: #{bert_encoder_forward.12} parent=0 // pred_region
    _
  $region5: #{bert_encoder_forward.12} parent=0 // pred_fallthru
    _
  // Predicated region
  $region6: #{bert_encoder_forward.12} parent=0 // pred_check
    _
  $region7: #{bert_encoder_forward.12} parent=0 // pred_check_branch
    %14 = sbr.rel (0) target = $region9
  $region8: #{bert_encoder_forward.12} parent=0 // pred_region
    _
  $region9: #{bert_encoder_forward.12} parent=0 // pred_fallthru
    _
  // Predicated region
  $region10: #{bert_encoder_forward.12} parent=0 // pred_check
    _
  $region11: #{bert_encoder_forward.12} parent=0 // pred_check_branch
    %16 = sbr.rel (0) target = $region13
  $region12: #{bert_encoder_forward.12} parent=0 // pred_region
    _
  $region13: #{bert_encoder_forward.12} parent=0 // pred_fallthru
    _
  // Predicated region
  $region14: #{bert_encoder_forward.12} parent=0 // pred_check
    _
  $region15: #{bert_encoder_forward.12} parent=0 // pred_check_branch
    %18 = sbr.rel (0) target = $region17
  $region16: #{bert_encoder_forward.12} parent=0 // pred_region
    _
  $region17: #{bert_encoder_forward.12} parent=0 // pred_fallthru
    _
  // Predicated region
  $region18: #{bert_encoder_forward.12} parent=0 // pred_check
    _
  $region19: #{bert_encoder_forward.12} parent=0 // pred_check_branch
    %20 = sbr.rel (0) target = $region21
  $region20: #{bert_encoder_forward.12} parent=0 // pred_region
    _
  $region21: #{bert_encoder_forward.12} parent=0 // pred_fallthru
    _
  // Predicated region
  $region22: #{bert_encoder_forward.12} parent=0 // pred_check
    _
  $region23: #{bert_encoder_forward.12} parent=0 // pred_check_branch
    %22 = sbr.rel (0) target = $region25
  $region24: #{bert_encoder_forward.12} parent=0 // pred_region
    _
  $region25: #{bert_encoder_forward.12} parent=0 // pred_fallthru
    _
  %p24 = scmp.eq.s32.totalorder 0, 0
  // Predicated region
  $region26: #{bert_encoder_forward.12} parent=0 // pred_check
    %p25 = pneg %p24
  $region27: #{bert_encoder_forward.12} parent=0 // pred_check_branch
    %27 = sbr.rel (%p25) target = $region29
  $region28: #{bert_encoder_forward.12} parent=0 // pred_region
    %vm28 = vcmask 261120
    %29 = vst.msk [vmem:[#allocation2] sm:$0xff] %vm28, 0.0
    %30 = vst.msk [vmem:[#allocation2 + $0x8] sm:$0xff] %vm28, 0.0
  $region29: #{bert_encoder_forward.12} parent=0 // pred_fallthru
    _
  %v31 = vld [vmem:[#allocation2] sm:$0xff]
  %v32 = vld [vmem:[#allocation2 + $0x8] sm:$0xff]
  %v33 = vld [vmem:[%s0] sm:$0xf]
  %v34 = vld [vmem:[%s0 + $0x4] sm:$0xf]
  %v35 = vld [vmem:[%s1] sm:$0xf]
  %v36 = vld [vmem:[%s1 + $0x4] sm:$0xf]
  %v37 = vld [vmem:[%s1 + $0x8] sm:$0xf]
  %v38 = vld [vmem:[%s1 + $0xc] sm:$0xf]
  %v41 = vunpack.c.l.b16 %v33
  %v42 = vunpack.c.l.b16 %v34
  %v43 = vpack.c.b16 %v42, %v41
  %v48 = vunpack.c.l.b16 %v35
  %v49 = vunpack.c.l.b16 %v36
  %v50 = vunpack.c.l.b16 %v37
  %v51 = vunpack.c.l.b16 %v38
  %v52 = vpack.c.b16 %v49, %v48
  %v53 = vpack.c.b16 %v51, %v50
  %vm56 = vcmask 261120
  %v58 = vsel %vm56, %v43, 0
  %60 = vmatprep.subr.bf16.mxu0 0
  %61 = vmatpush1.bf16.msra.mxu0 0
  %62 = vmatprep.subr.bf16.mxu0 0
  %63 = vmatpush1.bf16.msra.mxu0 0
  %64 = vmatprep.subr.bf16.mxu0 0
  %65 = vmatpush1.bf16.msra.mxu0 0
  %66 = vmatprep.subr.bf16.mxu0 0
  %67 = vmatpush1.bf16.msra.mxu0 0
  %68 = vmatprep.subr.bf16.mxu0 0
  %69 = vmatpush1.bf16.msra.mxu0 0
  %70 = vmatprep.subr.bf16.mxu0 0
  %71 = vmatpush1.bf16.msra.mxu0 0
  %72 = vmatprep.subr.bf16.mxu0 0
  %73 = vmatpush1.bf16.msra.mxu0 %v53
  %74 = vmatprep.subr.bf16.mxu0 0
  %75 = vmatpush1.bf16.msra.mxu0 %v52
  %76 = vmatprep.subr.bf16.mxu0 0
  %77 = vmatpush2.bf16.msra.mxu0 0
  %78 = vmatprep.subr.bf16.mxu0 0
  %79 = vmatpush2.bf16.msra.mxu0 0
  %80 = vmatprep.subr.bf16.mxu0 0
  %81 = vmatpush2.bf16.msra.mxu0 0
  %82 = vmatprep.subr.bf16.mxu0 0
  %83 = vmatpush2.bf16.msra.mxu0 0
  %84 = vmatprep.subr.bf16.mxu0 0
  %85 = vmatpush2.bf16.msra.mxu0 0
  %86 = vmatprep.subr.bf16.mxu0 0
  %87 = vmatpush2.bf16.msra.mxu0 0
  %88 = vmatprep.subr.bf16.mxu0 0
  %89 = vmatpush2.bf16.msra.mxu0 0
  %90 = vmatprep.subr.bf16.mxu0 0
  %91 = vmatpush2.bf16.msra.mxu0 0
  %92 = vmatprep.mubr.bf16.mxu0 0
  %93 = vmatmul.mubr.bf16.gmra.mxu0 %v58
  %v94 = vpop.f32.mrf.mxu0
  %v95 = vadd.f32 0.0, %v94
  %v96 = vpop.f32.mrf.mxu0
  %v97 = vpop.f32.mrf.mxu0
  %v98 = vadd.f32 0.0, %v97
  %v99 = vpop.f32.mrf.mxu0
  %100 = vdwg.mxu0
  %v101 = vadd.f32 %v31, %v95
  %v102 = vadd.f32 %v32, %v98
  %103 = vst.msk [vmem:[#allocation2] sm:$0xff] %vm56, %v101
  %104 = vst.msk [vmem:[#allocation2 + $0x8] sm:$0xff] %vm56, %v102
  // Predicated region
  $region30: #{bert_encoder_forward.12} parent=0 // pred_check
    %p105 = pneg %p24
  $region31: #{bert_encoder_forward.12} parent=0 // pred_check_branch
    %107 = sbr.rel (%p105) target = $region33
  $region32: #{bert_encoder_forward.12} parent=0 // pred_region
    %v108 = vld [vmem:[#allocation2] sm:$0xff]
    %v109 = vld [vmem:[#allocation2 + $0x8] sm:$0xff]
    %v110 = vld [vmem:[%s2] sm:$0x1]
    %v112 = vlaneseq
    %v113 = vshrl.u32 %v112, 7
    %v114 = vsub.s32 0, %v113
    %v115 = vrot.slane %v110, %v114
    %v117 = vadd.f32 %v108, %v115
    %v118 = vadd.f32 %v109, %v115
    %v119 = vld [vmem:[%s3] sm:$0xf]
    %v120 = vld [vmem:[%s3 + $0x4] sm:$0xf]
    %v121 = vunpack.c.l.bf16 %v119
    %v122 = vunpack.c.l.bf16 %v120
    %v123 = vadd.f32 %v117, %v121
    %v124 = vadd.f32 %v118, %v122
    %v125 = vsel %vm56, %v123, 0.0
    %126 = vadd.xlane.f32.xlu0 %v125
    %v127 = vpop.xlane.xlu0 %126
    %v128 = vsel %vm56, %v124, 0.0
    %129 = vadd.xlane.f32.xlu0 %v128
    %v130 = vpop.xlane.xlu0 %129
    %v131 = vrcp.pop 32.0
    %v132 = vmul.f32 %v127, %v131
    %v133 = vmul.f32 %v130, %v131
    %v134 = vsub.f32 %v123, %v132
    %v135 = vsub.f32 %v124, %v133
    %v136 = vmul.f32 %v134, %v134
    %v137 = vmul.f32 %v135, %v135
    %v138 = vsel %vm56, %v136, 0.0
    %139 = vadd.xlane.f32.xlu0 %v138
    %v140 = vpop.xlane.xlu0 %139
    %v141 = vsel %vm56, %v137, 0.0
    %142 = vadd.xlane.f32.xlu0 %v141
    %v143 = vpop.xlane.xlu0 %142
    %v144 = vmul.f32 %v140, %v131
    %v145 = vmul.f32 %v143, %v131
    %v146 = vadd.f32 %v144, 1e-12
    %v147 = vadd.f32 %v145, 1e-12
    %v148 = vrsqrt.pop %v146
    %v149 = vrsqrt.pop %v147
    %v150 = vmul.f32 %v134, %v148
    %v151 = vmul.f32 %v135, %v149
    %v152 = vld [vmem:[%s4] sm:$0x1]
    %v154 = vlaneseq
    %v155 = vshrl.u32 %v154, 7
    %v156 = vsub.s32 0, %v155
    %v157 = vrot.slane %v152, %v156
    %v159 = vmul.f32 %v150, %v157
    %v160 = vmul.f32 %v151, %v157
    %v161 = vld [vmem:[%s5] sm:$0x1]
    %v163 = vlaneseq
    %v164 = vshrl.u32 %v163, 7
    %v165 = vsub.s32 0, %v164
    %v166 = vrot.slane %v161, %v165
    %v168 = vadd.f32 %v159, %v166
    %v169 = vadd.f32 %v160, %v166
    %v170 = vpack.c.bf16 %v169, %v168
    %v172 = vunpack.c.l.b16 %v170
    %v173 = vunpack.c.h.b16 %v170
    %v174 = vpack.c.b16 %v172, %v172
    %v175 = vpack.c.b16 %v173, %v173
    %vm178 = vcmask 257024
    %179 = vst.msk [vmem:[%s6] sm:$0xf] %vm178, %v174
    %180 = vst.msk [vmem:[%s6 + $0x4] sm:$0xf] %vm178, %v175
  $region33: #{bert_encoder_forward.12} parent=0 // pred_fallthru
    _
  // Predicated region
  $region34: #{bert_encoder_forward.12} parent=0 // pred_check
    _
  $region35: #{bert_encoder_forward.12} parent=0 // pred_check_branch
    %182 = sbr.rel (0) target = $region37
  $region36: #{bert_encoder_forward.12} parent=0 // pred_region
    _
  $region37: #{bert_encoder_forward.12} parent=0 // pred_fallthru
    _
  // Predicated region
  $region38: #{bert_encoder_forward.12} parent=0 // pred_check
    _
  $region39: #{bert_encoder_forward.12} parent=0 // pred_check_branch
    %184 = sbr.rel (0) target = $region41
  $region40: #{bert_encoder_forward.12} parent=0 // pred_region
    _
  $region41: #{bert_encoder_forward.12} parent=0 // pred_fallthru
    _

// kernel: bert_encoder_forward.10
$region0: #{bert_encoder_forward.10}
  #allocation0 [shape = 'u32[]', space=smem, size = 0x4, offset = 0x4, fixed_abs, tag = 'smem constant byte address 0x4 - core index']
  #allocation1 [shape = 'u32[144,128]{1,0:T(1,128)}', space=vmem, size = 0x12000, scoped, tag = 'internal scratch']
  #allocation2 [shape = 'f32[16,96]{1,0:T(8,128)}', space=vmem, size = 0x2000, scoped, tag = 'scratch operand']
  %s0 = inlined_call_operand.vmem [shape: bf16[16,32], index: 0, kind: input, shape index: {}]
  %s1 = inlined_call_operand.vmem [shape: bf16[32,96], index: 1, kind: input, shape index: {}]
  %s2 = inlined_call_operand.vmem [shape: f32[1,96], index: 2, kind: input, shape index: {}]
  %s3 = inlined_call_operand.vmem [shape: bf16[16,32], index: 3, kind: output, shape index: {0}]
  %s4 = inlined_call_operand.vmem [shape: bf16[16,32], index: 4, kind: output, shape index: {1}]
  %s5 = inlined_call_operand.vmem [shape: bf16[16,32], index: 5, kind: output, shape index: {2}]
  %6 = xla_tuple %s3, %s4, %s5
  %s7 = sld [smem:[#allocation0]]
  $region46: #{bert_encoder_forward.10} parent=0
    _
  %s9 = ssub.s32 1, %s7
  %s10 = scalar_select 0, %s9, %s7
  // Predicated region
  $region2: #{bert_encoder_forward.10} parent=0 // pred_check
    _
  $region3: #{bert_encoder_forward.10} parent=0 // pred_check_branch
    %12 = sbr.rel (0) target = $region5
  $region4: #{bert_encoder_forward.10} parent=0 // pred_region
    _
  $region5: #{bert_encoder_forward.10} parent=0 // pred_fallthru
    _
  // Predicated region
  $region6: #{bert_encoder_forward.10} parent=0 // pred_check
    _
  $region7: #{bert_encoder_forward.10} parent=0 // pred_check_branch
    %14 = sbr.rel (0) target = $region9
  $region8: #{bert_encoder_forward.10} parent=0 // pred_region
    _
  $region9: #{bert_encoder_forward.10} parent=0 // pred_fallthru
    _
  // Predicated region
  $region10: #{bert_encoder_forward.10} parent=0 // pred_check
    _
  $region11: #{bert_encoder_forward.10} parent=0 // pred_check_branch
    %16 = sbr.rel (0) target = $region13
  $region12: #{bert_encoder_forward.10} parent=0 // pred_region
    _
  $region13: #{bert_encoder_forward.10} parent=0 // pred_fallthru
    _
  %p18 = scmp.eq.s32.totalorder 0, 0
  // Predicated region
  $region14: #{bert_encoder_forward.10} parent=0 // pred_check
    %p19 = pneg %p18
  $region15: #{bert_encoder_forward.10} parent=0 // pred_check_branch
    %21 = sbr.rel (%p19) target = $region17
  $region16: #{bert_encoder_forward.10} parent=0 // pred_region
    %vm22 = vcmask 785408
    %23 = vst.msk [vmem:[#allocation2] sm:$0xff] %vm22, 0.0
    %24 = vst.msk [vmem:[#allocation2 + $0x8] sm:$0xff] %vm22, 0.0
  $region17: #{bert_encoder_forward.10} parent=0 // pred_fallthru
    _
  %v25 = vld [vmem:[#allocation2] sm:$0xff]
  %v26 = vld [vmem:[#allocation2 + $0x8] sm:$0xff]
  %v27 = vld [vmem:[%s0] sm:$0xf]
  %v28 = vld [vmem:[%s0 + $0x4] sm:$0xf]
  %v29 = vld [vmem:[%s1] sm:$0xf]
  %v30 = vld [vmem:[%s1 + $0x4] sm:$0xf]
  %v31 = vld [vmem:[%s1 + $0x8] sm:$0xf]
  %v32 = vld [vmem:[%s1 + $0xc] sm:$0xf]
  %v35 = vunpack.c.l.b16 %v27
  %v36 = vunpack.c.l.b16 %v28
  %v37 = vpack.c.b16 %v36, %v35
  %v42 = vunpack.c.l.b16 %v29
  %v43 = vunpack.c.l.b16 %v30
  %v44 = vunpack.c.l.b16 %v31
  %v45 = vunpack.c.l.b16 %v32
  %v46 = vpack.c.b16 %v43, %v42
  %v47 = vpack.c.b16 %v45, %v44
  %vm50 = vcmask 261120
  %v52 = vsel %vm50, %v37, 0
  %54 = vmatprep.subr.bf16.mxu0 0
  %55 = vmatpush1.bf16.msra.mxu0 0
  %56 = vmatprep.subr.bf16.mxu0 0
  %57 = vmatpush1.bf16.msra.mxu0 0
  %58 = vmatprep.subr.bf16.mxu0 0
  %59 = vmatpush1.bf16.msra.mxu0 0
  %60 = vmatprep.subr.bf16.mxu0 0
  %61 = vmatpush1.bf16.msra.mxu0 0
  %62 = vmatprep.subr.bf16.mxu0 0
  %63 = vmatpush1.bf16.msra.mxu0 0
  %64 = vmatprep.subr.bf16.mxu0 0
  %65 = vmatpush1.bf16.msra.mxu0 0
  %66 = vmatprep.subr.bf16.mxu0 0
  %67 = vmatpush1.bf16.msra.mxu0 %v47
  %68 = vmatprep.subr.bf16.mxu0 0
  %69 = vmatpush1.bf16.msra.mxu0 %v46
  %70 = vmatprep.subr.bf16.mxu0 0
  %71 = vmatpush2.bf16.msra.mxu0 0
  %72 = vmatprep.subr.bf16.mxu0 0
  %73 = vmatpush2.bf16.msra.mxu0 0
  %74 = vmatprep.subr.bf16.mxu0 0
  %75 = vmatpush2.bf16.msra.mxu0 0
  %76 = vmatprep.subr.bf16.mxu0 0
  %77 = vmatpush2.bf16.msra.mxu0 0
  %78 = vmatprep.subr.bf16.mxu0 0
  %79 = vmatpush2.bf16.msra.mxu0 0
  %80 = vmatprep.subr.bf16.mxu0 0
  %81 = vmatpush2.bf16.msra.mxu0 0
  %82 = vmatprep.subr.bf16.mxu0 0
  %83 = vmatpush2.bf16.msra.mxu0 0
  %84 = vmatprep.subr.bf16.mxu0 0
  %85 = vmatpush2.bf16.msra.mxu0 0
  %86 = vmatprep.mubr.bf16.mxu0 0
  %87 = vmatmul.mubr.bf16.gmra.mxu0 %v52
  %v88 = vpop.f32.mrf.mxu0
  %v89 = vadd.f32 0.0, %v88
  %v90 = vpop.f32.mrf.mxu0
  %v91 = vpop.f32.mrf.mxu0
  %v92 = vadd.f32 0.0, %v91
  %v93 = vpop.f32.mrf.mxu0
  %94 = vdwg.mxu0
  %v95 = vadd.f32 %v25, %v89
  %v96 = vadd.f32 %v26, %v92
  %vm97 = vcmask 785408
  %98 = vst.msk [vmem:[#allocation2] sm:$0xff] %vm97, %v95
  %99 = vst.msk [vmem:[#allocation2 + $0x8] sm:$0xff] %vm97, %v96
  // Predicated region
  $region18: #{bert_encoder_forward.10} parent=0 // pred_check
    %p100 = pneg %p18
  $region19: #{bert_encoder_forward.10} parent=0 // pred_check_branch
    %102 = sbr.rel (%p100) target = $region21
  $region20: #{bert_encoder_forward.10} parent=0 // pred_region
    %v103 = vld [vmem:[#allocation2] sm:$0xff]
    %v104 = vld [vmem:[#allocation2 + $0x8] sm:$0xff]
    %v105 = vld [vmem:[%s2] sm:$0x1]
    %v107 = vlaneseq
    %v108 = vshrl.u32 %v107, 7
    %v109 = vsub.s32 0, %v108
    %v110 = vrot.slane %v105, %v109
    %v112 = vadd.f32 %v103, %v110
    %v113 = vadd.f32 %v104, %v110
    %v114 = vmul.f32 %v112, 0.35355338
    %v115 = vmul.f32 %v113, 0.35355338
    %v116 = vpack.c.bf16 %v115, %v114
    %v118 = vunpack.c.l.b16 %v116
    %v119 = vunpack.c.h.b16 %v116
    %v120 = vpack.c.b16 %v118, %v118
    %v121 = vpack.c.b16 %v119, %v119
    %vm124 = vcmask 257024
    %125 = vst.msk [vmem:[%s3] sm:$0xf] %vm124, %v120
    %126 = vst.msk [vmem:[%s3 + $0x4] sm:$0xf] %vm124, %v121
    %v127 = vpack.c.bf16 %v113, %v112
    %v129 = vunpack.c.l.b16 %v127
    %v130 = vunpack.c.h.b16 %v127
    %v131 = vpack.c.b16 %v129, %v129
    %v132 = vpack.c.b16 %v130, %v130
    %133 = vrot.lane.b32.xlu0 %v131, 96
    %v134 = vpop.permute.xlu0 %133
    %135 = vrot.lane.b32.xlu0 %v132, 96
    %v136 = vpop.permute.xlu0 %135
    %139 = vst.msk [vmem:[%s4] sm:$0xf] %vm124, %v134
    %140 = vst.msk [vmem:[%s4 + $0x4] sm:$0xf] %vm124, %v136
    %141 = vrot.lane.b32.xlu0 %v131, 64
    %v142 = vpop.permute.xlu0 %141
    %143 = vrot.lane.b32.xlu0 %v132, 64
    %v144 = vpop.permute.xlu0 %143
    %147 = vst.msk [vmem:[%s5] sm:$0xf] %vm124, %v142
    %148 = vst.msk [vmem:[%s5 + $0x4] sm:$0xf] %vm124, %v144
  $region21: #{bert_encoder_forward.10} parent=0 // pred_fallthru
    _
  // Predicated region
  $region22: #{bert_encoder_forward.10} parent=0 // pred_check
    _
  $region23: #{bert_encoder_forward.10} parent=0 // pred_check_branch
    %150 = sbr.rel (0) target = $region25
  $region24: #{bert_encoder_forward.10} parent=0 // pred_region
    _
  $region25: #{bert_encoder_forward.10} parent=0 // pred_fallthru
    _
  // Predicated region
  $region26: #{bert_encoder_forward.10} parent=0 // pred_check
    _
  $region27: #{bert_encoder_forward.10} parent=0 // pred_check_branch
    %152 = sbr.rel (0) target = $region29
  $region28: #{bert_encoder_forward.10} parent=0 // pred_region
    _
  $region29: #{bert_encoder_forward.10} parent=0 // pred_fallthru
    _
  // Predicated region
  $region30: #{bert_encoder_forward.10} parent=0 // pred_check
    _
  $region31: #{bert_encoder_forward.10} parent=0 // pred_check_branch
    %154 = sbr.rel (0) target = $region33
  $region32: #{bert_encoder_forward.10} parent=0 // pred_region
    _
  $region33: #{bert_encoder_forward.10} parent=0 // pred_fallthru
    _
  // Predicated region
  $region34: #{bert_encoder_forward.10} parent=0 // pred_check
    _
  $region35: #{bert_encoder_forward.10} parent=0 // pred_check_branch
    %156 = sbr.rel (0) target = $region37
  $region36: #{bert_encoder_forward.10} parent=0 // pred_region
    _
  $region37: #{bert_encoder_forward.10} parent=0 // pred_fallthru
    _
  // Predicated region
  $region38: #{bert_encoder_forward.10} parent=0 // pred_check
    _
  $region39: #{bert_encoder_forward.10} parent=0 // pred_check_branch
    %158 = sbr.rel (0) target = $region41
  $region40: #{bert_encoder_forward.10} parent=0 // pred_region
    _
  $region41: #{bert_encoder_forward.10} parent=0 // pred_fallthru
    _
  // Predicated region
  $region42: #{bert_encoder_forward.10} parent=0 // pred_check
    _
  $region43: #{bert_encoder_forward.10} parent=0 // pred_check_branch
    %160 = sbr.rel (0) target = $region45
  $region44: #{bert_encoder_forward.10} parent=0 // pred_region
    _
  $region45: #{bert_encoder_forward.10} parent=0 // pred_fallthru
    _

// kernel: bert_encoder_forward.11
$region0: #{bert_encoder_forward.11}
  #allocation0 [shape = 'u32[]', space=smem, size = 0x4, offset = 0x4, fixed_abs, tag = 'smem constant byte address 0x4 - core index']
  #allocation1 [shape = 'u32[144,128]{1,0:T(1,128)}', space=vmem, size = 0x12000, scoped, tag = 'internal scratch']
  #allocation2 [shape = 'f32[8,4]{1,0:T(8,128)}', space=vmem, size = 0x1000, scoped, tag = 'scratch operand']
  #allocation3 [shape = 'f32[8,4]{1,0:T(8,128)}', space=vmem, size = 0x1000, scoped, tag = 'scratch operand']
  #allocation4 [shape = 'f32[8,32]{1,0:T(8,128)}', space=vmem, size = 0x1000, scoped, tag = 'scratch operand']
  %s0 = inlined_call_operand.vmem [shape: bf16[2,8,32], index: 0, kind: input, shape index: {}]
  %s1 = inlined_call_operand.vmem [shape: bf16[2,8,32], index: 1, kind: input, shape index: {}]
  %s2 = inlined_call_operand.vmem [shape: bf16[2,8,32], index: 2, kind: input, shape index: {}]
  %s3 = inlined_call_operand.vmem [shape: f32[2,1,8], index: 3, kind: input, shape index: {}]
  %s4 = inlined_call_operand.vmem [shape: bf16[2,8,32], index: 4, kind: output, shape index: {}]
  %s5 = sld [smem:[#allocation0]]
  $region57: #{bert_encoder_forward.11} parent=0
    _
  %s7 = ssub.s32 1, %s5
  %s8 = scalar_select 0, %s7, %s5
  loop: start=0, step=1, limit=4
  $region2: #{bert_encoder_forward.11} parent=0 // loop_pre_header
    _
  $region3: #{bert_encoder_forward.11} parent=0 // loop_header
    %s10 = sphi 0, %s14
    %p11 = scmp.ge.s32.totalorder %s10, 4
    %s17 = sphi 0, %s36
    %s18 = sphi 0, %s32
    %s19 = sphi 0, %s28
    %s20 = sphi 0, %s17
    %s21 = sphi 0, %s18
    %s22 = sphi 0, %s19
    %s23 = sphi 0, %s20
    %s24 = sphi 0, %s21
    %s25 = sphi 0, %s22
    %s41 = sphi 0, %s43
    %s44 = sphi 0, %s41
    %s45 = sphi 0, %s44
    %s61 = sphi 0, %s45
    %s69 = sphi 0, %s71
    %s72 = sphi 0, %s69
    %s73 = sphi 0, %s72
    %s89 = sphi 0, %s73
    %s97 = sphi 0, %s99
    %s100 = sphi 0, %s97
    %s101 = sphi 0, %s100
    %s117 = sphi 0, %s101
    %s125 = sphi 0, %s127
    %s128 = sphi 0, %s125
    %s129 = sphi 0, %s128
    %s145 = sphi 0, %s129
    %s153 = sphi 0, %s155
    %s156 = sphi 0, %s153
    %s157 = sphi 0, %s156
    %s173 = sphi 0, %s157
  $region4: #{bert_encoder_forward.11} parent=0 // loop_header_branch
    %13 = sbr.rel (%p11) target = $region8
  $region5: #{bert_encoder_forward.11} parent=0 // loop_body
    %s15 = ssub.s32 %s10, 1
    %s16 = ssub.s32 %s10, 2
    %s26 = sadd.s32 1, %s19
    %p27 = scmp.ge.s32.totalorder %s26, 1
    %s28 = scalar_select %p27, 0, %s26
    %s29 = sadd.s32 1, %s18
    %s30 = scalar_select %p27, %s29, %s18
    %p31 = scmp.ge.s32.totalorder %s30, 1
    %s32 = scalar_select %p31, 0, %s30
    %s33 = sadd.s32 1, %s17
    %s34 = scalar_select %p31, %s33, %s17
    %p35 = scmp.ge.s32.totalorder %s34, 2
    %s36 = scalar_select %p35, 0, %s34
    %s37 = ssub.s32 %s17, %s36
    %s38 = ssub.s32 %s18, %s32
    %s39 = sor.u32 %s37, %s38
    %p40 = scmp.eq.s32.totalorder %s39, 0
    %s42 = sadd.s32 %s41, 1
    %s43 = scalar_select %p40, %s41, %s42
    %p46 = pneg %p40
    %p47 = scmp.eq.s32.totalorder %s10, 1
    %p48 = por %p46, %p47
    %p49 = scmp.ne.s32.totalorder %s41, %s44
    %p50 = scmp.eq.s32.totalorder %s10, 0
    %p51 = por %p49, %p50
    %p52 = scmp.ne.s32.totalorder %s41, %s44
    %p53 = scmp.eq.s32.totalorder %s15, 1
    %p54 = por %p52, %p53
    %p55 = scmp.ne.s32.totalorder %s44, %s45
    %p56 = scmp.eq.s32.totalorder %s15, 0
    %p57 = por %p55, %p56
    %p58 = scmp.ne.s32.totalorder %s44, %s45
    %p59 = scmp.eq.s32.totalorder %s16, 1
    %p60 = por %p58, %p59
    %p62 = scmp.ne.s32.totalorder %s45, %s61
    %p63 = scmp.eq.s32.totalorder %s16, 0
    %p64 = por %p62, %p63
    %s65 = ssub.s32 %s17, %s36
    %s66 = ssub.s32 %s19, %s28
    %s67 = sor.u32 %s65, %s66
    %p68 = scmp.eq.s32.totalorder %s67, 0
    %s70 = sadd.s32 %s69, 1
    %s71 = scalar_select %p68, %s69, %s70
    %p74 = pneg %p68
    %p75 = scmp.eq.s32.totalorder %s10, 1
    %p76 = por %p74, %p75
    %p77 = scmp.ne.s32.totalorder %s69, %s72
    %p78 = scmp.eq.s32.totalorder %s10, 0
    %p79 = por %p77, %p78
    %p80 = scmp.ne.s32.totalorder %s69, %s72
    %p81 = scmp.eq.s32.totalorder %s15, 1
    %p82 = por %p80, %p81
    %p83 = scmp.ne.s32.totalorder %s72, %s73
    %p84 = scmp.eq.s32.totalorder %s15, 0
    %p85 = por %p83, %p84
    %p86 = scmp.ne.s32.totalorder %s72, %s73
    %p87 = scmp.eq.s32.totalorder %s16, 1
    %p88 = por %p86, %p87
    %p90 = scmp.ne.s32.totalorder %s73, %s89
    %p91 = scmp.eq.s32.totalorder %s16, 0
    %p92 = por %p90, %p91
    %s93 = ssub.s32 %s17, %s36
    %s94 = ssub.s32 %s19, %s28
    %s95 = sor.u32 %s93, %s94
    %p96 = scmp.eq.s32.totalorder %s95, 0
    %s98 = sadd.s32 %s97, 1
    %s99 = scalar_select %p96, %s97, %s98
    %p102 = pneg %p96
    %p103 = scmp.eq.s32.totalorder %s10, 1
    %p104 = por %p102, %p103
    %p105 = scmp.ne.s32.totalorder %s97, %s100
    %p106 = scmp.eq.s32.totalorder %s10, 0
    %p107 = por %p105, %p106
    %p108 = scmp.ne.s32.totalorder %s97, %s100
    %p109 = scmp.eq.s32.totalorder %s15, 1
    %p110 = por %p108, %p109
    %p111 = scmp.ne.s32.totalorder %s100, %s101
    %p112 = scmp.eq.s32.totalorder %s15, 0
    %p113 = por %p111, %p112
    %p114 = scmp.ne.s32.totalorder %s100, %s101
    %p115 = scmp.eq.s32.totalorder %s16, 1
    %p116 = por %p114, %p115
    %p118 = scmp.ne.s32.totalorder %s101, %s117
    %p119 = scmp.eq.s32.totalorder %s16, 0
    %p120 = por %p118, %p119
    %s121 = ssub.s32 %s17, %s36
    %s122 = ssub.s32 %s19, %s28
    %s123 = sor.u32 %s121, %s122
    %p124 = scmp.eq.s32.totalorder %s123, 0
    %s126 = sadd.s32 %s125, 1
    %s127 = scalar_select %p124, %s125, %s126
    %p130 = pneg %p124
    %p131 = scmp.eq.s32.totalorder %s10, 1
    %p132 = por %p130, %p131
    %p133 = scmp.ne.s32.totalorder %s125, %s128
    %p134 = scmp.eq.s32.totalorder %s10, 0
    %p135 = por %p133, %p134
    %p136 = scmp.ne.s32.totalorder %s125, %s128
    %p137 = scmp.eq.s32.totalorder %s15, 1
    %p138 = por %p136, %p137
    %p139 = scmp.ne.s32.totalorder %s128, %s129
    %p140 = scmp.eq.s32.totalorder %s15, 0
    %p141 = por %p139, %p140
    %p142 = scmp.ne.s32.totalorder %s128, %s129
    %p143 = scmp.eq.s32.totalorder %s16, 1
    %p144 = por %p142, %p143
    %p146 = scmp.ne.s32.totalorder %s129, %s145
    %p147 = scmp.eq.s32.totalorder %s16, 0
    %p148 = por %p146, %p147
    %s149 = ssub.s32 %s17, %s36
    %s150 = ssub.s32 %s18, %s32
    %s151 = sor.u32 %s149, %s150
    %p152 = scmp.eq.s32.totalorder %s151, 0
    %s154 = sadd.s32 %s153, 1
    %s155 = scalar_select %p152, %s153, %s154
    %p158 = pneg %p152
    %p159 = scmp.eq.s32.totalorder %s10, 1
    %p160 = por %p158, %p159
    %p161 = scmp.ne.s32.totalorder %s153, %s156
    %p162 = scmp.eq.s32.totalorder %s10, 0
    %p163 = por %p161, %p162
    %p164 = scmp.ne.s32.totalorder %s153, %s156
    %p165 = scmp.eq.s32.totalorder %s15, 1
    %p166 = por %p164, %p165
    %p167 = scmp.ne.s32.totalorder %s156, %s157
    %p168 = scmp.eq.s32.totalorder %s15, 0
    %p169 = por %p167, %p168
    %p170 = scmp.ne.s32.totalorder %s156, %s157
    %p171 = scmp.eq.s32.totalorder %s16, 1
    %p172 = por %p170, %p171
    %p174 = scmp.ne.s32.totalorder %s157, %s173
    %p175 = scmp.eq.s32.totalorder %s16, 0
    %p176 = por %p174, %p175
    %p177 = scmp.le.s32.totalorder 1, %s10
    %p178 = scmp.lt.s32.totalorder %s10, 3
    %p179 = pnand %p177, %p178
    %p180 = pneg %p179
    // Predicated region
    $region9: #{bert_encoder_forward.11} parent=5 // pred_check
      _
    $region10: #{bert_encoder_forward.11} parent=5 // pred_check_branch
      %182 = sbr.rel (%p179) target = $region12
    $region11: #{bert_encoder_forward.11} parent=5 // pred_region
      %s183 = ssub.s32 %s10, 1
    $region12: #{bert_encoder_forward.11} parent=5 // pred_fallthru
      _
    %p184 = scmp.lt.s32.totalorder %s10, 2
    // Predicated region
    $region13: #{bert_encoder_forward.11} parent=5 // pred_check
      %p185 = pneg %p184
    $region14: #{bert_encoder_forward.11} parent=5 // pred_check_branch
      %187 = sbr.rel (%p185) target = $region16
    $region15: #{bert_encoder_forward.11} parent=5 // pred_region
      // Predicated region
      $region17: #{bert_encoder_forward.11} parent=15 // pred_check
        %p188 = pneg %p51
      $region18: #{bert_encoder_forward.11} parent=15 // pred_check_branch
        %190 = sbr.rel (%p188) target = $region20
      $region19: #{bert_encoder_forward.11} parent=15 // pred_region
        %p191 = scmp.lt.s32.totalorder %s17, 1
        %s192 = scalar_select %p191, %s17, 1
        %p193 = scmp.lt.s32.totalorder %s18, 0
        %s194 = scalar_select %p193, %s18, 0
        %s195 = sadd.s32 %s194, %s192
        %s196 = smul.addr %s195, 4
        %s197 = scalar_lea.vmem %s0, %s196
      $region20: #{bert_encoder_forward.11} parent=15 // pred_fallthru
        _
      // Predicated region
      $region21: #{bert_encoder_forward.11} parent=15 // pred_check
        %p198 = pneg %p79
      $region22: #{bert_encoder_forward.11} parent=15 // pred_check_branch
        %200 = sbr.rel (%p198) target = $region24
      $region23: #{bert_encoder_forward.11} parent=15 // pred_region
        %p201 = scmp.lt.s32.totalorder %s17, 1
        %s202 = scalar_select %p201, %s17, 1
        %p203 = scmp.lt.s32.totalorder %s19, 0
        %s204 = scalar_select %p203, %s19, 0
        %s205 = sadd.s32 %s204, %s202
        %s206 = smul.addr %s205, 4
        %s207 = scalar_lea.vmem %s1, %s206
      $region24: #{bert_encoder_forward.11} parent=15 // pred_fallthru
        _
      // Predicated region
      $region25: #{bert_encoder_forward.11} parent=15 // pred_check
        %p208 = pneg %p107
      $region26: #{bert_encoder_forward.11} parent=15 // pred_check_branch
        %210 = sbr.rel (%p208) target = $region28
      $region27: #{bert_encoder_forward.11} parent=15 // pred_region
        %p211 = scmp.lt.s32.totalorder %s17, 1
        %s212 = scalar_select %p211, %s17, 1
        %p213 = scmp.lt.s32.totalorder %s19, 0
        %s214 = scalar_select %p213, %s19, 0
        %s215 = sadd.s32 %s214, %s212
        %s216 = smul.addr %s215, 4
        %s217 = scalar_lea.vmem %s2, %s216
      $region28: #{bert_encoder_forward.11} parent=15 // pred_fallthru
        _
      // Predicated region
      $region29: #{bert_encoder_forward.11} parent=15 // pred_check
        %p218 = pneg %p135
      $region30: #{bert_encoder_forward.11} parent=15 // pred_check_branch
        %220 = sbr.rel (%p218) target = $region32
      $region31: #{bert_encoder_forward.11} parent=15 // pred_region
        %p221 = scmp.lt.s32.totalorder %s17, 1
        %s222 = scalar_select %p221, %s17, 1
        %p223 = scmp.lt.s32.totalorder %s19, 0
        %s224 = scalar_select %p223, %s19, 0
        %s225 = sadd.s32 %s224, %s222
        %s226 = scalar_lea.vmem %s3, %s225
      $region32: #{bert_encoder_forward.11} parent=15 // pred_fallthru
        _
    $region16: #{bert_encoder_forward.11} parent=5 // pred_fallthru
      _
    %p227 = scmp.le.s32.totalorder 1, %s10
    %p228 = scmp.lt.s32.totalorder %s10, 3
    %p229 = pnand %p227, %p228
    %p230 = pneg %p229
    // Predicated region
    $region33: #{bert_encoder_forward.11} parent=5 // pred_check
      _
    $region34: #{bert_encoder_forward.11} parent=5 // pred_check_branch
      %232 = sbr.rel (%p229) target = $region36
    $region35: #{bert_encoder_forward.11} parent=5 // pred_region
      %s233 = ssub.s32 %s10, 1
      %p234 = scmp.lt.s32.totalorder %s20, 1
      %s235 = scalar_select %p234, %s20, 1
      %p236 = scmp.lt.s32.totalorder %s21, 0
      %s237 = scalar_select %p236, %s21, 0
      %s238 = sadd.s32 %s237, %s235
      %s239 = smul.addr %s238, 4
      %s240 = scalar_lea.vmem %s0, %s239
      %p241 = pneg %p57
      %p242 = pneg %p54
      %p243 = scmp.lt.s32.totalorder %s20, 1
      %s244 = scalar_select %p243, %s20, 1
      %p245 = scmp.lt.s32.totalorder %s22, 0
      %s246 = scalar_select %p245, %s22, 0
      %s247 = sadd.s32 %s246, %s244
      %s248 = smul.addr %s247, 4
      %s249 = scalar_lea.vmem %s1, %s248
      %p250 = pneg %p85
      %p251 = pneg %p82
      %p252 = scmp.lt.s32.totalorder %s20, 1
      %s253 = scalar_select %p252, %s20, 1
      %p254 = scmp.lt.s32.totalorder %s22, 0
      %s255 = scalar_select %p254, %s22, 0
      %s256 = sadd.s32 %s255, %s253
      %s257 = smul.addr %s256, 4
      %s258 = scalar_lea.vmem %s2, %s257
      %p259 = pneg %p113
      %p260 = pneg %p110
      %p261 = scmp.lt.s32.totalorder %s20, 1
      %s262 = scalar_select %p261, %s20, 1
      %p263 = scmp.lt.s32.totalorder %s22, 0
      %s264 = scalar_select %p263, %s22, 0
      %s265 = sadd.s32 %s264, %s262
      %s266 = scalar_lea.vmem %s3, %s265
      %p267 = pneg %p141
      %p268 = pneg %p138
      %p269 = pneg %p169
      %p270 = pneg %p166
      %p271 = scmp.lt.s32.totalorder %s20, 1
      %s272 = scalar_select %p271, %s20, 1
      %p273 = scmp.lt.s32.totalorder %s21, 0
      %s274 = scalar_select %p273, %s21, 0
      %s275 = sadd.s32 %s274, %s272
      %s276 = smul.addr %s275, 4
      %s277 = scalar_lea.vmem %s4, %s276
      %p278 = scmp.lt.s32.totalorder %s20, 1
      %s279 = scalar_select %p278, %s20, 1
      %p280 = scmp.lt.s32.totalorder %s21, 0
      %s281 = scalar_select %p280, %s21, 0
      %s282 = sadd.s32 %s281, %s279
      %s283 = smul.addr %s282, 4
      %s284 = scalar_lea.vmem %s0, %s283
      %p285 = scmp.lt.s32.totalorder %s20, 1
      %s286 = scalar_select %p285, %s20, 1
      %p287 = scmp.lt.s32.totalorder %s22, 0
      %s288 = scalar_select %p287, %s22, 0
      %s289 = sadd.s32 %s288, %s286
      %s290 = smul.addr %s289, 4
      %s291 = scalar_lea.vmem %s1, %s290
      %p292 = scmp.lt.s32.totalorder %s20, 1
      %s293 = scalar_select %p292, %s20, 1
      %p294 = scmp.lt.s32.totalorder %s22, 0
      %s295 = scalar_select %p294, %s22, 0
      %s296 = sadd.s32 %s295, %s293
      %s297 = smul.addr %s296, 4
      %s298 = scalar_lea.vmem %s2, %s297
      %p299 = scmp.lt.s32.totalorder %s20, 1
      %s300 = scalar_select %p299, %s20, 1
      %p301 = scmp.lt.s32.totalorder %s22, 0
      %s302 = scalar_select %p301, %s22, 0
      %s303 = sadd.s32 %s302, %s300
      %s304 = scalar_lea.vmem %s3, %s303
      %p305 = scmp.lt.s32.totalorder %s20, 1
      %s306 = scalar_select %p305, %s20, 1
      %p307 = scmp.lt.s32.totalorder %s21, 0
      %s308 = scalar_select %p307, %s21, 0
      %s309 = sadd.s32 %s308, %s306
      %s310 = smul.addr %s309, 4
      %s311 = scalar_lea.vmem %s4, %s310
      %p313 = scmp.eq.s32.totalorder %s22, 0
      // Predicated region
      $region37: #{bert_encoder_forward.11} parent=35 // pred_check
        %p314 = pneg %p313
      $region38: #{bert_encoder_forward.11} parent=35 // pred_check_branch
        %316 = sbr.rel (%p314) target = $region40
      $region39: #{bert_encoder_forward.11} parent=35 // pred_region
        %vm317 = vcmask 31744
        %318 = vst.msk [vmem:[#allocation2] sm:$0xff] %vm317, -inf
        %319 = vst.msk [vmem:[#allocation3] sm:$0xff] %vm317, 0.0
        %vm320 = vcmask 261120
        %321 = vst.msk [vmem:[#allocation4] sm:$0xff] %vm320, 0.0
      $region40: #{bert_encoder_forward.11} parent=35 // pred_fallthru
        _
      %v322 = vld [vmem:[%s304] sm:$0x1]
      %v323 = vld [vmem:[%s284] sm:$0xf]
      %v324 = vld [vmem:[%s291] sm:$0xf]
      %v325 = vld [vmem:[%s298] sm:$0xf]
      %v327 = vlaneseq
      %v328 = vshrl.u32 %v327, 7
      %v329 = vsub.s32 0, %v328
      %v330 = vrot.slane %v322, %v329
      %vm332 = vcmask 64512
      %v334 = vsel %vm332, %v323, 0
      %v337 = vsel %vm332, %v324, 0
      %339 = vmatprep.subr.bf16.mxu0 0
      %340 = vmatpush1.bf16.xpose.msra.mxu0 0
      %341 = vmatprep.subr.bf16.mxu0 0
      %342 = vmatpush1.bf16.xpose.msra.mxu0 0
      %343 = vmatprep.subr.bf16.mxu0 0
      %344 = vmatpush1.bf16.xpose.msra.mxu0 0
      %345 = vmatprep.subr.bf16.mxu0 0
      %346 = vmatpush1.bf16.xpose.msra.mxu0 0
      %347 = vmatprep.subr.bf16.mxu0 0
      %348 = vmatpush1.bf16.xpose.msra.mxu0 0
      %349 = vmatprep.subr.bf16.mxu0 0
      %350 = vmatpush1.bf16.xpose.msra.mxu0 0
      %351 = vmatprep.subr.bf16.mxu0 0
      %352 = vmatpush1.bf16.xpose.msra.mxu0 0
      %353 = vmatprep.subr.bf16.mxu0 0
      %354 = vmatpush1.bf16.xpose.msra.mxu0 %v337
      %355 = vmatprep.subr.bf16.mxu0 0
      %356 = vmatpush2.bf16.xpose.msra.mxu0 0
      %357 = vmatprep.subr.bf16.mxu0 0
      %358 = vmatpush2.bf16.xpose.msra.mxu0 0
      %359 = vmatprep.subr.bf16.mxu0 0
      %360 = vmatpush2.bf16.xpose.msra.mxu0 0
      %361 = vmatprep.subr.bf16.mxu0 0
      %362 = vmatpush2.bf16.xpose.msra.mxu0 0
      %363 = vmatprep.subr.bf16.mxu0 0
      %364 = vmatpush2.bf16.xpose.msra.mxu0 0
      %365 = vmatprep.subr.bf16.mxu0 0
      %366 = vmatpush2.bf16.xpose.msra.mxu0 0
      %367 = vmatprep.subr.bf16.mxu0 0
      %368 = vmatpush2.bf16.xpose.msra.mxu0 0
      %369 = vmatprep.subr.bf16.mxu0 0
      %370 = vmatpush2.bf16.xpose.msra.mxu0 0
      %371 = vmatprep.mubr.bf16.mxu0 0
      %372 = vmatmul.mubr.bf16.gmra.mxu0 %v334
      %v373 = vpop.f32.mrf.mxu0
      %v374 = vadd.f32 %v330, %v373
      %v375 = vpop.f32.mrf.mxu0
      %v376 = vpop.f32.mrf.mxu0
      %v377 = vpop.f32.mrf.mxu0
      %378 = vdwg.mxu0
      %v379 = vld [vmem:[#allocation2] sm:$0xff]
      %v380 = vsel %vm332, %v374, -inf
      %381 = vmax.xlane.f32.xlu0 %v380
      %v382 = vpop.xlane.xlu0 %381
      %v383 = vmax.f32 %v379, %v382
      %v384 = vsub.f32 %v379, %v383
      %v385 = vmul.f32 %v384, 1.442695
      %v386 = vpow.pop %v385
      %388 = vset.pattern.permute.xlu0 0
      %389 = vperm.xlu0 %388, %v383
      %v390 = vpop.permute.xlu0 %389
      %v392 = vsub.f32 %v374, %v390
      %v393 = vmul.f32 %v392, 1.442695
      %v394 = vpow.pop %v393
      %v395 = vld [vmem:[#allocation3] sm:$0xff]
      %v396 = vmul.f32 %v386, %v395
      %v397 = vsel %vm332, %v394, 0.0
      %398 = vadd.xlane.f32.xlu0 %v397
      %v399 = vpop.xlane.xlu0 %398
      %v400 = vadd.f32 %v396, %v399
      %vm401 = vcmask 7168
      %402 = vst.msk [vmem:[#allocation3] sm:$0xff] %vm401, %v400
      %v403 = vpack.c.bf16 %v394, %v394
      %v405 = vsel %vm332, %v403, 0
      %vm407 = vcmask 1043456
      %v409 = vsel %vm407, %v325, 0
      %411 = vmatprep.subr.bf16.mxu0 0
      %412 = vmatpush1.bf16.msra.mxu0 0
      %413 = vmatprep.subr.bf16.mxu0 0
      %414 = vmatpush1.bf16.msra.mxu0 0
      %415 = vmatprep.subr.bf16.mxu0 0
      %416 = vmatpush1.bf16.msra.mxu0 0
      %417 = vmatprep.subr.bf16.mxu0 0
      %418 = vmatpush1.bf16.msra.mxu0 0
      %419 = vmatprep.subr.bf16.mxu0 0
      %420 = vmatpush1.bf16.msra.mxu0 0
      %421 = vmatprep.subr.bf16.mxu0 0
      %422 = vmatpush1.bf16.msra.mxu0 0
      %423 = vmatprep.subr.bf16.mxu0 0
      %424 = vmatpush1.bf16.msra.mxu0 0
      %425 = vmatprep.subr.bf16.mxu0 0
      %426 = vmatpush1.bf16.msra.mxu0 %v409
      %427 = vmatprep.subr.bf16.mxu0 0
      %428 = vmatpush2.bf16.msra.mxu0 0
      %429 = vmatprep.subr.bf16.mxu0 0
      %430 = vmatpush2.bf16.msra.mxu0 0
      %431 = vmatprep.subr.bf16.mxu0 0
      %432 = vmatpush2.bf16.msra.mxu0 0
      %433 = vmatprep.subr.bf16.mxu0 0
      %434 = vmatpush2.bf16.msra.mxu0 0
      %435 = vmatprep.subr.bf16.mxu0 0
      %436 = vmatpush2.bf16.msra.mxu0 0
      %437 = vmatprep.subr.bf16.mxu0 0
      %438 = vmatpush2.bf16.msra.mxu0 0
      %439 = vmatprep.subr.bf16.mxu0 0
      %440 = vmatpush2.bf16.msra.mxu0 0
      %441 = vmatprep.subr.bf16.mxu0 0
      %442 = vmatpush2.bf16.msra.mxu0 0
      %443 = vmatprep.mubr.bf16.mxu0 0
      %444 = vmatmul.mubr.bf16.gmra.mxu0 %v405
      %v445 = vpop.f32.mrf.mxu0
      %v446 = vadd.f32 0.0, %v445
      %v447 = vpop.f32.mrf.mxu0
      %v448 = vpop.f32.mrf.mxu0
      %v449 = vpop.f32.mrf.mxu0
      %450 = vdwg.mxu0
      %v451 = vld [vmem:[#allocation4] sm:$0xff]
      %453 = vset.pattern.permute.xlu0 0
      %454 = vperm.xlu0 %453, %v386
      %v455 = vpop.permute.xlu0 %454
      %v457 = vmul.f32 %v455, %v451
      %v458 = vadd.f32 %v457, %v446
      %459 = vst.msk [vmem:[#allocation4] sm:$0xff] %vm332, %v458
      %460 = vst.msk [vmem:[#allocation2] sm:$0xff] %vm401, %v383
      %v461 = vld [vmem:[%s284] sm:$0xf]
      %v462 = vld [vmem:[%s291] sm:$0xf]
      %v463 = vld [vmem:[%s298] sm:$0xf]
      %v465 = vunpack.c.l.b16 %v461
      %v466 = vpack.c.b16 %v465, %v465
      %467 = vrot.lane.b32.xlu0 %v466, 120
      %v468 = vpop.permute.xlu0 %467
      %v470 = vunpack.c.l.b16 %v462
      %v471 = vpack.c.b16 %v470, %v470
      %472 = vrot.lane.b32.xlu0 %v471, 120
      %v473 = vpop.permute.xlu0 %472
      %v475 = vsel %vm332, %v468, 0
      %v478 = vsel %vm332, %v473, 0
      %480 = vmatprep.subr.bf16.mxu0 0
      %481 = vmatpush1.bf16.xpose.msra.mxu0 0
      %482 = vmatprep.subr.bf16.mxu0 0
      %483 = vmatpush1.bf16.xpose.msra.mxu0 0
      %484 = vmatprep.subr.bf16.mxu0 0
      %485 = vmatpush1.bf16.xpose.msra.mxu0 0
      %486 = vmatprep.subr.bf16.mxu0 0
      %487 = vmatpush1.bf16.xpose.msra.mxu0 0
      %488 = vmatprep.subr.bf16.mxu0 0
      %489 = vmatpush1.bf16.xpose.msra.mxu0 0
      %490 = vmatprep.subr.bf16.mxu0 0
      %491 = vmatpush1.bf16.xpose.msra.mxu0 0
      %492 = vmatprep.subr.bf16.mxu0 0
      %493 = vmatpush1.bf16.xpose.msra.mxu0 0
      %494 = vmatprep.subr.bf16.mxu0 0
      %495 = vmatpush1.bf16.xpose.msra.mxu0 %v478
      %496 = vmatprep.subr.bf16.mxu0 0
      %497 = vmatpush2.bf16.xpose.msra.mxu0 0
      %498 = vmatprep.subr.bf16.mxu0 0
      %499 = vmatpush2.bf16.xpose.msra.mxu0 0
      %500 = vmatprep.subr.bf16.mxu0 0
      %501 = vmatpush2.bf16.xpose.msra.mxu0 0
      %502 = vmatprep.subr.bf16.mxu0 0
      %503 = vmatpush2.bf16.xpose.msra.mxu0 0
      %504 = vmatprep.subr.bf16.mxu0 0
      %505 = vmatpush2.bf16.xpose.msra.mxu0 0
      %506 = vmatprep.subr.bf16.mxu0 0
      %507 = vmatpush2.bf16.xpose.msra.mxu0 0
      %508 = vmatprep.subr.bf16.mxu0 0
      %509 = vmatpush2.bf16.xpose.msra.mxu0 0
      %510 = vmatprep.subr.bf16.mxu0 0
      %511 = vmatpush2.bf16.xpose.msra.mxu0 0
      %512 = vmatprep.mubr.bf16.mxu0 0
      %513 = vmatmul.mubr.bf16.gmra.mxu0 %v475
      %v514 = vpop.f32.mrf.mxu0
      %v515 = vadd.f32 %v330, %v514
      %v516 = vpop.f32.mrf.mxu0
      %v517 = vpop.f32.mrf.mxu0
      %v518 = vpop.f32.mrf.mxu0
      %519 = vdwg.mxu0
      %v520 = vld [vmem:[#allocation2] sm:$0xff]
      %v521 = vsel %vm332, %v515, -inf
      %522 = vmax.xlane.f32.xlu0 %v521
      %v523 = vpop.xlane.xlu0 %522
      %v524 = vmax.f32 %v520, %v523
      %v525 = vsub.f32 %v520, %v524
      %v526 = vmul.f32 %v525, 1.442695
      %v527 = vpow.pop %v526
      %529 = vset.pattern.permute.xlu0 1
      %530 = vperm.xlu0 %529, %v524
      %v531 = vpop.permute.xlu0 %530
      %v533 = vsub.f32 %v515, %v531
      %v534 = vmul.f32 %v533, 1.442695
      %v535 = vpow.pop %v534
      %v536 = vld [vmem:[#allocation3] sm:$0xff]
      %v537 = vmul.f32 %v527, %v536
      %v538 = vsel %vm332, %v535, 0.0
      %539 = vadd.xlane.f32.xlu0 %v538
      %v540 = vpop.xlane.xlu0 %539
      %v541 = vadd.f32 %v537, %v540
      %vm542 = vcmask 15368
      %543 = vst.msk [vmem:[#allocation3] sm:$0xff] %vm542, %v541
      %v544 = vpack.c.bf16 %v535, %v535
      %v546 = vunpack.c.l.b16 %v463
      %v547 = vpack.c.b16 %v546, %v546
      %548 = vrot.lane.b32.xlu0 %v547, 120
      %v549 = vpop.permute.xlu0 %548
      %v551 = vsel %vm332, %v544, 0
      %v554 = vsel %vm407, %v549, 0
      %556 = vmatprep.subr.bf16.mxu0 0
      %557 = vmatpush1.bf16.msra.mxu0 0
      %558 = vmatprep.subr.bf16.mxu0 0
      %559 = vmatpush1.bf16.msra.mxu0 0
      %560 = vmatprep.subr.bf16.mxu0 0
      %561 = vmatpush1.bf16.msra.mxu0 0
      %562 = vmatprep.subr.bf16.mxu0 0
      %563 = vmatpush1.bf16.msra.mxu0 0
      %564 = vmatprep.subr.bf16.mxu0 0
      %565 = vmatpush1.bf16.msra.mxu0 0
      %566 = vmatprep.subr.bf16.mxu0 0
      %567 = vmatpush1.bf16.msra.mxu0 0
      %568 = vmatprep.subr.bf16.mxu0 0
      %569 = vmatpush1.bf16.msra.mxu0 0
      %570 = vmatprep.subr.bf16.mxu0 0
      %571 = vmatpush1.bf16.msra.mxu0 %v554
      %572 = vmatprep.subr.bf16.mxu0 0
      %573 = vmatpush2.bf16.msra.mxu0 0
      %574 = vmatprep.subr.bf16.mxu0 0
      %575 = vmatpush2.bf16.msra.mxu0 0
      %576 = vmatprep.subr.bf16.mxu0 0
      %577 = vmatpush2.bf16.msra.mxu0 0
      %578 = vmatprep.subr.bf16.mxu0 0
      %579 = vmatpush2.bf16.msra.mxu0 0
      %580 = vmatprep.subr.bf16.mxu0 0
      %581 = vmatpush2.bf16.msra.mxu0 0
      %582 = vmatprep.subr.bf16.mxu0 0
      %583 = vmatpush2.bf16.msra.mxu0 0
      %584 = vmatprep.subr.bf16.mxu0 0
      %585 = vmatpush2.bf16.msra.mxu0 0
      %586 = vmatprep.subr.bf16.mxu0 0
      %587 = vmatpush2.bf16.msra.mxu0 0
      %588 = vmatprep.mubr.bf16.mxu0 0
      %589 = vmatmul.mubr.bf16.gmra.mxu0 %v551
      %v590 = vpop.f32.mrf.mxu0
      %v591 = vadd.f32 0.0, %v590
      %v592 = vpop.f32.mrf.mxu0
      %v593 = vpop.f32.mrf.mxu0
      %v594 = vpop.f32.mrf.mxu0
      %595 = vdwg.mxu0
      %v596 = vld [vmem:[#allocation4] sm:$0xff]
      %598 = vset.pattern.permute.xlu0 1
      %599 = vperm.xlu0 %598, %v527
      %v600 = vpop.permute.xlu0 %599
      %v602 = vmul.f32 %v600, %v596
      %604 = vrot.lane.b32.xlu0 %v591, 8
      %v605 = vpop.permute.xlu0 %604
      %v607 = vadd.f32 %v602, %v605
      %vm608 = vcmask 130112
      %609 = vst.msk [vmem:[#allocation4] sm:$0xff] %vm608, %v607
      %610 = vst.msk [vmem:[#allocation2] sm:$0xff] %vm542, %v524
      %v611 = vld [vmem:[%s284] sm:$0xf]
      %v612 = vld [vmem:[%s291] sm:$0xf]
      %v613 = vld [vmem:[%s298] sm:$0xf]
      %v615 = vunpack.c.l.b16 %v611
      %v616 = vpack.c.b16 %v615, %v615
      %617 = vrot.lane.b32.xlu0 %v616, 112
      %v618 = vpop.permute.xlu0 %617
      %v620 = vunpack.c.l.b16 %v612
      %v621 = vpack.c.b16 %v620, %v620
      %622 = vrot.lane.b32.xlu0 %v621, 112
      %v623 = vpop.permute.xlu0 %622
      %v625 = vsel %vm332, %v618, 0
      %v628 = vsel %vm332, %v623, 0
      %630 = vmatprep.subr.bf16.mxu0 0
      %631 = vmatpush1.bf16.xpose.msra.mxu0 0
      %632 = vmatprep.subr.bf16.mxu0 0
      %633 = vmatpush1.bf16.xpose.msra.mxu0 0
      %634 = vmatprep.subr.bf16.mxu0 0
      %635 = vmatpush1.bf16.xpose.msra.mxu0 0
      %636 = vmatprep.subr.bf16.mxu0 0
      %637 = vmatpush1.bf16.xpose.msra.mxu0 0
      %638 = vmatprep.subr.bf16.mxu0 0
      %639 = vmatpush1.bf16.xpose.msra.mxu0 0
      %640 = vmatprep.subr.bf16.mxu0 0
      %641 = vmatpush1.bf16.xpose.msra.mxu0 0
      %642 = vmatprep.subr.bf16.mxu0 0
      %643 = vmatpush1.bf16.xpose.msra.mxu0 0
      %644 = vmatprep.subr.bf16.mxu0 0
      %645 = vmatpush1.bf16.xpose.msra.mxu0 %v628
      %646 = vmatprep.subr.bf16.mxu0 0
      %647 = vmatpush2.bf16.xpose.msra.mxu0 0
      %648 = vmatprep.subr.bf16.mxu0 0
      %649 = vmatpush2.bf16.xpose.msra.mxu0 0
      %650 = vmatprep.subr.bf16.mxu0 0
      %651 = vmatpush2.bf16.xpose.msra.mxu0 0
      %652 = vmatprep.subr.bf16.mxu0 0
      %653 = vmatpush2.bf16.xpose.msra.mxu0 0
      %654 = vmatprep.subr.bf16.mxu0 0
      %655 = vmatpush2.bf16.xpose.msra.mxu0 0
      %656 = vmatprep.subr.bf16.mxu0 0
      %657 = vmatpush2.bf16.xpose.msra.mxu0 0
      %658 = vmatprep.subr.bf16.mxu0 0
      %659 = vmatpush2.bf16.xpose.msra.mxu0 0
      %660 = vmatprep.subr.bf16.mxu0 0
      %661 = vmatpush2.bf16.xpose.msra.mxu0 0
      %662 = vmatprep.mubr.bf16.mxu0 0
      %663 = vmatmul.mubr.bf16.gmra.mxu0 %v625
      %v664 = vpop.f32.mrf.mxu0
      %v665 = vadd.f32 %v330, %v664
      %v666 = vpop.f32.mrf.mxu0
      %v667 = vpop.f32.mrf.mxu0
      %v668 = vpop.f32.mrf.mxu0
      %669 = vdwg.mxu0
      %v670 = vld [vmem:[#allocation2] sm:$0xff]
      %v671 = vsel %vm332, %v665, -inf
      %672 = vmax.xlane.f32.xlu0 %v671
      %v673 = vpop.xlane.xlu0 %672
      %v674 = vmax.f32 %v670, %v673
      %v675 = vsub.f32 %v670, %v674
      %v676 = vmul.f32 %v675, 1.442695
      %v677 = vpow.pop %v676
      %679 = vset.pattern.permute.xlu0 2
      %680 = vperm.xlu0 %679, %v674
      %v681 = vpop.permute.xlu0 %680
      %v683 = vsub.f32 %v665, %v681
      %v684 = vmul.f32 %v683, 1.442695
      %v685 = vpow.pop %v684
      %v686 = vld [vmem:[#allocation3] sm:$0xff]
      %v687 = vmul.f32 %v677, %v686
      %v688 = vsel %vm332, %v685, 0.0
      %689 = vadd.xlane.f32.xlu0 %v688
      %v690 = vpop.xlane.xlu0 %689
      %v691 = vadd.f32 %v687, %v690
      %vm692 = vcmask 23568
      %693 = vst.msk [vmem:[#allocation3] sm:$0xff] %vm692, %v691
      %v694 = vpack.c.bf16 %v685, %v685
      %v696 = vunpack.c.l.b16 %v613
      %v697 = vpack.c.b16 %v696, %v696
      %698 = vrot.lane.b32.xlu0 %v697, 112
      %v699 = vpop.permute.xlu0 %698
      %v701 = vsel %vm332, %v694, 0
      %v704 = vsel %vm407, %v699, 0
      %706 = vmatprep.subr.bf16.mxu0 0
      %707 = vmatpush1.bf16.msra.mxu0 0
      %708 = vmatprep.subr.bf16.mxu0 0
      %709 = vmatpush1.bf16.msra.mxu0 0
      %710 = vmatprep.subr.bf16.mxu0 0
      %711 = vmatpush1.bf16.msra.mxu0 0
      %712 = vmatprep.subr.bf16.mxu0 0
      %713 = vmatpush1.bf16.msra.mxu0 0
      %714 = vmatprep.subr.bf16.mxu0 0
      %715 = vmatpush1.bf16.msra.mxu0 0
      %716 = vmatprep.subr.bf16.mxu0 0
      %717 = vmatpush1.bf16.msra.mxu0 0
      %718 = vmatprep.subr.bf16.mxu0 0
      %719 = vmatpush1.bf16.msra.mxu0 0
      %720 = vmatprep.subr.bf16.mxu0 0
      %721 = vmatpush1.bf16.msra.mxu0 %v704
      %722 = vmatprep.subr.bf16.mxu0 0
      %723 = vmatpush2.bf16.msra.mxu0 0
      %724 = vmatprep.subr.bf16.mxu0 0
      %725 = vmatpush2.bf16.msra.mxu0 0
      %726 = vmatprep.subr.bf16.mxu0 0
      %727 = vmatpush2.bf16.msra.mxu0 0
      %728 = vmatprep.subr.bf16.mxu0 0
      %729 = vmatpush2.bf16.msra.mxu0 0
      %730 = vmatprep.subr.bf16.mxu0 0
      %731 = vmatpush2.bf16.msra.mxu0 0
      %732 = vmatprep.subr.bf16.mxu0 0
      %733 = vmatpush2.bf16.msra.mxu0 0
      %734 = vmatprep.subr.bf16.mxu0 0
      %735 = vmatpush2.bf16.msra.mxu0 0
      %736 = vmatprep.subr.bf16.mxu0 0
      %737 = vmatpush2.bf16.msra.mxu0 0
      %738 = vmatprep.mubr.bf16.mxu0 0
      %739 = vmatmul.mubr.bf16.gmra.mxu0 %v701
      %v740 = vpop.f32.mrf.mxu0
      %v741 = vadd.f32 0.0, %v740
      %v742 = vpop.f32.mrf.mxu0
      %v743 = vpop.f32.mrf.mxu0
      %v744 = vpop.f32.mrf.mxu0
      %745 = vdwg.mxu0
      %v746 = vld [vmem:[#allocation4] sm:$0xff]
      %748 = vset.pattern.permute.xlu0 2
      %749 = vperm.xlu0 %748, %v677
      %v750 = vpop.permute.xlu0 %749
      %v752 = vmul.f32 %v750, %v746
      %754 = vrot.lane.b32.xlu0 %v741, 16
      %v755 = vpop.permute.xlu0 %754
      %v757 = vadd.f32 %v752, %v755
      %vm758 = vcmask 195712
      %759 = vst.msk [vmem:[#allocation4] sm:$0xff] %vm758, %v757
      %760 = vst.msk [vmem:[#allocation2] sm:$0xff] %vm692, %v674
      %v761 = vld [vmem:[%s284] sm:$0xf]
      %v762 = vld [vmem:[%s291] sm:$0xf]
      %v763 = vld [vmem:[%s298] sm:$0xf]
      %v765 = vunpack.c.l.b16 %v761
      %v766 = vpack.c.b16 %v765, %v765
      %767 = vrot.lane.b32.xlu0 %v766, 104
      %v768 = vpop.permute.xlu0 %767
      %v770 = vunpack.c.l.b16 %v762
      %v771 = vpack.c.b16 %v770, %v770
      %772 = vrot.lane.b32.xlu0 %v771, 104
      %v773 = vpop.permute.xlu0 %772
      %v775 = vsel %vm332, %v768, 0
      %v778 = vsel %vm332, %v773, 0
      %780 = vmatprep.subr.bf16.mxu0 0
      %781 = vmatpush1.bf16.xpose.msra.mxu0 0
      %782 = vmatprep.subr.bf16.mxu0 0
      %783 = vmatpush1.bf16.xpose.msra.mxu0 0
      %784 = vmatprep.subr.bf16.mxu0 0
      %785 = vmatpush1.bf16.xpose.msra.mxu0 0
      %786 = vmatprep.subr.bf16.mxu0 0
      %787 = vmatpush1.bf16.xpose.msra.mxu0 0
      %788 = vmatprep.subr.bf16.mxu0 0
      %789 = vmatpush1.bf16.xpose.msra.mxu0 0
      %790 = vmatprep.subr.bf16.mxu0 0
      %791 = vmatpush1.bf16.xpose.msra.mxu0 0
      %792 = vmatprep.subr.bf16.mxu0 0
      %793 = vmatpush1.bf16.xpose.msra.mxu0 0
      %794 = vmatprep.subr.bf16.mxu0 0
      %795 = vmatpush1.bf16.xpose.msra.mxu0 %v778
      %796 = vmatprep.subr.bf16.mxu0 0
      %797 = vmatpush2.bf16.xpose.msra.mxu0 0
      %798 = vmatprep.subr.bf16.mxu0 0
      %799 = vmatpush2.bf16.xpose.msra.mxu0 0
      %800 = vmatprep.subr.bf16.mxu0 0
      %801 = vmatpush2.bf16.xpose.msra.mxu0 0
      %802 = vmatprep.subr.bf16.mxu0 0
      %803 = vmatpush2.bf16.xpose.msra.mxu0 0
      %804 = vmatprep.subr.bf16.mxu0 0
      %805 = vmatpush2.bf16.xpose.msra.mxu0 0
      %806 = vmatprep.subr.bf16.mxu0 0
      %807 = vmatpush2.bf16.xpose.msra.mxu0 0
      %808 = vmatprep.subr.bf16.mxu0 0
      %809 = vmatpush2.bf16.xpose.msra.mxu0 0
      %810 = vmatprep.subr.bf16.mxu0 0
      %811 = vmatpush2.bf16.xpose.msra.mxu0 0
      %812 = vmatprep.mubr.bf16.mxu0 0
      %813 = vmatmul.mubr.bf16.gmra.mxu0 %v775
      %v814 = vpop.f32.mrf.mxu0
      %v815 = vadd.f32 %v330, %v814
      %v816 = vpop.f32.mrf.mxu0
      %v817 = vpop.f32.mrf.mxu0
      %v818 = vpop.f32.mrf.mxu0
      %819 = vdwg.mxu0
      %v820 = vld [vmem:[#allocation2] sm:$0xff]
      %v821 = vsel %vm332, %v815, -inf
      %822 = vmax.xlane.f32.xlu0 %v821
      %v823 = vpop.xlane.xlu0 %822
      %v824 = vmax.f32 %v820, %v823
      %v825 = vsub.f32 %v820, %v824
      %v826 = vmul.f32 %v825, 1.442695
      %v827 = vpow.pop %v826
      %829 = vset.pattern.permute.xlu0 3
      %830 = vperm.xlu0 %829, %v824
      %v831 = vpop.permute.xlu0 %830
      %v833 = vsub.f32 %v815, %v831
      %v834 = vmul.f32 %v833, 1.442695
      %v835 = vpow.pop %v834
      %v836 = vld [vmem:[#allocation3] sm:$0xff]
      %v837 = vmul.f32 %v827, %v836
      %v838 = vsel %vm332, %v835, 0.0
      %839 = vadd.xlane.f32.xlu0 %v838
      %v840 = vpop.xlane.xlu0 %839
      %v841 = vadd.f32 %v837, %v840
      %vm842 = vcmask 31768
      %843 = vst.msk [vmem:[#allocation3] sm:$0xff] %vm842, %v841
      %v844 = vpack.c.bf16 %v835, %v835
      %v846 = vunpack.c.l.b16 %v763
      %v847 = vpack.c.b16 %v846, %v846
      %848 = vrot.lane.b32.xlu0 %v847, 104
      %v849 = vpop.permute.xlu0 %848
      %v851 = vsel %vm332, %v844, 0
      %v854 = vsel %vm407, %v849, 0
      %856 = vmatprep.subr.bf16.mxu0 0
      %857 = vmatpush1.bf16.msra.mxu0 0
      %858 = vmatprep.subr.bf16.mxu0 0
      %859 = vmatpush1.bf16.msra.mxu0 0
      %860 = vmatprep.subr.bf16.mxu0 0
      %861 = vmatpush1.bf16.msra.mxu0 0
      %862 = vmatprep.subr.bf16.mxu0 0
      %863 = vmatpush1.bf16.msra.mxu0 0
      %864 = vmatprep.subr.bf16.mxu0 0
      %865 = vmatpush1.bf16.msra.mxu0 0
      %866 = vmatprep.subr.bf16.mxu0 0
      %867 = vmatpush1.bf16.msra.mxu0 0
      %868 = vmatprep.subr.bf16.mxu0 0
      %869 = vmatpush1.bf16.msra.mxu0 0
      %870 = vmatprep.subr.bf16.mxu0 0
      %871 = vmatpush1.bf16.msra.mxu0 %v854
      %872 = vmatprep.subr.bf16.mxu0 0
      %873 = vmatpush2.bf16.msra.mxu0 0
      %874 = vmatprep.subr.bf16.mxu0 0
      %875 = vmatpush2.bf16.msra.mxu0 0
      %876 = vmatprep.subr.bf16.mxu0 0
      %877 = vmatpush2.bf16.msra.mxu0 0
      %878 = vmatprep.subr.bf16.mxu0 0
      %879 = vmatpush2.bf16.msra.mxu0 0
      %880 = vmatprep.subr.bf16.mxu0 0
      %881 = vmatpush2.bf16.msra.mxu0 0
      %882 = vmatprep.subr.bf16.mxu0 0
      %883 = vmatpush2.bf16.msra.mxu0 0
      %884 = vmatprep.subr.bf16.mxu0 0
      %885 = vmatpush2.bf16.msra.mxu0 0
      %886 = vmatprep.subr.bf16.mxu0 0
      %887 = vmatpush2.bf16.msra.mxu0 0
      %888 = vmatprep.mubr.bf16.mxu0 0
      %889 = vmatmul.mubr.bf16.gmra.mxu0 %v851
      %v890 = vpop.f32.mrf.mxu0
      %v891 = vadd.f32 0.0, %v890
      %v892 = vpop.f32.mrf.mxu0
      %v893 = vpop.f32.mrf.mxu0
      %v894 = vpop.f32.mrf.mxu0
      %895 = vdwg.mxu0
      %v896 = vld [vmem:[#allocation4] sm:$0xff]
      %898 = vset.pattern.permute.xlu0 3
      %899 = vperm.xlu0 %898, %v827
      %v900 = vpop.permute.xlu0 %899
      %v902 = vmul.f32 %v900, %v896
      %904 = vrot.lane.b32.xlu0 %v891, 24
      %v905 = vpop.permute.xlu0 %904
      %v907 = vadd.f32 %v902, %v905
      %vm908 = vcmask 261312
      %909 = vst.msk [vmem:[#allocation4] sm:$0xff] %vm908, %v907
      %910 = vst.msk [vmem:[#allocation2] sm:$0xff] %vm842, %v824
      // Predicated region
      $region41: #{bert_encoder_forward.11} parent=35 // pred_check
        %p911 = pneg %p313
      $region42: #{bert_encoder_forward.11} parent=35 // pred_check_branch
        %913 = sbr.rel (%p911) target = $region44
      $region43: #{bert_encoder_forward.11} parent=35 // pred_region
        %v914 = vld [vmem:[#allocation4] sm:$0xff]
        %v915 = vld [vmem:[#allocation3] sm:$0xff]
        %917 = vset.pattern.permute.xlu0 0
        %918 = vperm.xlu0 %917, %v915
        %v919 = vpop.permute.xlu0 %918
        %v921 = vrcp.pop %v919
        %v922 = vmul.f32 %v914, %v921
        %923 = vst.msk [vmem:[#allocation4] sm:$0xff] %vm332, %v922
        %v924 = vld [vmem:[#allocation4] sm:$0xff]
        %v925 = vld [vmem:[#allocation3] sm:$0xff]
        %927 = vset.pattern.permute.xlu0 1
        %928 = vperm.xlu0 %927, %v925
        %v929 = vpop.permute.xlu0 %928
        %v931 = vrcp.pop %v929
        %v932 = vmul.f32 %v924, %v931
        %933 = vst.msk [vmem:[#allocation4] sm:$0xff] %vm608, %v932
        %v934 = vld [vmem:[#allocation4] sm:$0xff]
        %v935 = vld [vmem:[#allocation3] sm:$0xff]
        %937 = vset.pattern.permute.xlu0 2
        %938 = vperm.xlu0 %937, %v935
        %v939 = vpop.permute.xlu0 %938
        %v941 = vrcp.pop %v939
        %v942 = vmul.f32 %v934, %v941
        %943 = vst.msk [vmem:[#allocation4] sm:$0xff] %vm758, %v942
        %v944 = vld [vmem:[#allocation4] sm:$0xff]
        %v945 = vld [vmem:[#allocation3] sm:$0xff]
        %947 = vset.pattern.permute.xlu0 3
        %948 = vperm.xlu0 %947, %v945
        %v949 = vpop.permute.xlu0 %948
        %v951 = vrcp.pop %v949
        %v952 = vmul.f32 %v944, %v951
        %953 = vst.msk [vmem:[#allocation4] sm:$0xff] %vm908, %v952
        %v954 = vld [vmem:[#allocation4] sm:$0xff]
        %v955 = vpack.c.bf16 %v954, %v954
        %vm956 = vcmask 257024
        %957 = vst.msk [vmem:[%s311] sm:$0xf] %vm956, %v955
      $region44: #{bert_encoder_forward.11} parent=35 // pred_fallthru
        _
      %p958 = scmp.lt.s32.totalorder %s20, 1
      %s959 = scalar_select %p958, %s20, 1
      %p960 = scmp.lt.s32.totalorder %s21, 0
      %s961 = scalar_select %p960, %s21, 0
      %s962 = sadd.s32 %s961, %s959
      %s963 = smul.addr %s962, 4
      %s964 = scalar_lea.vmem %s4, %s963
      // Predicated region
      $region45: #{bert_encoder_forward.11} parent=35 // pred_check
        %p965 = pneg %p166
      $region46: #{bert_encoder_forward.11} parent=35 // pred_check_branch
        %967 = sbr.rel (%p965) target = $region48
      $region47: #{bert_encoder_forward.11} parent=35 // pred_region
        _
      $region48: #{bert_encoder_forward.11} parent=35 // pred_fallthru
        _
    $region36: #{bert_encoder_forward.11} parent=5 // pred_fallthru
      _
    %p968 = scmp.le.s32.totalorder 2, %s10
    // Predicated region
    $region49: #{bert_encoder_forward.11} parent=5 // pred_check
      %p969 = pneg %p968
    $region50: #{bert_encoder_forward.11} parent=5 // pred_check_branch
      %971 = sbr.rel (%p969) target = $region52
    $region51: #{bert_encoder_forward.11} parent=5 // pred_region
      %s972 = ssub.s32 %s10, 2
      // Predicated region
      $region53: #{bert_encoder_forward.11} parent=51 // pred_check
        %p973 = pneg %p172
      $region54: #{bert_encoder_forward.11} parent=51 // pred_check_branch
        %975 = sbr.rel (%p973) target = $region56
      $region55: #{bert_encoder_forward.11} parent=51 // pred_region
        %p976 = scmp.lt.s32.totalorder %s23, 1
        %s977 = scalar_select %p976, %s23, 1
        %p978 = scmp.lt.s32.totalorder %s24, 0
        %s979 = scalar_select %p978, %s24, 0
        %s980 = sadd.s32 %s979, %s977
        %s981 = smul.addr %s980, 4
        %s982 = scalar_lea.vmem %s4, %s981
      $region56: #{bert_encoder_forward.11} parent=51 // pred_fallthru
        _
    $region52: #{bert_encoder_forward.11} parent=5 // pred_fallthru
      _
  $region6: #{bert_encoder_forward.11} parent=0 // loop_footer
    %s14 = sadd.s32 1, %s10
  $region7: #{bert_encoder_forward.11} parent=0 // loop_footer_branch
    %9 = sbr.rel target = $region3
  $region8: #{bert_encoder_forward.11} parent=0 // loop_exit
    _

// kernel: bert_encoder_forward.13
$region0: #{bert_encoder_forward.13}
  #allocation0 [shape = 'u32[]', space=smem, size = 0x4, offset = 0x4, fixed_abs, tag = 'smem constant byte address 0x4 - core index']
  #allocation1 [shape = 'u32[144,128]{1,0:T(1,128)}', space=vmem, size = 0x12000, scoped, tag = 'internal scratch']
  #allocation2 [shape = 'f32[16,32]{1,0:T(8,128)}', space=vmem, size = 0x2000, scoped, tag = 'scratch operand']
  %s0 = inlined_call_operand.vmem [shape: bf16[16,32], index: 0, kind: input, shape index: {}]
  %s1 = inlined_call_operand.vmem [shape: bf16[32,64], index: 1, kind: input, shape index: {}]
  %s2 = inlined_call_operand.vmem [shape: f32[1,64], index: 2, kind: input, shape index: {}]
  %s3 = inlined_call_operand.vmem [shape: bf16[64,32], index: 3, kind: input, shape index: {}]
  %s4 = inlined_call_operand.vmem [shape: f32[1,32], index: 4, kind: input, shape index: {}]
  %s5 = inlined_call_operand.vmem [shape: f32[1,32], index: 5, kind: input, shape index: {}]
  %s6 = inlined_call_operand.vmem [shape: f32[1,32], index: 6, kind: input, shape index: {}]
  %s7 = inlined_call_operand.vmem [shape: bf16[16,32], index: 7, kind: output, shape index: {}]
  %s8 = sld [smem:[#allocation0]]
  $region46: #{bert_encoder_forward.13} parent=0
    _
  %s10 = ssub.s32 1, %s8
  %s11 = scalar_select 0, %s10, %s8
  // Predicated region
  $region2: #{bert_encoder_forward.13} parent=0 // pred_check
    _
  $region3: #{bert_encoder_forward.13} parent=0 // pred_check_branch
    %13 = sbr.rel (0) target = $region5
  $region4: #{bert_encoder_forward.13} parent=0 // pred_region
    _
  $region5: #{bert_encoder_forward.13} parent=0 // pred_fallthru
    _
  // Predicated region
  $region6: #{bert_encoder_forward.13} parent=0 // pred_check
    _
  $region7: #{bert_encoder_forward.13} parent=0 // pred_check_branch
    %15 = sbr.rel (0) target = $region9
  $region8: #{bert_encoder_forward.13} parent=0 // pred_region
    _
  $region9: #{bert_encoder_forward.13} parent=0 // pred_fallthru
    _
  // Predicated region
  $region10: #{bert_encoder_forward.13} parent=0 // pred_check
    _
  $region11: #{bert_encoder_forward.13} parent=0 // pred_check_branch
    %17 = sbr.rel (0) target = $region13
  $region12: #{bert_encoder_forward.13} parent=0 // pred_region
    _
  $region13: #{bert_encoder_forward.13} parent=0 // pred_fallthru
    _
  // Predicated region
  $region14: #{bert_encoder_forward.13} parent=0 // pred_check
    _
  $region15: #{bert_encoder_forward.13} parent=0 // pred_check_branch
    %19 = sbr.rel (0) target = $region17
  $region16: #{bert_encoder_forward.13} parent=0 // pred_region
    _
  $region17: #{bert_encoder_forward.13} parent=0 // pred_fallthru
    _
  // Predicated region
  $region18: #{bert_encoder_forward.13} parent=0 // pred_check
    _
  $region19: #{bert_encoder_forward.13} parent=0 // pred_check_branch
    %21 = sbr.rel (0) target = $region21
  $region20: #{bert_encoder_forward.13} parent=0 // pred_region
    _
  $region21: #{bert_encoder_forward.13} parent=0 // pred_fallthru
    _
  // Predicated region
  $region22: #{bert_encoder_forward.13} parent=0 // pred_check
    _
  $region23: #{bert_encoder_forward.13} parent=0 // pred_check_branch
    %23 = sbr.rel (0) target = $region25
  $region24: #{bert_encoder_forward.13} parent=0 // pred_region
    _
  $region25: #{bert_encoder_forward.13} parent=0 // pred_fallthru
    _
  // Predicated region
  $region26: #{bert_encoder_forward.13} parent=0 // pred_check
    _
  $region27: #{bert_encoder_forward.13} parent=0 // pred_check_branch
    %25 = sbr.rel (0) target = $region29
  $region28: #{bert_encoder_forward.13} parent=0 // pred_region
    _
  $region29: #{bert_encoder_forward.13} parent=0 // pred_fallthru
    _
  %p27 = scmp.eq.s32.totalorder 0, 0
  // Predicated region
  $region30: #{bert_encoder_forward.13} parent=0 // pred_check
    %p28 = pneg %p27
  $region31: #{bert_encoder_forward.13} parent=0 // pred_check_branch
    %30 = sbr.rel (%p28) target = $region33
  $region32: #{bert_encoder_forward.13} parent=0 // pred_region
    %vm31 = vcmask 261120
    %32 = vst.msk [vmem:[#allocation2] sm:$0xff] %vm31, 0.0
    %33 = vst.msk [vmem:[#allocation2 + $0x8] sm:$0xff] %vm31, 0.0
  $region33: #{bert_encoder_forward.13} parent=0 // pred_fallthru
    _
  %v34 = vld [vmem:[%s0] sm:$0xf]
  %v35 = vld [vmem:[%s0 + $0x4] sm:$0xf]
  %v36 = vld [vmem:[%s1] sm:$0xf]
  %v37 = vld [vmem:[%s1 + $0x4] sm:$0xf]
  %v38 = vld [vmem:[%s1 + $0x8] sm:$0xf]
  %v39 = vld [vmem:[%s1 + $0xc] sm:$0xf]
  %v40 = vld [vmem:[%s2] sm:$0x1]
  %v42 = vlaneseq
  %v43 = vshrl.u32 %v42, 7
  %v44 = vsub.s32 0, %v43
  %v45 = vrot.slane %v40, %v44
  %v49 = vunpack.c.l.b16 %v34
  %v50 = vunpack.c.l.b16 %v35
  %v51 = vpack.c.b16 %v50, %v49
  %v56 = vunpack.c.l.b16 %v36
  %v57 = vunpack.c.l.b16 %v37
  %v58 = vunpack.c.l.b16 %v38
  %v59 = vunpack.c.l.b16 %v39
  %v60 = vpack.c.b16 %v57, %v56
  %v61 = vpack.c.b16 %v59, %v58
  %vm64 = vcmask 261120
  %v66 = vsel %vm64, %v51, 0
  %68 = vmatprep.subr.bf16.mxu0 0
  %69 = vmatpush1.bf16.msra.mxu0 0
  %70 = vmatprep.subr.bf16.mxu0 0
  %71 = vmatpush1.bf16.msra.mxu0 0
  %72 = vmatprep.subr.bf16.mxu0 0
  %73 = vmatpush1.bf16.msra.mxu0 0
  %74 = vmatprep.subr.bf16.mxu0 0
  %75 = vmatpush1.bf16.msra.mxu0 0
  %76 = vmatprep.subr.bf16.mxu0 0
  %77 = vmatpush1.bf16.msra.mxu0 0
  %78 = vmatprep.subr.bf16.mxu0 0
  %79 = vmatpush1.bf16.msra.mxu0 0
  %80 = vmatprep.subr.bf16.mxu0 0
  %81 = vmatpush1.bf16.msra.mxu0 %v61
  %82 = vmatprep.subr.bf16.mxu0 0
  %83 = vmatpush1.bf16.msra.mxu0 %v60
  %84 = vmatprep.subr.bf16.mxu0 0
  %85 = vmatpush2.bf16.msra.mxu0 0
  %86 = vmatprep.subr.bf16.mxu0 0
  %87 = vmatpush2.bf16.msra.mxu0 0
  %88 = vmatprep.subr.bf16.mxu0 0
  %89 = vmatpush2.bf16.msra.mxu0 0
  %90 = vmatprep.subr.bf16.mxu0 0
  %91 = vmatpush2.bf16.msra.mxu0 0
  %92 = vmatprep.subr.bf16.mxu0 0
  %93 = vmatpush2.bf16.msra.mxu0 0
  %94 = vmatprep.subr.bf16.mxu0 0
  %95 = vmatpush2.bf16.msra.mxu0 0
  %96 = vmatprep.subr.bf16.mxu0 0
  %97 = vmatpush2.bf16.msra.mxu0 0
  %98 = vmatprep.subr.bf16.mxu0 0
  %99 = vmatpush2.bf16.msra.mxu0 0
  %100 = vmatprep.mubr.bf16.mxu0 0
  %101 = vmatmul.mubr.bf16.gmra.mxu0 %v66
  %v102 = vpop.f32.mrf.mxu0
  %v103 = vadd.f32 %v45, %v102
  %v104 = vpop.f32.mrf.mxu0
  %v105 = vpop.f32.mrf.mxu0
  %v106 = vadd.f32 %v45, %v105
  %v107 = vpop.f32.mrf.mxu0
  %108 = vdwg.mxu0
  %v109 = vmul.f32 %v103, %v103
  %v110 = vmul.f32 %v106, %v106
  %v111 = vmul.f32 %v103, %v109
  %v112 = vmul.f32 %v106, %v110
  %v113 = vmul.f32 %v111, 0.044715
  %v114 = vmul.f32 %v112, 0.044715
  %v115 = vadd.f32 %v103, %v113
  %v116 = vadd.f32 %v106, %v114
  %v117 = vmul.f32 %v115, 0.7978846
  %v118 = vmul.f32 %v116, 0.7978846
  %v119 = vtanh.pop %v117
  %v120 = vtanh.pop %v118
  %v121 = vadd.f32 %v119, 1.0
  %v122 = vadd.f32 %v120, 1.0
  %v123 = vmul.f32 %v121, 0.5
  %v124 = vmul.f32 %v122, 0.5
  %v125 = vmul.f32 %v103, %v123
  %v126 = vmul.f32 %v106, %v124
  %v127 = vld [vmem:[#allocation2] sm:$0xff]
  %v128 = vld [vmem:[#allocation2 + $0x8] sm:$0xff]
  %v129 = vpack.c.bf16 %v126, %v125
  %v130 = vld [vmem:[%s3] sm:$0xf]
  %v131 = vld [vmem:[%s3 + $0x4] sm:$0xf]
  %v132 = vld [vmem:[%s3 + $0x8] sm:$0xf]
  %v133 = vld [vmem:[%s3 + $0xc] sm:$0xf]
  %v134 = vld [vmem:[%s3 + $0x10] sm:$0xf]
  %v135 = vld [vmem:[%s3 + $0x14] sm:$0xf]
  %v136 = vld [vmem:[%s3 + $0x18] sm:$0xf]
  %v137 = vld [vmem:[%s3 + $0x1c] sm:$0xf]
  %v146 = vunpack.c.l.b16 %v130
  %v147 = vunpack.c.l.b16 %v131
  %v148 = vunpack.c.l.b16 %v132
  %v149 = vunpack.c.l.b16 %v133
  %v150 = vunpack.c.l.b16 %v134
  %v151 = vunpack.c.l.b16 %v135
  %v152 = vunpack.c.l.b16 %v136
  %v153 = vunpack.c.l.b16 %v137
  %v154 = vpack.c.b16 %v147, %v146
  %v155 = vpack.c.b16 %v149, %v148
  %v156 = vpack.c.b16 %v151, %v150
  %v157 = vpack.c.b16 %v153, %v152
  %vm162 = vcmask 523264
  %v164 = vsel %vm162, %v129, 0
  %166 = vmatprep.subr.bf16.mxu0 0
  %167 = vmatpush1.bf16.msra.mxu0 0
  %168 = vmatprep.subr.bf16.mxu0 0
  %169 = vmatpush1.bf16.msra.mxu0 0
  %170 = vmatprep.subr.bf16.mxu0 0
  %171 = vmatpush1.bf16.msra.mxu0 0
  %172 = vmatprep.subr.bf16.mxu0 0
  %173 = vmatpush1.bf16.msra.mxu0 0
  %174 = vmatprep.subr.bf16.mxu0 0
  %175 = vmatpush1.bf16.msra.mxu0 %v157
  %176 = vmatprep.subr.bf16.mxu0 0
  %177 = vmatpush1.bf16.msra.mxu0 %v156
  %178 = vmatprep.subr.bf16.mxu0 0
  %179 = vmatpush1.bf16.msra.mxu0 %v155
  %180 = vmatprep.subr.bf16.mxu0 0
  %181 = vmatpush1.bf16.msra.mxu0 %v154
  %182 = vmatprep.subr.bf16.mxu0 0
  %183 = vmatpush2.bf16.msra.mxu0 0
  %184 = vmatprep.subr.bf16.mxu0 0
  %185 = vmatpush2.bf16.msra.mxu0 0
  %186 = vmatprep.subr.bf16.mxu0 0
  %187 = vmatpush2.bf16.msra.mxu0 0
  %188 = vmatprep.subr.bf16.mxu0 0
  %189 = vmatpush2.bf16.msra.mxu0 0
  %190 = vmatprep.subr.bf16.mxu0 0
  %191 = vmatpush2.bf16.msra.mxu0 0
  %192 = vmatprep.subr.bf16.mxu0 0
  %193 = vmatpush2.bf16.msra.mxu0 0
  %194 = vmatprep.subr.bf16.mxu0 0
  %195 = vmatpush2.bf16.msra.mxu0 0
  %196 = vmatprep.subr.bf16.mxu0 0
  %197 = vmatpush2.bf16.msra.mxu0 0
  %198 = vmatprep.mubr.bf16.mxu0 0
  %199 = vmatmul.mubr.bf16.gmra.mxu0 %v164
  %v200 = vpop.f32.mrf.mxu0
  %v201 = vadd.f32 0.0, %v200
  %v202 = vpop.f32.mrf.mxu0
  %v203 = vpop.f32.mrf.mxu0
  %v204 = vadd.f32 0.0, %v203
  %v205 = vpop.f32.mrf.mxu0
  %206 = vdwg.mxu0
  %v207 = vadd.f32 %v127, %v201
  %v208 = vadd.f32 %v128, %v204
  %209 = vst.msk [vmem:[#allocation2] sm:$0xff] %vm64, %v207
  %210 = vst.msk [vmem:[#allocation2 + $0x8] sm:$0xff] %vm64, %v208
  // Predicated region
  $region34: #{bert_encoder_forward.13} parent=0 // pred_check
    %p211 = pneg %p27
  $region35: #{bert_encoder_forward.13} parent=0 // pred_check_branch
    %213 = sbr.rel (%p211) target = $region37
  $region36: #{bert_encoder_forward.13} parent=0 // pred_region
    %v214 = vld [vmem:[#allocation2] sm:$0xff]
    %v215 = vld [vmem:[#allocation2 + $0x8] sm:$0xff]
    %v216 = vld [vmem:[%s4] sm:$0x1]
    %v218 = vlaneseq
    %v219 = vshrl.u32 %v218, 7
    %v220 = vsub.s32 0, %v219
    %v221 = vrot.slane %v216, %v220
    %v223 = vadd.f32 %v214, %v221
    %v224 = vadd.f32 %v215, %v221
    %v225 = vld [vmem:[%s0] sm:$0xf]
    %v226 = vld [vmem:[%s0 + $0x4] sm:$0xf]
    %v227 = vunpack.c.l.bf16 %v225
    %v228 = vunpack.c.l.bf16 %v226
    %v229 = vadd.f32 %v223, %v227
    %v230 = vadd.f32 %v224, %v228
    %v231 = vsel %vm64, %v229, 0.0
    %232 = vadd.xlane.f32.xlu0 %v231
    %v233 = vpop.xlane.xlu0 %232
    %v234 = vsel %vm64, %v230, 0.0
    %235 = vadd.xlane.f32.xlu0 %v234
    %v236 = vpop.xlane.xlu0 %235
    %v237 = vrcp.pop 32.0
    %v238 = vmul.f32 %v233, %v237
    %v239 = vmul.f32 %v236, %v237
    %v240 = vsub.f32 %v229, %v238
    %v241 = vsub.f32 %v230, %v239
    %v242 = vmul.f32 %v240, %v240
    %v243 = vmul.f32 %v241, %v241
    %v244 = vsel %vm64, %v242, 0.0
    %245 = vadd.xlane.f32.xlu0 %v244
    %v246 = vpop.xlane.xlu0 %245
    %v247 = vsel %vm64, %v243, 0.0
    %248 = vadd.xlane.f32.xlu0 %v247
    %v249 = vpop.xlane.xlu0 %248
    %v250 = vmul.f32 %v246, %v237
    %v251 = vmul.f32 %v249, %v237
    %v252 = vadd.f32 %v250, 1e-12
    %v253 = vadd.f32 %v251, 1e-12
    %v254 = vrsqrt.pop %v252
    %v255 = vrsqrt.pop %v253
    %v256 = vmul.f32 %v240, %v254
    %v257 = vmul.f32 %v241, %v255
    %v258 = vld [vmem:[%s5] sm:$0x1]
    %v260 = vlaneseq
    %v261 = vshrl.u32 %v260, 7
    %v262 = vsub.s32 0, %v261
    %v263 = vrot.slane %v258, %v262
    %v265 = vmul.f32 %v256, %v263
    %v266 = vmul.f32 %v257, %v263
    %v267 = vld [vmem:[%s6] sm:$0x1]
    %v269 = vlaneseq
    %v270 = vshrl.u32 %v269, 7
    %v271 = vsub.s32 0, %v270
    %v272 = vrot.slane %v267, %v271
    %v274 = vadd.f32 %v265, %v272
    %v275 = vadd.f32 %v266, %v272
    %v276 = vpack.c.bf16 %v275, %v274
    %v278 = vunpack.c.l.b16 %v276
    %v279 = vunpack.c.h.b16 %v276
    %v280 = vpack.c.b16 %v278, %v278
    %v281 = vpack.c.b16 %v279, %v279
    %vm284 = vcmask 257024
    %285 = vst.msk [vmem:[%s7] sm:$0xf] %vm284, %v280
    %286 = vst.msk [vmem:[%s7 + $0x4] sm:$0xf] %vm284, %v281
  $region37: #{bert_encoder_forward.13} parent=0 // pred_fallthru
    _
  // Predicated region
  $region38: #{bert_encoder_forward.13} parent=0 // pred_check
    _
  $region39: #{bert_encoder_forward.13} parent=0 // pred_check_branch
    %288 = sbr.rel (0) target = $region41
  $region40: #{bert_encoder_forward.13} parent=0 // pred_region
    _
  $region41: #{bert_encoder_forward.13} parent=0 // pred_fallthru
    _
  // Predicated region
  $region42: #{bert_encoder_forward.13} parent=0 // pred_check
    _
  $region43: #{bert_encoder_forward.13} parent=0 // pred_check_branch
    %290 = sbr.rel (0) target = $region45
  $region44: #{bert_encoder_forward.13} parent=0 // pred_region
    _
  $region45: #{bert_encoder_forward.13} parent=0 // pred_fallthru
    _

// kernel: bert_encoder_forward.18
$region0: #{bert_encoder_forward.18}
  #allocation0 [shape = 'u32[]', space=smem, size = 0x4, offset = 0x4, fixed_abs, tag = 'smem constant byte address 0x4 - core index']
  #allocation1 [shape = 'u32[144,128]{1,0:T(1,128)}', space=vmem, size = 0x12000, scoped, tag = 'internal scratch']
  %s0 = inlined_call_operand.vmem [shape: bf16[64,16], index: 0, kind: input, shape index: {}]
  %s1 = inlined_call_operand.vmem [shape: bf16[16,32], index: 1, kind: input, shape index: {}]
  %s2 = inlined_call_operand.vmem [shape: f32[1,32], index: 2, kind: input, shape index: {}]
  %s3 = inlined_call_operand.vmem [shape: bf16[32,32], index: 3, kind: input, shape index: {}]
  %s4 = inlined_call_operand.vmem [shape: f32[1,32], index: 4, kind: input, shape index: {}]
  %s5 = inlined_call_operand.vmem [shape: bf16[64,32], index: 5, kind: output, shape index: {}]
  %s6 = sld [smem:[#allocation0]]
  $region30: #{bert_encoder_forward.18} parent=0
    _
  %s8 = ssub.s32 1, %s6
  %s9 = scalar_select 0, %s8, %s6
  // Predicated region
  $region2: #{bert_encoder_forward.18} parent=0 // pred_check
    _
  $region3: #{bert_encoder_forward.18} parent=0 // pred_check_branch
    %11 = sbr.rel (0) target = $region5
  $region4: #{bert_encoder_forward.18} parent=0 // pred_region
    _
  $region5: #{bert_encoder_forward.18} parent=0 // pred_fallthru
    _
  // Predicated region
  $region6: #{bert_encoder_forward.18} parent=0 // pred_check
    _
  $region7: #{bert_encoder_forward.18} parent=0 // pred_check_branch
    %13 = sbr.rel (0) target = $region9
  $region8: #{bert_encoder_forward.18} parent=0 // pred_region
    _
  $region9: #{bert_encoder_forward.18} parent=0 // pred_fallthru
    _
  // Predicated region
  $region10: #{bert_encoder_forward.18} parent=0 // pred_check
    _
  $region11: #{bert_encoder_forward.18} parent=0 // pred_check_branch
    %15 = sbr.rel (0) target = $region13
  $region12: #{bert_encoder_forward.18} parent=0 // pred_region
    _
  $region13: #{bert_encoder_forward.18} parent=0 // pred_fallthru
    _
  // Predicated region
  $region14: #{bert_encoder_forward.18} parent=0 // pred_check
    _
  $region15: #{bert_encoder_forward.18} parent=0 // pred_check_branch
    %17 = sbr.rel (0) target = $region17
  $region16: #{bert_encoder_forward.18} parent=0 // pred_region
    _
  $region17: #{bert_encoder_forward.18} parent=0 // pred_fallthru
    _
  // Predicated region
  $region18: #{bert_encoder_forward.18} parent=0 // pred_check
    _
  $region19: #{bert_encoder_forward.18} parent=0 // pred_check_branch
    %19 = sbr.rel (0) target = $region21
  $region20: #{bert_encoder_forward.18} parent=0 // pred_region
    _
  $region21: #{bert_encoder_forward.18} parent=0 // pred_fallthru
    _
  %v21 = vld [vmem:[%s0] sm:$0xf]
  %v22 = vld [vmem:[%s0 + $0x4] sm:$0xf]
  %v23 = vld [vmem:[%s0 + $0x8] sm:$0xf]
  %v24 = vld [vmem:[%s0 + $0xc] sm:$0xf]
  %v25 = vld [vmem:[%s0 + $0x10] sm:$0xf]
  %v26 = vld [vmem:[%s0 + $0x14] sm:$0xf]
  %v27 = vld [vmem:[%s0 + $0x18] sm:$0xf]
  %v28 = vld [vmem:[%s0 + $0x1c] sm:$0xf]
  %v29 = vld [vmem:[%s1] sm:$0xf]
  %v30 = vld [vmem:[%s1 + $0x4] sm:$0xf]
  %v31 = vld [vmem:[%s2] sm:$0x1]
  %v33 = vlaneseq
  %v34 = vshrl.u32 %v33, 7
  %v35 = vsub.s32 0, %v34
  %v36 = vrot.slane %v31, %v35
  %v46 = vunpack.c.l.b16 %v21
  %v47 = vunpack.c.l.b16 %v22
  %v48 = vunpack.c.l.b16 %v23
  %v49 = vunpack.c.l.b16 %v24
  %v50 = vunpack.c.l.b16 %v25
  %v51 = vunpack.c.l.b16 %v26
  %v52 = vunpack.c.l.b16 %v27
  %v53 = vunpack.c.l.b16 %v28
  %v54 = vpack.c.b16 %v47, %v46
  %v55 = vpack.c.b16 %v49, %v48
  %v56 = vpack.c.b16 %v51, %v50
  %v57 = vpack.c.b16 %v53, %v52
  %v60 = vunpack.c.l.b16 %v29
  %v61 = vunpack.c.l.b16 %v30
  %v62 = vpack.c.b16 %v61, %v60
  %vm64 = vcmask 130048
  %v66 = vsel %vm64, %v54, 0
  %v69 = vsel %vm64, %v55, 0
  %v72 = vsel %vm64, %v56, 0
  %v75 = vsel %vm64, %v57, 0
  %77 = vmatprep.subr.bf16.mxu0 0
  %78 = vmatpush1.bf16.msra.mxu0 0
  %79 = vmatprep.subr.bf16.mxu0 0
  %80 = vmatpush1.bf16.msra.mxu0 0
  %81 = vmatprep.subr.bf16.mxu0 0
  %82 = vmatpush1.bf16.msra.mxu0 0
  %83 = vmatprep.subr.bf16.mxu0 0
  %84 = vmatpush1.bf16.msra.mxu0 0
  %85 = vmatprep.subr.bf16.mxu0 0
  %86 = vmatpush1.bf16.msra.mxu0 0
  %87 = vmatprep.subr.bf16.mxu0 0
  %88 = vmatpush1.bf16.msra.mxu0 0
  %89 = vmatprep.subr.bf16.mxu0 0
  %90 = vmatpush1.bf16.msra.mxu0 0
  %91 = vmatprep.subr.bf16.mxu0 0
  %92 = vmatpush1.bf16.msra.mxu0 %v62
  %93 = vmatprep.subr.bf16.mxu0 0
  %94 = vmatpush2.bf16.msra.mxu0 0
  %95 = vmatprep.subr.bf16.mxu0 0
  %96 = vmatpush2.bf16.msra.mxu0 0
  %97 = vmatprep.subr.bf16.mxu0 0
  %98 = vmatpush2.bf16.msra.mxu0 0
  %99 = vmatprep.subr.bf16.mxu0 0
  %100 = vmatpush2.bf16.msra.mxu0 0
  %101 = vmatprep.subr.bf16.mxu0 0
  %102 = vmatpush2.bf16.msra.mxu0 0
  %103 = vmatprep.subr.bf16.mxu0 0
  %104 = vmatpush2.bf16.msra.mxu0 0
  %105 = vmatprep.subr.bf16.mxu0 0
  %106 = vmatpush2.bf16.msra.mxu0 0
  %107 = vmatprep.subr.bf16.mxu0 0
  %108 = vmatpush2.bf16.msra.mxu0 0
  %109 = vmatprep.mubr.bf16.mxu0 0
  %110 = vmatmul.mubr.bf16.gmra.mxu0 %v66
  %v111 = vpop.f32.mrf.mxu0
  %v112 = vadd.f32 %v36, %v111
  %v113 = vpop.f32.mrf.mxu0
  %v114 = vpop.f32.mrf.mxu0
  %v115 = vadd.f32 %v36, %v114
  %v116 = vpop.f32.mrf.mxu0
  %117 = vmatprep.mubr.bf16.mxu0 0
  %118 = vmatmul.mubr.bf16.gmra.mxu0 %v69
  %v119 = vpop.f32.mrf.mxu0
  %v120 = vadd.f32 %v36, %v119
  %v121 = vpop.f32.mrf.mxu0
  %v122 = vpop.f32.mrf.mxu0
  %v123 = vadd.f32 %v36, %v122
  %v124 = vpop.f32.mrf.mxu0
  %125 = vmatprep.mubr.bf16.mxu0 0
  %126 = vmatmul.mubr.bf16.gmra.mxu0 %v72
  %v127 = vpop.f32.mrf.mxu0
  %v128 = vadd.f32 %v36, %v127
  %v129 = vpop.f32.mrf.mxu0
  %v130 = vpop.f32.mrf.mxu0
  %v131 = vadd.f32 %v36, %v130
  %v132 = vpop.f32.mrf.mxu0
  %133 = vmatprep.mubr.bf16.mxu0 0
  %134 = vmatmul.mubr.bf16.gmra.mxu0 %v75
  %v135 = vpop.f32.mrf.mxu0
  %v136 = vadd.f32 %v36, %v135
  %v137 = vpop.f32.mrf.mxu0
  %v138 = vpop.f32.mrf.mxu0
  %v139 = vadd.f32 %v36, %v138
  %v140 = vpop.f32.mrf.mxu0
  %141 = vdwg.mxu0
  %v142 = vtanh.pop %v112
  %v143 = vtanh.pop %v115
  %v144 = vtanh.pop %v120
  %v145 = vtanh.pop %v123
  %v146 = vtanh.pop %v128
  %v147 = vtanh.pop %v131
  %v148 = vtanh.pop %v136
  %v149 = vtanh.pop %v139
  %v150 = vpack.c.bf16 %v143, %v142
  %v151 = vpack.c.bf16 %v145, %v144
  %v152 = vpack.c.bf16 %v147, %v146
  %v153 = vpack.c.bf16 %v149, %v148
  %v154 = vld [vmem:[%s3] sm:$0xf]
  %v155 = vld [vmem:[%s3 + $0x4] sm:$0xf]
  %v156 = vld [vmem:[%s3 + $0x8] sm:$0xf]
  %v157 = vld [vmem:[%s3 + $0xc] sm:$0xf]
  %v158 = vld [vmem:[%s4] sm:$0x1]
  %v160 = vlaneseq
  %v161 = vshrl.u32 %v160, 7
  %v162 = vsub.s32 0, %v161
  %v163 = vrot.slane %v158, %v162
  %v169 = vunpack.c.l.b16 %v154
  %v170 = vunpack.c.l.b16 %v155
  %v171 = vunpack.c.l.b16 %v156
  %v172 = vunpack.c.l.b16 %v157
  %v173 = vpack.c.b16 %v170, %v169
  %v174 = vpack.c.b16 %v172, %v171
  %vm177 = vcmask 261120
  %v179 = vsel %vm177, %v150, 0
  %v182 = vsel %vm177, %v151, 0
  %v185 = vsel %vm177, %v152, 0
  %v188 = vsel %vm177, %v153, 0
  %190 = vmatprep.subr.bf16.mxu0 0
  %191 = vmatpush1.bf16.msra.mxu0 0
  %192 = vmatprep.subr.bf16.mxu0 0
  %193 = vmatpush1.bf16.msra.mxu0 0
  %194 = vmatprep.subr.bf16.mxu0 0
  %195 = vmatpush1.bf16.msra.mxu0 0
  %196 = vmatprep.subr.bf16.mxu0 0
  %197 = vmatpush1.bf16.msra.mxu0 0
  %198 = vmatprep.subr.bf16.mxu0 0
  %199 = vmatpush1.bf16.msra.mxu0 0
  %200 = vmatprep.subr.bf16.mxu0 0
  %201 = vmatpush1.bf16.msra.mxu0 0
  %202 = vmatprep.subr.bf16.mxu0 0
  %203 = vmatpush1.bf16.msra.mxu0 %v174
  %204 = vmatprep.subr.bf16.mxu0 0
  %205 = vmatpush1.bf16.msra.mxu0 %v173
  %206 = vmatprep.subr.bf16.mxu0 0
  %207 = vmatpush2.bf16.msra.mxu0 0
  %208 = vmatprep.subr.bf16.mxu0 0
  %209 = vmatpush2.bf16.msra.mxu0 0
  %210 = vmatprep.subr.bf16.mxu0 0
  %211 = vmatpush2.bf16.msra.mxu0 0
  %212 = vmatprep.subr.bf16.mxu0 0
  %213 = vmatpush2.bf16.msra.mxu0 0
  %214 = vmatprep.subr.bf16.mxu0 0
  %215 = vmatpush2.bf16.msra.mxu0 0
  %216 = vmatprep.subr.bf16.mxu0 0
  %217 = vmatpush2.bf16.msra.mxu0 0
  %218 = vmatprep.subr.bf16.mxu0 0
  %219 = vmatpush2.bf16.msra.mxu0 0
  %220 = vmatprep.subr.bf16.mxu0 0
  %221 = vmatpush2.bf16.msra.mxu0 0
  %222 = vmatprep.mubr.bf16.mxu0 0
  %223 = vmatmul.mubr.bf16.gmra.mxu0 %v179
  %v224 = vpop.f32.mrf.mxu0
  %v225 = vadd.f32 %v163, %v224
  %v226 = vpop.f32.mrf.mxu0
  %v227 = vpop.f32.mrf.mxu0
  %v228 = vadd.f32 %v163, %v227
  %v229 = vpop.f32.mrf.mxu0
  %230 = vmatprep.mubr.bf16.mxu0 0
  %231 = vmatmul.mubr.bf16.gmra.mxu0 %v182
  %v232 = vpop.f32.mrf.mxu0
  %v233 = vadd.f32 %v163, %v232
  %v234 = vpop.f32.mrf.mxu0
  %v235 = vpop.f32.mrf.mxu0
  %v236 = vadd.f32 %v163, %v235
  %v237 = vpop.f32.mrf.mxu0
  %238 = vmatprep.mubr.bf16.mxu0 0
  %239 = vmatmul.mubr.bf16.gmra.mxu0 %v185
  %v240 = vpop.f32.mrf.mxu0
  %v241 = vadd.f32 %v163, %v240
  %v242 = vpop.f32.mrf.mxu0
  %v243 = vpop.f32.mrf.mxu0
  %v244 = vadd.f32 %v163, %v243
  %v245 = vpop.f32.mrf.mxu0
  %246 = vmatprep.mubr.bf16.mxu0 0
  %247 = vmatmul.mubr.bf16.gmra.mxu0 %v188
  %v248 = vpop.f32.mrf.mxu0
  %v249 = vadd.f32 %v163, %v248
  %v250 = vpop.f32.mrf.mxu0
  %v251 = vpop.f32.mrf.mxu0
  %v252 = vadd.f32 %v163, %v251
  %v253 = vpop.f32.mrf.mxu0
  %254 = vdwg.mxu0
  %v255 = vpack.c.bf16 %v228, %v225
  %v256 = vpack.c.bf16 %v236, %v233
  %v257 = vpack.c.bf16 %v244, %v241
  %v258 = vpack.c.bf16 %v252, %v249
  %v263 = vunpack.c.l.b16 %v255
  %v264 = vunpack.c.h.b16 %v255
  %v265 = vunpack.c.l.b16 %v256
  %v266 = vunpack.c.h.b16 %v256
  %v267 = vunpack.c.l.b16 %v257
  %v268 = vunpack.c.h.b16 %v257
  %v269 = vunpack.c.l.b16 %v258
  %v270 = vunpack.c.h.b16 %v258
  %v271 = vpack.c.b16 %v263, %v263
  %v272 = vpack.c.b16 %v264, %v264
  %v273 = vpack.c.b16 %v265, %v265
  %v274 = vpack.c.b16 %v266, %v266
  %v275 = vpack.c.b16 %v267, %v267
  %v276 = vpack.c.b16 %v268, %v268
  %v277 = vpack.c.b16 %v269, %v269
  %v278 = vpack.c.b16 %v270, %v270
  %vm287 = vcmask 257024
  %288 = vst.msk [vmem:[%s5] sm:$0xf] %vm287, %v271
  %289 = vst.msk [vmem:[%s5 + $0x4] sm:$0xf] %vm287, %v272
  %290 = vst.msk [vmem:[%s5 + $0x8] sm:$0xf] %vm287, %v273
  %291 = vst.msk [vmem:[%s5 + $0xc] sm:$0xf] %vm287, %v274
  %292 = vst.msk [vmem:[%s5 + $0x10] sm:$0xf] %vm287, %v275
  %293 = vst.msk [vmem:[%s5 + $0x14] sm:$0xf] %vm287, %v276
  %294 = vst.msk [vmem:[%s5 + $0x18] sm:$0xf] %vm287, %v277
  %295 = vst.msk [vmem:[%s5 + $0x1c] sm:$0xf] %vm287, %v278
  // Predicated region
  $region22: #{bert_encoder_forward.18} parent=0 // pred_check
    _
  $region23: #{bert_encoder_forward.18} parent=0 // pred_check_branch
    %297 = sbr.rel (0) target = $region25
  $region24: #{bert_encoder_forward.18} parent=0 // pred_region
    _
  $region25: #{bert_encoder_forward.18} parent=0 // pred_fallthru
    _
  // Predicated region
  $region26: #{bert_encoder_forward.18} parent=0 // pred_check
    _
  $region27: #{bert_encoder_forward.18} parent=0 // pred_check_branch
    %299 = sbr.rel (0) target = $region29
  $region28: #{bert_encoder_forward.18} parent=0 // pred_region
    _
  $region29: #{bert_encoder_forward.18} parent=0 // pred_fallthru
    _

// kernel: bert_encoder_forward.19
$region0: #{bert_encoder_forward.19}
  #allocation0 [shape = 'u32[]', space=smem, size = 0x4, offset = 0x4, fixed_abs, tag = 'smem constant byte address 0x4 - core index']
  #allocation1 [shape = 'u32[144,128]{1,0:T(1,128)}', space=vmem, size = 0x12000, scoped, tag = 'internal scratch']
  %s0 = inlined_call_operand.vmem [shape: bf16[16,32], index: 0, kind: input, shape index: {}]
  %s1 = inlined_call_operand.vmem [shape: bf16[16,4,32], index: 1, kind: input, shape index: {}]
  %s2 = inlined_call_operand.vmem [shape: f32[16,4], index: 2, kind: input, shape index: {}]
  %s3 = inlined_call_operand.vmem [shape: bf16[32,32], index: 3, kind: input, shape index: {}]
  %s4 = inlined_call_operand.vmem [shape: f32[1,32], index: 4, kind: input, shape index: {}]
  %s5 = inlined_call_operand.vmem [shape: f32[1,32], index: 5, kind: input, shape index: {}]
  %s6 = inlined_call_operand.vmem [shape: bf16[16,32], index: 6, kind: output, shape index: {}]
  %s7 = sld [smem:[#allocation0]]
  $region34: #{bert_encoder_forward.19} parent=0
    _
  %s9 = ssub.s32 1, %s7
  %s10 = scalar_select 0, %s9, %s7
  // Predicated region
  $region2: #{bert_encoder_forward.19} parent=0 // pred_check
    _
  $region3: #{bert_encoder_forward.19} parent=0 // pred_check_branch
    %12 = sbr.rel (0) target = $region5
  $region4: #{bert_encoder_forward.19} parent=0 // pred_region
    _
  $region5: #{bert_encoder_forward.19} parent=0 // pred_fallthru
    _
  // Predicated region
  $region6: #{bert_encoder_forward.19} parent=0 // pred_check
    _
  $region7: #{bert_encoder_forward.19} parent=0 // pred_check_branch
    %14 = sbr.rel (0) target = $region9
  $region8: #{bert_encoder_forward.19} parent=0 // pred_region
    _
  $region9: #{bert_encoder_forward.19} parent=0 // pred_fallthru
    _
  // Predicated region
  $region10: #{bert_encoder_forward.19} parent=0 // pred_check
    _
  $region11: #{bert_encoder_forward.19} parent=0 // pred_check_branch
    %16 = sbr.rel (0) target = $region13
  $region12: #{bert_encoder_forward.19} parent=0 // pred_region
    _
  $region13: #{bert_encoder_forward.19} parent=0 // pred_fallthru
    _
  // Predicated region
  $region14: #{bert_encoder_forward.19} parent=0 // pred_check
    _
  $region15: #{bert_encoder_forward.19} parent=0 // pred_check_branch
    %18 = sbr.rel (0) target = $region17
  $region16: #{bert_encoder_forward.19} parent=0 // pred_region
    _
  $region17: #{bert_encoder_forward.19} parent=0 // pred_fallthru
    _
  // Predicated region
  $region18: #{bert_encoder_forward.19} parent=0 // pred_check
    _
  $region19: #{bert_encoder_forward.19} parent=0 // pred_check_branch
    %20 = sbr.rel (0) target = $region21
  $region20: #{bert_encoder_forward.19} parent=0 // pred_region
    _
  $region21: #{bert_encoder_forward.19} parent=0 // pred_fallthru
    _
  // Predicated region
  $region22: #{bert_encoder_forward.19} parent=0 // pred_check
    _
  $region23: #{bert_encoder_forward.19} parent=0 // pred_check_branch
    %22 = sbr.rel (0) target = $region25
  $region24: #{bert_encoder_forward.19} parent=0 // pred_region
    _
  $region25: #{bert_encoder_forward.19} parent=0 // pred_fallthru
    _
  %v24 = vld [vmem:[%s0] sm:$0xf]
  %v25 = vld [vmem:[%s0 + $0x4] sm:$0xf]
  %v26 = vld [vmem:[%s1] sm:$0x3]
  %v27 = vld [vmem:[%s1 + $0x2] sm:$0x3]
  %v28 = vld [vmem:[%s1 + $0x4] sm:$0x3]
  %v29 = vld [vmem:[%s1 + $0x6] sm:$0x3]
  %v30 = vld [vmem:[%s1 + $0x8] sm:$0x3]
  %v31 = vld [vmem:[%s1 + $0xa] sm:$0x3]
  %v32 = vld [vmem:[%s1 + $0xc] sm:$0x3]
  %v33 = vld [vmem:[%s1 + $0xe] sm:$0x3]
  %v34 = vld [vmem:[%s1 + $0x10] sm:$0x3]
  %v35 = vld [vmem:[%s1 + $0x12] sm:$0x3]
  %v36 = vld [vmem:[%s1 + $0x14] sm:$0x3]
  %v37 = vld [vmem:[%s1 + $0x16] sm:$0x3]
  %v38 = vld [vmem:[%s1 + $0x18] sm:$0x3]
  %v39 = vld [vmem:[%s1 + $0x1a] sm:$0x3]
  %v40 = vld [vmem:[%s1 + $0x1c] sm:$0x3]
  %v41 = vld [vmem:[%s1 + $0x1e] sm:$0x3]
  %v42 = vunpack.c.l.bf16 %v26
  %v43 = vunpack.c.l.bf16 %v27
  %v44 = vunpack.c.l.bf16 %v28
  %v45 = vunpack.c.l.bf16 %v29
  %v46 = vunpack.c.l.bf16 %v30
  %v47 = vunpack.c.l.bf16 %v31
  %v48 = vunpack.c.l.bf16 %v32
  %v49 = vunpack.c.l.bf16 %v33
  %v50 = vunpack.c.l.bf16 %v34
  %v51 = vunpack.c.l.bf16 %v35
  %v52 = vunpack.c.l.bf16 %v36
  %v53 = vunpack.c.l.bf16 %v37
  %v54 = vunpack.c.l.bf16 %v38
  %v55 = vunpack.c.l.bf16 %v39
  %v56 = vunpack.c.l.bf16 %v40
  %v57 = vunpack.c.l.bf16 %v41
  %v58 = vld [vmem:[%s2] sm:$0xff]
  %v59 = vld [vmem:[%s2 + $0x8] sm:$0xff]
  %v60 = vld [vmem:[%s3] sm:$0xf]
  %v61 = vld [vmem:[%s3 + $0x4] sm:$0xf]
  %v62 = vld [vmem:[%s3 + $0x8] sm:$0xf]
  %v63 = vld [vmem:[%s3 + $0xc] sm:$0xf]
  %v66 = vunpack.c.l.b16 %v24
  %v67 = vunpack.c.l.b16 %v25
  %v68 = vpack.c.b16 %v67, %v66
  %v73 = vunpack.c.l.b16 %v60
  %v74 = vunpack.c.l.b16 %v61
  %v75 = vunpack.c.l.b16 %v62
  %v76 = vunpack.c.l.b16 %v63
  %v77 = vpack.c.b16 %v74, %v73
  %v78 = vpack.c.b16 %v76, %v75
  %vm81 = vcmask 261120
  %v83 = vsel %vm81, %v68, 0
  %85 = vmatprep.subr.bf16.mxu0 0
  %86 = vmatpush1.bf16.msra.mxu0 0
  %87 = vmatprep.subr.bf16.mxu0 0
  %88 = vmatpush1.bf16.msra.mxu0 0
  %89 = vmatprep.subr.bf16.mxu0 0
  %90 = vmatpush1.bf16.msra.mxu0 0
  %91 = vmatprep.subr.bf16.mxu0 0
  %92 = vmatpush1.bf16.msra.mxu0 0
  %93 = vmatprep.subr.bf16.mxu0 0
  %94 = vmatpush1.bf16.msra.mxu0 0
  %95 = vmatprep.subr.bf16.mxu0 0
  %96 = vmatpush1.bf16.msra.mxu0 0
  %97 = vmatprep.subr.bf16.mxu0 0
  %98 = vmatpush1.bf16.msra.mxu0 %v78
  %99 = vmatprep.subr.bf16.mxu0 0
  %100 = vmatpush1.bf16.msra.mxu0 %v77
  %101 = vmatprep.subr.bf16.mxu0 0
  %102 = vmatpush2.bf16.msra.mxu0 0
  %103 = vmatprep.subr.bf16.mxu0 0
  %104 = vmatpush2.bf16.msra.mxu0 0
  %105 = vmatprep.subr.bf16.mxu0 0
  %106 = vmatpush2.bf16.msra.mxu0 0
  %107 = vmatprep.subr.bf16.mxu0 0
  %108 = vmatpush2.bf16.msra.mxu0 0
  %109 = vmatprep.subr.bf16.mxu0 0
  %110 = vmatpush2.bf16.msra.mxu0 0
  %111 = vmatprep.subr.bf16.mxu0 0
  %112 = vmatpush2.bf16.msra.mxu0 0
  %113 = vmatprep.subr.bf16.mxu0 0
  %114 = vmatpush2.bf16.msra.mxu0 0
  %115 = vmatprep.subr.bf16.mxu0 0
  %116 = vmatpush2.bf16.msra.mxu0 0
  %117 = vmatprep.mubr.bf16.mxu0 0
  %118 = vmatmul.mubr.bf16.gmra.mxu0 %v83
  %v119 = vpop.f32.mrf.mxu0
  %v120 = vadd.f32 0.0, %v119
  %v121 = vpop.f32.mrf.mxu0
  %v122 = vpop.f32.mrf.mxu0
  %v123 = vadd.f32 0.0, %v122
  %v124 = vpop.f32.mrf.mxu0
  %125 = vdwg.mxu0
  %v128 = vcombine.high %v120, %v120
  %v130 = vunpack.c.l.s4 1966171168
  %v131 = vunpack.c.0.s8 %v130
  %v132 = vlaneseq
  %v133 = vshrl.u32 %v132, 7
  %v134 = vsub.s32 %v131, %v133
  %v135 = vrot.slane %v120, %v134
  %v137 = vunpack.c.l.s4 1966171168
  %v138 = vunpack.c.0.s8 %v137
  %v139 = vlaneseq
  %v140 = vshrl.u32 %v139, 7
  %v141 = vsub.s32 %v138, %v140
  %v142 = vrot.slane %v128, %v141
  %v143 = vcombine.high %v135, %v135
  %v144 = vcombine.high %v142, %v142
  %v146 = vunpack.c.l.s4 1966171168
  %v147 = vunpack.c.0.s8 %v146
  %v148 = vlaneseq
  %v149 = vshrl.u32 %v148, 7
  %v150 = vsub.s32 %v147, %v149
  %v151 = vrot.slane %v135, %v150
  %v153 = vunpack.c.l.s4 1966171168
  %v154 = vunpack.c.0.s8 %v153
  %v155 = vlaneseq
  %v156 = vshrl.u32 %v155, 7
  %v157 = vsub.s32 %v154, %v156
  %v158 = vrot.slane %v142, %v157
  %v160 = vunpack.c.l.s4 1966171168
  %v161 = vunpack.c.0.s8 %v160
  %v162 = vlaneseq
  %v163 = vshrl.u32 %v162, 7
  %v164 = vsub.s32 %v161, %v163
  %v165 = vrot.slane %v143, %v164
  %v167 = vunpack.c.l.s4 1966171168
  %v168 = vunpack.c.0.s8 %v167
  %v169 = vlaneseq
  %v170 = vshrl.u32 %v169, 7
  %v171 = vsub.s32 %v168, %v170
  %v172 = vrot.slane %v144, %v171
  %v173 = vcombine.high %v151, %v151
  %v174 = vcombine.high %v158, %v158
  %v175 = vcombine.high %v165, %v165
  %v176 = vcombine.high %v172, %v172
  %v177 = vcombine.high %v123, %v123
  %v179 = vunpack.c.l.s4 1966171168
  %v180 = vunpack.c.0.s8 %v179
  %v181 = vlaneseq
  %v182 = vshrl.u32 %v181, 7
  %v183 = vsub.s32 %v180, %v182
  %v184 = vrot.slane %v123, %v183
  %v186 = vunpack.c.l.s4 1966171168
  %v187 = vunpack.c.0.s8 %v186
  %v188 = vlaneseq
  %v189 = vshrl.u32 %v188, 7
  %v190 = vsub.s32 %v187, %v189
  %v191 = vrot.slane %v177, %v190
  %v192 = vcombine.high %v184, %v184
  %v193 = vcombine.high %v191, %v191
  %v195 = vunpack.c.l.s4 1966171168
  %v196 = vunpack.c.0.s8 %v195
  %v197 = vlaneseq
  %v198 = vshrl.u32 %v197, 7
  %v199 = vsub.s32 %v196, %v198
  %v200 = vrot.slane %v184, %v199
  %v202 = vunpack.c.l.s4 1966171168
  %v203 = vunpack.c.0.s8 %v202
  %v204 = vlaneseq
  %v205 = vshrl.u32 %v204, 7
  %v206 = vsub.s32 %v203, %v205
  %v207 = vrot.slane %v191, %v206
  %v209 = vunpack.c.l.s4 1966171168
  %v210 = vunpack.c.0.s8 %v209
  %v211 = vlaneseq
  %v212 = vshrl.u32 %v211, 7
  %v213 = vsub.s32 %v210, %v212
  %v214 = vrot.slane %v192, %v213
  %v216 = vunpack.c.l.s4 1966171168
  %v217 = vunpack.c.0.s8 %v216
  %v218 = vlaneseq
  %v219 = vshrl.u32 %v218, 7
  %v220 = vsub.s32 %v217, %v219
  %v221 = vrot.slane %v193, %v220
  %v222 = vcombine.high %v200, %v200
  %v223 = vcombine.high %v207, %v207
  %v224 = vcombine.high %v214, %v214
  %v225 = vcombine.high %v221, %v221
  %v226 = vlaneseq
  %v227 = vshrl.u32 %v226, 7
  %v228 = vsub.s32 0, %v227
  %v229 = vrot.slane %v151, %v228
  %v230 = vlaneseq
  %v231 = vshrl.u32 %v230, 7
  %v232 = vsub.s32 0, %v231
  %v233 = vrot.slane %v165, %v232
  %v234 = vlaneseq
  %v235 = vshrl.u32 %v234, 7
  %v236 = vsub.s32 0, %v235
  %v237 = vrot.slane %v173, %v236
  %v238 = vlaneseq
  %v239 = vshrl.u32 %v238, 7
  %v240 = vsub.s32 0, %v239
  %v241 = vrot.slane %v175, %v240
  %v242 = vlaneseq
  %v243 = vshrl.u32 %v242, 7
  %v244 = vsub.s32 0, %v243
  %v245 = vrot.slane %v158, %v244
  %v246 = vlaneseq
  %v247 = vshrl.u32 %v246, 7
  %v248 = vsub.s32 0, %v247
  %v249 = vrot.slane %v172, %v248
  %v250 = vlaneseq
  %v251 = vshrl.u32 %v250, 7
  %v252 = vsub.s32 0, %v251
  %v253 = vrot.slane %v174, %v252
  %v254 = vlaneseq
  %v255 = vshrl.u32 %v254, 7
  %v256 = vsub.s32 0, %v255
  %v257 = vrot.slane %v176, %v256
  %v258 = vlaneseq
  %v259 = vshrl.u32 %v258, 7
  %v260 = vsub.s32 0, %v259
  %v261 = vrot.slane %v200, %v260
  %v262 = vlaneseq
  %v263 = vshrl.u32 %v262, 7
  %v264 = vsub.s32 0, %v263
  %v265 = vrot.slane %v214, %v264
  %v266 = vlaneseq
  %v267 = vshrl.u32 %v266, 7
  %v268 = vsub.s32 0, %v267
  %v269 = vrot.slane %v222, %v268
  %v270 = vlaneseq
  %v271 = vshrl.u32 %v270, 7
  %v272 = vsub.s32 0, %v271
  %v273 = vrot.slane %v224, %v272
  %v274 = vlaneseq
  %v275 = vshrl.u32 %v274, 7
  %v276 = vsub.s32 0, %v275
  %v277 = vrot.slane %v207, %v276
  %v278 = vlaneseq
  %v279 = vshrl.u32 %v278, 7
  %v280 = vsub.s32 0, %v279
  %v281 = vrot.slane %v221, %v280
  %v282 = vlaneseq
  %v283 = vshrl.u32 %v282, 7
  %v284 = vsub.s32 0, %v283
  %v285 = vrot.slane %v223, %v284
  %v286 = vlaneseq
  %v287 = vshrl.u32 %v286, 7
  %v288 = vsub.s32 0, %v287
  %v289 = vrot.slane %v225, %v288
  %v306 = vmul.f32 %v229, %v42
  %v307 = vmul.f32 %v233, %v43
  %v308 = vmul.f32 %v237, %v44
  %v309 = vmul.f32 %v241, %v45
  %v310 = vmul.f32 %v245, %v46
  %v311 = vmul.f32 %v249, %v47
  %v312 = vmul.f32 %v253, %v48
  %v313 = vmul.f32 %v257, %v49
  %v314 = vmul.f32 %v261, %v50
  %v315 = vmul.f32 %v265, %v51
  %v316 = vmul.f32 %v269, %v52
  %v317 = vmul.f32 %v273, %v53
  %v318 = vmul.f32 %v277, %v54
  %v319 = vmul.f32 %v281, %v55
  %v320 = vmul.f32 %v285, %v56
  %v321 = vmul.f32 %v289, %v57
  %vm322 = vcmask 257024
  %v323 = vsel %vm322, %v306, 0.0
  %324 = vadd.xlane.f32.xlu0 %v323
  %v325 = vpop.xlane.xlu0 %324
  %v326 = vsel %vm322, %v307, 0.0
  %327 = vadd.xlane.f32.xlu0 %v326
  %v328 = vpop.xlane.xlu0 %327
  %v329 = vsel %vm322, %v308, 0.0
  %330 = vadd.xlane.f32.xlu0 %v329
  %v331 = vpop.xlane.xlu0 %330
  %v332 = vsel %vm322, %v309, 0.0
  %333 = vadd.xlane.f32.xlu0 %v332
  %v334 = vpop.xlane.xlu0 %333
  %v335 = vsel %vm322, %v310, 0.0
  %336 = vadd.xlane.f32.xlu0 %v335
  %v337 = vpop.xlane.xlu0 %336
  %v338 = vsel %vm322, %v311, 0.0
  %339 = vadd.xlane.f32.xlu0 %v338
  %v340 = vpop.xlane.xlu0 %339
  %v341 = vsel %vm322, %v312, 0.0
  %342 = vadd.xlane.f32.xlu0 %v341
  %v343 = vpop.xlane.xlu0 %342
  %v344 = vsel %vm322, %v313, 0.0
  %345 = vadd.xlane.f32.xlu0 %v344
  %v346 = vpop.xlane.xlu0 %345
  %v347 = vsel %vm322, %v314, 0.0
  %348 = vadd.xlane.f32.xlu0 %v347
  %v349 = vpop.xlane.xlu0 %348
  %v350 = vsel %vm322, %v315, 0.0
  %351 = vadd.xlane.f32.xlu0 %v350
  %v352 = vpop.xlane.xlu0 %351
  %v353 = vsel %vm322, %v316, 0.0
  %354 = vadd.xlane.f32.xlu0 %v353
  %v355 = vpop.xlane.xlu0 %354
  %v356 = vsel %vm322, %v317, 0.0
  %357 = vadd.xlane.f32.xlu0 %v356
  %v358 = vpop.xlane.xlu0 %357
  %v359 = vsel %vm322, %v318, 0.0
  %360 = vadd.xlane.f32.xlu0 %v359
  %v361 = vpop.xlane.xlu0 %360
  %v362 = vsel %vm322, %v319, 0.0
  %363 = vadd.xlane.f32.xlu0 %v362
  %v364 = vpop.xlane.xlu0 %363
  %v365 = vsel %vm322, %v320, 0.0
  %366 = vadd.xlane.f32.xlu0 %v365
  %v367 = vpop.xlane.xlu0 %366
  %v368 = vsel %vm322, %v321, 0.0
  %369 = vadd.xlane.f32.xlu0 %v368
  %v370 = vpop.xlane.xlu0 %369
  %v371 = vsub.f32 1.0, %v58
  %v372 = vsub.f32 1.0, %v59
  %v373 = vmul.f32 %v371, -10000.0
  %v374 = vmul.f32 %v372, -10000.0
  %v377 = vlaneseq
  %v378 = vshrl.u32 %v377, 7
  %v379 = vsub.s32 0, %v378
  %v380 = vrot.slane %v373, %v379
  %382 = vbcast.lane.b32.xlu0 %v380, 256
  %v383 = vpop.permute.xlu0 %382
  %v384 = vlaneseq
  %v385 = vshrl.u32 %v384, 7
  %v386 = vsub.s32 1, %v385
  %v387 = vrot.slane %v373, %v386
  %389 = vbcast.lane.b32.xlu0 %v387, 256
  %v390 = vpop.permute.xlu0 %389
  %v391 = vlaneseq
  %v392 = vshrl.u32 %v391, 7
  %v393 = vsub.s32 2, %v392
  %v394 = vrot.slane %v373, %v393
  %396 = vbcast.lane.b32.xlu0 %v394, 256
  %v397 = vpop.permute.xlu0 %396
  %v398 = vlaneseq
  %v399 = vshrl.u32 %v398, 7
  %v400 = vsub.s32 3, %v399
  %v401 = vrot.slane %v373, %v400
  %403 = vbcast.lane.b32.xlu0 %v401, 256
  %v404 = vpop.permute.xlu0 %403
  %v405 = vlaneseq
  %v406 = vshrl.u32 %v405, 7
  %v407 = vsub.s32 4, %v406
  %v408 = vrot.slane %v373, %v407
  %410 = vbcast.lane.b32.xlu0 %v408, 256
  %v411 = vpop.permute.xlu0 %410
  %v412 = vlaneseq
  %v413 = vshrl.u32 %v412, 7
  %v414 = vsub.s32 5, %v413
  %v415 = vrot.slane %v373, %v414
  %417 = vbcast.lane.b32.xlu0 %v415, 256
  %v418 = vpop.permute.xlu0 %417
  %v419 = vlaneseq
  %v420 = vshrl.u32 %v419, 7
  %v421 = vsub.s32 6, %v420
  %v422 = vrot.slane %v373, %v421
  %424 = vbcast.lane.b32.xlu0 %v422, 256
  %v425 = vpop.permute.xlu0 %424
  %v426 = vlaneseq
  %v427 = vshrl.u32 %v426, 7
  %v428 = vsub.s32 7, %v427
  %v429 = vrot.slane %v373, %v428
  %431 = vbcast.lane.b32.xlu0 %v429, 256
  %v432 = vpop.permute.xlu0 %431
  %v433 = vlaneseq
  %v434 = vshrl.u32 %v433, 7
  %v435 = vsub.s32 0, %v434
  %v436 = vrot.slane %v374, %v435
  %438 = vbcast.lane.b32.xlu0 %v436, 256
  %v439 = vpop.permute.xlu0 %438
  %v440 = vlaneseq
  %v441 = vshrl.u32 %v440, 7
  %v442 = vsub.s32 1, %v441
  %v443 = vrot.slane %v374, %v442
  %445 = vbcast.lane.b32.xlu0 %v443, 256
  %v446 = vpop.permute.xlu0 %445
  %v447 = vlaneseq
  %v448 = vshrl.u32 %v447, 7
  %v449 = vsub.s32 2, %v448
  %v450 = vrot.slane %v374, %v449
  %452 = vbcast.lane.b32.xlu0 %v450, 256
  %v453 = vpop.permute.xlu0 %452
  %v454 = vlaneseq
  %v455 = vshrl.u32 %v454, 7
  %v456 = vsub.s32 3, %v455
  %v457 = vrot.slane %v374, %v456
  %459 = vbcast.lane.b32.xlu0 %v457, 256
  %v460 = vpop.permute.xlu0 %459
  %v461 = vlaneseq
  %v462 = vshrl.u32 %v461, 7
  %v463 = vsub.s32 4, %v462
  %v464 = vrot.slane %v374, %v463
  %466 = vbcast.lane.b32.xlu0 %v464, 256
  %v467 = vpop.permute.xlu0 %466
  %v468 = vlaneseq
  %v469 = vshrl.u32 %v468, 7
  %v470 = vsub.s32 5, %v469
  %v471 = vrot.slane %v374, %v470
  %473 = vbcast.lane.b32.xlu0 %v471, 256
  %v474 = vpop.permute.xlu0 %473
  %v475 = vlaneseq
  %v476 = vshrl.u32 %v475, 7
  %v477 = vsub.s32 6, %v476
  %v478 = vrot.slane %v374, %v477
  %480 = vbcast.lane.b32.xlu0 %v478, 256
  %v481 = vpop.permute.xlu0 %480
  %v482 = vlaneseq
  %v483 = vshrl.u32 %v482, 7
  %v484 = vsub.s32 7, %v483
  %v485 = vrot.slane %v374, %v484
  %487 = vbcast.lane.b32.xlu0 %v485, 256
  %v488 = vpop.permute.xlu0 %487
  %v505 = vadd.f32 %v325, %v383
  %v506 = vadd.f32 %v328, %v390
  %v507 = vadd.f32 %v331, %v397
  %v508 = vadd.f32 %v334, %v404
  %v509 = vadd.f32 %v337, %v411
  %v510 = vadd.f32 %v340, %v418
  %v511 = vadd.f32 %v343, %v425
  %v512 = vadd.f32 %v346, %v432
  %v513 = vadd.f32 %v349, %v439
  %v514 = vadd.f32 %v352, %v446
  %v515 = vadd.f32 %v355, %v453
  %v516 = vadd.f32 %v358, %v460
  %v517 = vadd.f32 %v361, %v467
  %v518 = vadd.f32 %v364, %v474
  %v519 = vadd.f32 %v367, %v481
  %v520 = vadd.f32 %v370, %v488
  %537 = vset.pattern.permute.xlu0 0
  %538 = vperm.xlu0 %537, %v505
  %v539 = vpop.permute.xlu0 %538
  %540 = vset.pattern.permute.xlu0 0
  %541 = vperm.xlu0 %540, %v506
  %v542 = vpop.permute.xlu0 %541
  %543 = vset.pattern.permute.xlu0 0
  %544 = vperm.xlu0 %543, %v507
  %v545 = vpop.permute.xlu0 %544
  %546 = vset.pattern.permute.xlu0 0
  %547 = vperm.xlu0 %546, %v508
  %v548 = vpop.permute.xlu0 %547
  %549 = vset.pattern.permute.xlu0 0
  %550 = vperm.xlu0 %549, %v509
  %v551 = vpop.permute.xlu0 %550
  %552 = vset.pattern.permute.xlu0 0
  %553 = vperm.xlu0 %552, %v510
  %v554 = vpop.permute.xlu0 %553
  %555 = vset.pattern.permute.xlu0 0
  %556 = vperm.xlu0 %555, %v511
  %v557 = vpop.permute.xlu0 %556
  %558 = vset.pattern.permute.xlu0 0
  %559 = vperm.xlu0 %558, %v512
  %v560 = vpop.permute.xlu0 %559
  %561 = vset.pattern.permute.xlu0 0
  %562 = vperm.xlu0 %561, %v513
  %v563 = vpop.permute.xlu0 %562
  %564 = vset.pattern.permute.xlu0 0
  %565 = vperm.xlu0 %564, %v514
  %v566 = vpop.permute.xlu0 %565
  %567 = vset.pattern.permute.xlu0 0
  %568 = vperm.xlu0 %567, %v515
  %v569 = vpop.permute.xlu0 %568
  %570 = vset.pattern.permute.xlu0 0
  %571 = vperm.xlu0 %570, %v516
  %v572 = vpop.permute.xlu0 %571
  %573 = vset.pattern.permute.xlu0 0
  %574 = vperm.xlu0 %573, %v517
  %v575 = vpop.permute.xlu0 %574
  %576 = vset.pattern.permute.xlu0 0
  %577 = vperm.xlu0 %576, %v518
  %v578 = vpop.permute.xlu0 %577
  %579 = vset.pattern.permute.xlu0 0
  %580 = vperm.xlu0 %579, %v519
  %v581 = vpop.permute.xlu0 %580
  %582 = vset.pattern.permute.xlu0 0
  %583 = vperm.xlu0 %582, %v520
  %v584 = vpop.permute.xlu0 %583
  %v585 = vlaneseq
  %v586 = vand.u32 %v585, 127
  %v587 = vlaneseq
  %v588 = vshrl.u32 %v587, 7
  %v589 = vsub.s32 %v586, %v588
  %v590 = vrot.slane %v539, %v589
  %v591 = vlaneseq
  %v592 = vshrl.u32 %v591, 7
  %v593 = vsub.s32 %v586, %v592
  %v594 = vrot.slane %v542, %v593
  %v595 = vlaneseq
  %v596 = vshrl.u32 %v595, 7
  %v597 = vsub.s32 %v586, %v596
  %v598 = vrot.slane %v545, %v597
  %v599 = vlaneseq
  %v600 = vshrl.u32 %v599, 7
  %v601 = vsub.s32 %v586, %v600
  %v602 = vrot.slane %v548, %v601
  %v603 = vlaneseq
  %v604 = vshrl.u32 %v603, 7
  %v605 = vsub.s32 %v586, %v604
  %v606 = vrot.slane %v551, %v605
  %v607 = vlaneseq
  %v608 = vshrl.u32 %v607, 7
  %v609 = vsub.s32 %v586, %v608
  %v610 = vrot.slane %v554, %v609
  %v611 = vlaneseq
  %v612 = vshrl.u32 %v611, 7
  %v613 = vsub.s32 %v586, %v612
  %v614 = vrot.slane %v557, %v613
  %v615 = vlaneseq
  %v616 = vshrl.u32 %v615, 7
  %v617 = vsub.s32 %v586, %v616
  %v618 = vrot.slane %v560, %v617
  %v619 = vlaneseq
  %v620 = vshrl.u32 %v619, 7
  %v621 = vsub.s32 %v586, %v620
  %v622 = vrot.slane %v563, %v621
  %v623 = vlaneseq
  %v624 = vshrl.u32 %v623, 7
  %v625 = vsub.s32 %v586, %v624
  %v626 = vrot.slane %v566, %v625
  %v627 = vlaneseq
  %v628 = vshrl.u32 %v627, 7
  %v629 = vsub.s32 %v586, %v628
  %v630 = vrot.slane %v569, %v629
  %v631 = vlaneseq
  %v632 = vshrl.u32 %v631, 7
  %v633 = vsub.s32 %v586, %v632
  %v634 = vrot.slane %v572, %v633
  %v635 = vlaneseq
  %v636 = vshrl.u32 %v635, 7
  %v637 = vsub.s32 %v586, %v636
  %v638 = vrot.slane %v575, %v637
  %v639 = vlaneseq
  %v640 = vshrl.u32 %v639, 7
  %v641 = vsub.s32 %v586, %v640
  %v642 = vrot.slane %v578, %v641
  %v643 = vlaneseq
  %v644 = vshrl.u32 %v643, 7
  %v645 = vsub.s32 %v586, %v644
  %v646 = vrot.slane %v581, %v645
  %v647 = vlaneseq
  %v648 = vshrl.u32 %v647, 7
  %v649 = vsub.s32 %v586, %v648
  %v650 = vrot.slane %v584, %v649
  %vm651 = vcmask 1041409
  %v652 = vsel %vm651, %v594, %v590
  %vm653 = vcmask 1042434
  %v654 = vsel %vm653, %v598, %v652
  %vm655 = vcmask 1043459
  %v656 = vsel %vm655, %v602, %v654
  %vm657 = vcmask 1044484
  %v658 = vsel %vm657, %v606, %v656
  %vm659 = vcmask 1045509
  %v660 = vsel %vm659, %v610, %v658
  %vm661 = vcmask 1046534
  %v662 = vsel %vm661, %v614, %v660
  %vm663 = vcmask 1047559
  %v664 = vsel %vm663, %v618, %v662
  %v665 = vsel %vm651, %v626, %v622
  %v666 = vsel %vm653, %v630, %v665
  %v667 = vsel %vm655, %v634, %v666
  %v668 = vsel %vm657, %v638, %v667
  %v669 = vsel %vm659, %v642, %v668
  %v670 = vsel %vm661, %v646, %v669
  %v671 = vsel %vm663, %v650, %v670
  %vm674 = vcmask 31744
  %v675 = vsel %vm674, %v664, -inf
  %676 = vmax.xlane.f32.xlu0 %v675
  %v677 = vpop.xlane.xlu0 %676
  %v678 = vsel %vm674, %v671, -inf
  %679 = vmax.xlane.f32.xlu0 %v678
  %v680 = vpop.xlane.xlu0 %679
  %v683 = vlaneseq
  %v684 = vshrl.u32 %v683, 7
  %v685 = vsub.s32 0, %v684
  %v686 = vrot.slane %v677, %v685
  %v687 = vlaneseq
  %v688 = vshrl.u32 %v687, 7
  %v689 = vsub.s32 1, %v688
  %v690 = vrot.slane %v677, %v689
  %v691 = vlaneseq
  %v692 = vshrl.u32 %v691, 7
  %v693 = vsub.s32 2, %v692
  %v694 = vrot.slane %v677, %v693
  %v695 = vlaneseq
  %v696 = vshrl.u32 %v695, 7
  %v697 = vsub.s32 3, %v696
  %v698 = vrot.slane %v677, %v697
  %v699 = vlaneseq
  %v700 = vshrl.u32 %v699, 7
  %v701 = vsub.s32 4, %v700
  %v702 = vrot.slane %v677, %v701
  %v703 = vlaneseq
  %v704 = vshrl.u32 %v703, 7
  %v705 = vsub.s32 5, %v704
  %v706 = vrot.slane %v677, %v705
  %v707 = vlaneseq
  %v708 = vshrl.u32 %v707, 7
  %v709 = vsub.s32 6, %v708
  %v710 = vrot.slane %v677, %v709
  %v711 = vlaneseq
  %v712 = vshrl.u32 %v711, 7
  %v713 = vsub.s32 7, %v712
  %v714 = vrot.slane %v677, %v713
  %v715 = vlaneseq
  %v716 = vshrl.u32 %v715, 7
  %v717 = vsub.s32 0, %v716
  %v718 = vrot.slane %v680, %v717
  %v719 = vlaneseq
  %v720 = vshrl.u32 %v719, 7
  %v721 = vsub.s32 1, %v720
  %v722 = vrot.slane %v680, %v721
  %v723 = vlaneseq
  %v724 = vshrl.u32 %v723, 7
  %v725 = vsub.s32 2, %v724
  %v726 = vrot.slane %v680, %v725
  %v727 = vlaneseq
  %v728 = vshrl.u32 %v727, 7
  %v729 = vsub.s32 3, %v728
  %v730 = vrot.slane %v680, %v729
  %v731 = vlaneseq
  %v732 = vshrl.u32 %v731, 7
  %v733 = vsub.s32 4, %v732
  %v734 = vrot.slane %v680, %v733
  %v735 = vlaneseq
  %v736 = vshrl.u32 %v735, 7
  %v737 = vsub.s32 5, %v736
  %v738 = vrot.slane %v680, %v737
  %v739 = vlaneseq
  %v740 = vshrl.u32 %v739, 7
  %v741 = vsub.s32 6, %v740
  %v742 = vrot.slane %v680, %v741
  %v743 = vlaneseq
  %v744 = vshrl.u32 %v743, 7
  %v745 = vsub.s32 7, %v744
  %v746 = vrot.slane %v680, %v745
  %v763 = vsub.f32 %v505, %v686
  %v764 = vsub.f32 %v506, %v690
  %v765 = vsub.f32 %v507, %v694
  %v766 = vsub.f32 %v508, %v698
  %v767 = vsub.f32 %v509, %v702
  %v768 = vsub.f32 %v510, %v706
  %v769 = vsub.f32 %v511, %v710
  %v770 = vsub.f32 %v512, %v714
  %v771 = vsub.f32 %v513, %v718
  %v772 = vsub.f32 %v514, %v722
  %v773 = vsub.f32 %v515, %v726
  %v774 = vsub.f32 %v516, %v730
  %v775 = vsub.f32 %v517, %v734
  %v776 = vsub.f32 %v518, %v738
  %v777 = vsub.f32 %v519, %v742
  %v778 = vsub.f32 %v520, %v746
  %v779 = vmul.f32 %v763, 1.442695
  %v780 = vpow.pop %v779
  %v781 = vmul.f32 %v764, 1.442695
  %v782 = vpow.pop %v781
  %v783 = vmul.f32 %v765, 1.442695
  %v784 = vpow.pop %v783
  %v785 = vmul.f32 %v766, 1.442695
  %v786 = vpow.pop %v785
  %v787 = vmul.f32 %v767, 1.442695
  %v788 = vpow.pop %v787
  %v789 = vmul.f32 %v768, 1.442695
  %v790 = vpow.pop %v789
  %v791 = vmul.f32 %v769, 1.442695
  %v792 = vpow.pop %v791
  %v793 = vmul.f32 %v770, 1.442695
  %v794 = vpow.pop %v793
  %v795 = vmul.f32 %v771, 1.442695
  %v796 = vpow.pop %v795
  %v797 = vmul.f32 %v772, 1.442695
  %v798 = vpow.pop %v797
  %v799 = vmul.f32 %v773, 1.442695
  %v800 = vpow.pop %v799
  %v801 = vmul.f32 %v774, 1.442695
  %v802 = vpow.pop %v801
  %v803 = vmul.f32 %v775, 1.442695
  %v804 = vpow.pop %v803
  %v805 = vmul.f32 %v776, 1.442695
  %v806 = vpow.pop %v805
  %v807 = vmul.f32 %v777, 1.442695
  %v808 = vpow.pop %v807
  %v809 = vmul.f32 %v778, 1.442695
  %v810 = vpow.pop %v809
  %827 = vset.pattern.permute.xlu0 0
  %828 = vperm.xlu0 %827, %v780
  %v829 = vpop.permute.xlu0 %828
  %830 = vset.pattern.permute.xlu0 0
  %831 = vperm.xlu0 %830, %v782
  %v832 = vpop.permute.xlu0 %831
  %833 = vset.pattern.permute.xlu0 0
  %834 = vperm.xlu0 %833, %v784
  %v835 = vpop.permute.xlu0 %834
  %836 = vset.pattern.permute.xlu0 0
  %837 = vperm.xlu0 %836, %v786
  %v838 = vpop.permute.xlu0 %837
  %839 = vset.pattern.permute.xlu0 0
  %840 = vperm.xlu0 %839, %v788
  %v841 = vpop.permute.xlu0 %840
  %842 = vset.pattern.permute.xlu0 0
  %843 = vperm.xlu0 %842, %v790
  %v844 = vpop.permute.xlu0 %843
  %845 = vset.pattern.permute.xlu0 0
  %846 = vperm.xlu0 %845, %v792
  %v847 = vpop.permute.xlu0 %846
  %848 = vset.pattern.permute.xlu0 0
  %849 = vperm.xlu0 %848, %v794
  %v850 = vpop.permute.xlu0 %849
  %851 = vset.pattern.permute.xlu0 0
  %852 = vperm.xlu0 %851, %v796
  %v853 = vpop.permute.xlu0 %852
  %854 = vset.pattern.permute.xlu0 0
  %855 = vperm.xlu0 %854, %v798
  %v856 = vpop.permute.xlu0 %855
  %857 = vset.pattern.permute.xlu0 0
  %858 = vperm.xlu0 %857, %v800
  %v859 = vpop.permute.xlu0 %858
  %860 = vset.pattern.permute.xlu0 0
  %861 = vperm.xlu0 %860, %v802
  %v862 = vpop.permute.xlu0 %861
  %863 = vset.pattern.permute.xlu0 0
  %864 = vperm.xlu0 %863, %v804
  %v865 = vpop.permute.xlu0 %864
  %866 = vset.pattern.permute.xlu0 0
  %867 = vperm.xlu0 %866, %v806
  %v868 = vpop.permute.xlu0 %867
  %869 = vset.pattern.permute.xlu0 0
  %870 = vperm.xlu0 %869, %v808
  %v871 = vpop.permute.xlu0 %870
  %872 = vset.pattern.permute.xlu0 0
  %873 = vperm.xlu0 %872, %v810
  %v874 = vpop.permute.xlu0 %873
  %v875 = vlaneseq
  %v876 = vshrl.u32 %v875, 7
  %v877 = vsub.s32 %v586, %v876
  %v878 = vrot.slane %v829, %v877
  %v879 = vlaneseq
  %v880 = vshrl.u32 %v879, 7
  %v881 = vsub.s32 %v586, %v880
  %v882 = vrot.slane %v832, %v881
  %v883 = vlaneseq
  %v884 = vshrl.u32 %v883, 7
  %v885 = vsub.s32 %v586, %v884
  %v886 = vrot.slane %v835, %v885
  %v887 = vlaneseq
  %v888 = vshrl.u32 %v887, 7
  %v889 = vsub.s32 %v586, %v888
  %v890 = vrot.slane %v838, %v889
  %v891 = vlaneseq
  %v892 = vshrl.u32 %v891, 7
  %v893 = vsub.s32 %v586, %v892
  %v894 = vrot.slane %v841, %v893
  %v895 = vlaneseq
  %v896 = vshrl.u32 %v895, 7
  %v897 = vsub.s32 %v586, %v896
  %v898 = vrot.slane %v844, %v897
  %v899 = vlaneseq
  %v900 = vshrl.u32 %v899, 7
  %v901 = vsub.s32 %v586, %v900
  %v902 = vrot.slane %v847, %v901
  %v903 = vlaneseq
  %v904 = vshrl.u32 %v903, 7
  %v905 = vsub.s32 %v586, %v904
  %v906 = vrot.slane %v850, %v905
  %v907 = vlaneseq
  %v908 = vshrl.u32 %v907, 7
  %v909 = vsub.s32 %v586, %v908
  %v910 = vrot.slane %v853, %v909
  %v911 = vlaneseq
  %v912 = vshrl.u32 %v911, 7
  %v913 = vsub.s32 %v586, %v912
  %v914 = vrot.slane %v856, %v913
  %v915 = vlaneseq
  %v916 = vshrl.u32 %v915, 7
  %v917 = vsub.s32 %v586, %v916
  %v918 = vrot.slane %v859, %v917
  %v919 = vlaneseq
  %v920 = vshrl.u32 %v919, 7
  %v921 = vsub.s32 %v586, %v920
  %v922 = vrot.slane %v862, %v921
  %v923 = vlaneseq
  %v924 = vshrl.u32 %v923, 7
  %v925 = vsub.s32 %v586, %v924
  %v926 = vrot.slane %v865, %v925
  %v927 = vlaneseq
  %v928 = vshrl.u32 %v927, 7
  %v929 = vsub.s32 %v586, %v928
  %v930 = vrot.slane %v868, %v929
  %v931 = vlaneseq
  %v932 = vshrl.u32 %v931, 7
  %v933 = vsub.s32 %v586, %v932
  %v934 = vrot.slane %v871, %v933
  %v935 = vlaneseq
  %v936 = vshrl.u32 %v935, 7
  %v937 = vsub.s32 %v586, %v936
  %v938 = vrot.slane %v874, %v937
  %v939 = vsel %vm651, %v882, %v878
  %v940 = vsel %vm653, %v886, %v939
  %v941 = vsel %vm655, %v890, %v940
  %v942 = vsel %vm657, %v894, %v941
  %v943 = vsel %vm659, %v898, %v942
  %v944 = vsel %vm661, %v902, %v943
  %v945 = vsel %vm663, %v906, %v944
  %v946 = vsel %vm651, %v914, %v910
  %v947 = vsel %vm653, %v918, %v946
  %v948 = vsel %vm655, %v922, %v947
  %v949 = vsel %vm657, %v926, %v948
  %v950 = vsel %vm659, %v930, %v949
  %v951 = vsel %vm661, %v934, %v950
  %v952 = vsel %vm663, %v938, %v951
  %v955 = vsel %vm674, %v945, 0.0
  %956 = vadd.xlane.f32.xlu0 %v955
  %v957 = vpop.xlane.xlu0 %956
  %v958 = vsel %vm674, %v952, 0.0
  %959 = vadd.xlane.f32.xlu0 %v958
  %v960 = vpop.xlane.xlu0 %959
  %v963 = vlaneseq
  %v964 = vshrl.u32 %v963, 7
  %v965 = vsub.s32 0, %v964
  %v966 = vrot.slane %v957, %v965
  %v967 = vlaneseq
  %v968 = vshrl.u32 %v967, 7
  %v969 = vsub.s32 1, %v968
  %v970 = vrot.slane %v957, %v969
  %v971 = vlaneseq
  %v972 = vshrl.u32 %v971, 7
  %v973 = vsub.s32 2, %v972
  %v974 = vrot.slane %v957, %v973
  %v975 = vlaneseq
  %v976 = vshrl.u32 %v975, 7
  %v977 = vsub.s32 3, %v976
  %v978 = vrot.slane %v957, %v977
  %v979 = vlaneseq
  %v980 = vshrl.u32 %v979, 7
  %v981 = vsub.s32 4, %v980
  %v982 = vrot.slane %v957, %v981
  %v983 = vlaneseq
  %v984 = vshrl.u32 %v983, 7
  %v985 = vsub.s32 5, %v984
  %v986 = vrot.slane %v957, %v985
  %v987 = vlaneseq
  %v988 = vshrl.u32 %v987, 7
  %v989 = vsub.s32 6, %v988
  %v990 = vrot.slane %v957, %v989
  %v991 = vlaneseq
  %v992 = vshrl.u32 %v991, 7
  %v993 = vsub.s32 7, %v992
  %v994 = vrot.slane %v957, %v993
  %v995 = vlaneseq
  %v996 = vshrl.u32 %v995, 7
  %v997 = vsub.s32 0, %v996
  %v998 = vrot.slane %v960, %v997
  %v999 = vlaneseq
  %v1000 = vshrl.u32 %v999, 7
  %v1001 = vsub.s32 1, %v1000
  %v1002 = vrot.slane %v960, %v1001
  %v1003 = vlaneseq
  %v1004 = vshrl.u32 %v1003, 7
  %v1005 = vsub.s32 2, %v1004
  %v1006 = vrot.slane %v960, %v1005
  %v1007 = vlaneseq
  %v1008 = vshrl.u32 %v1007, 7
  %v1009 = vsub.s32 3, %v1008
  %v1010 = vrot.slane %v960, %v1009
  %v1011 = vlaneseq
  %v1012 = vshrl.u32 %v1011, 7
  %v1013 = vsub.s32 4, %v1012
  %v1014 = vrot.slane %v960, %v1013
  %v1015 = vlaneseq
  %v1016 = vshrl.u32 %v1015, 7
  %v1017 = vsub.s32 5, %v1016
  %v1018 = vrot.slane %v960, %v1017
  %v1019 = vlaneseq
  %v1020 = vshrl.u32 %v1019, 7
  %v1021 = vsub.s32 6, %v1020
  %v1022 = vrot.slane %v960, %v1021
  %v1023 = vlaneseq
  %v1024 = vshrl.u32 %v1023, 7
  %v1025 = vsub.s32 7, %v1024
  %v1026 = vrot.slane %v960, %v1025
  %v1043 = vrcp.pop %v966
  %v1044 = vmul.f32 %v780, %v1043
  %v1045 = vrcp.pop %v970
  %v1046 = vmul.f32 %v782, %v1045
  %v1047 = vrcp.pop %v974
  %v1048 = vmul.f32 %v784, %v1047
  %v1049 = vrcp.pop %v978
  %v1050 = vmul.f32 %v786, %v1049
  %v1051 = vrcp.pop %v982
  %v1052 = vmul.f32 %v788, %v1051
  %v1053 = vrcp.pop %v986
  %v1054 = vmul.f32 %v790, %v1053
  %v1055 = vrcp.pop %v990
  %v1056 = vmul.f32 %v792, %v1055
  %v1057 = vrcp.pop %v994
  %v1058 = vmul.f32 %v794, %v1057
  %v1059 = vrcp.pop %v998
  %v1060 = vmul.f32 %v796, %v1059
  %v1061 = vrcp.pop %v1002
  %v1062 = vmul.f32 %v798, %v1061
  %v1063 = vrcp.pop %v1006
  %v1064 = vmul.f32 %v800, %v1063
  %v1065 = vrcp.pop %v1010
  %v1066 = vmul.f32 %v802, %v1065
  %v1067 = vrcp.pop %v1014
  %v1068 = vmul.f32 %v804, %v1067
  %v1069 = vrcp.pop %v1018
  %v1070 = vmul.f32 %v806, %v1069
  %v1071 = vrcp.pop %v1022
  %v1072 = vmul.f32 %v808, %v1071
  %v1073 = vrcp.pop %v1026
  %v1074 = vmul.f32 %v810, %v1073
  %1076 = vset.pattern.permute.xlu0 0
  %1077 = vperm.xlu0 %1076, %v1044
  %v1078 = vpop.permute.xlu0 %1077
  %1081 = vset.pattern.permute.xlu0 0
  %1082 = vperm.xlu0 %1081, %v1046
  %v1083 = vpop.permute.xlu0 %1082
  %1086 = vset.pattern.permute.xlu0 0
  %1087 = vperm.xlu0 %1086, %v1048
  %v1088 = vpop.permute.xlu0 %1087
  %1091 = vset.pattern.permute.xlu0 0
  %1092 = vperm.xlu0 %1091, %v1050
  %v1093 = vpop.permute.xlu0 %1092
  %1096 = vset.pattern.permute.xlu0 0
  %1097 = vperm.xlu0 %1096, %v1052
  %v1098 = vpop.permute.xlu0 %1097
  %1101 = vset.pattern.permute.xlu0 0
  %1102 = vperm.xlu0 %1101, %v1054
  %v1103 = vpop.permute.xlu0 %1102
  %1106 = vset.pattern.permute.xlu0 0
  %1107 = vperm.xlu0 %1106, %v1056
  %v1108 = vpop.permute.xlu0 %1107
  %1111 = vset.pattern.permute.xlu0 0
  %1112 = vperm.xlu0 %1111, %v1058
  %v1113 = vpop.permute.xlu0 %1112
  %1116 = vset.pattern.permute.xlu0 0
  %1117 = vperm.xlu0 %1116, %v1060
  %v1118 = vpop.permute.xlu0 %1117
  %1121 = vset.pattern.permute.xlu0 0
  %1122 = vperm.xlu0 %1121, %v1062
  %v1123 = vpop.permute.xlu0 %1122
  %1126 = vset.pattern.permute.xlu0 0
  %1127 = vperm.xlu0 %1126, %v1064
  %v1128 = vpop.permute.xlu0 %1127
  %1131 = vset.pattern.permute.xlu0 0
  %1132 = vperm.xlu0 %1131, %v1066
  %v1133 = vpop.permute.xlu0 %1132
  %1136 = vset.pattern.permute.xlu0 0
  %1137 = vperm.xlu0 %1136, %v1068
  %v1138 = vpop.permute.xlu0 %1137
  %1141 = vset.pattern.permute.xlu0 0
  %1142 = vperm.xlu0 %1141, %v1070
  %v1143 = vpop.permute.xlu0 %1142
  %1146 = vset.pattern.permute.xlu0 0
  %1147 = vperm.xlu0 %1146, %v1072
  %v1148 = vpop.permute.xlu0 %1147
  %1151 = vset.pattern.permute.xlu0 0
  %1152 = vperm.xlu0 %1151, %v1074
  %v1153 = vpop.permute.xlu0 %1152
  %v1155 = vmul.f32 %v1078, %v42
  %v1156 = vmul.f32 %v1083, %v43
  %v1157 = vmul.f32 %v1088, %v44
  %v1158 = vmul.f32 %v1093, %v45
  %v1159 = vmul.f32 %v1098, %v46
  %v1160 = vmul.f32 %v1103, %v47
  %v1161 = vmul.f32 %v1108, %v48
  %v1162 = vmul.f32 %v1113, %v49
  %v1163 = vmul.f32 %v1118, %v50
  %v1164 = vmul.f32 %v1123, %v51
  %v1165 = vmul.f32 %v1128, %v52
  %v1166 = vmul.f32 %v1133, %v53
  %v1167 = vmul.f32 %v1138, %v54
  %v1168 = vmul.f32 %v1143, %v55
  %v1169 = vmul.f32 %v1148, %v56
  %v1170 = vmul.f32 %v1153, %v57
  %v1171 = vsel %vm322, %v1155, 0.0
  %v1172 = vrot.slane %v1171, 4
  %v1173 = vadd.f32 %v1171, %v1172
  %v1174 = vrot.slane %v1173, 2
  %v1175 = vadd.f32 %v1173, %v1174
  %v1176 = vrot.slane %v1175, 1
  %v1177 = vadd.f32 %v1175, %v1176
  %v1178 = vsel %vm322, %v1156, 0.0
  %v1179 = vrot.slane %v1178, 4
  %v1180 = vadd.f32 %v1178, %v1179
  %v1181 = vrot.slane %v1180, 2
  %v1182 = vadd.f32 %v1180, %v1181
  %v1183 = vrot.slane %v1182, 1
  %v1184 = vadd.f32 %v1182, %v1183
  %v1185 = vsel %vm322, %v1157, 0.0
  %v1186 = vrot.slane %v1185, 4
  %v1187 = vadd.f32 %v1185, %v1186
  %v1188 = vrot.slane %v1187, 2
  %v1189 = vadd.f32 %v1187, %v1188
  %v1190 = vrot.slane %v1189, 1
  %v1191 = vadd.f32 %v1189, %v1190
  %v1192 = vsel %vm322, %v1158, 0.0
  %v1193 = vrot.slane %v1192, 4
  %v1194 = vadd.f32 %v1192, %v1193
  %v1195 = vrot.slane %v1194, 2
  %v1196 = vadd.f32 %v1194, %v1195
  %v1197 = vrot.slane %v1196, 1
  %v1198 = vadd.f32 %v1196, %v1197
  %v1199 = vsel %vm322, %v1159, 0.0
  %v1200 = vrot.slane %v1199, 4
  %v1201 = vadd.f32 %v1199, %v1200
  %v1202 = vrot.slane %v1201, 2
  %v1203 = vadd.f32 %v1201, %v1202
  %v1204 = vrot.slane %v1203, 1
  %v1205 = vadd.f32 %v1203, %v1204
  %v1206 = vsel %vm322, %v1160, 0.0
  %v1207 = vrot.slane %v1206, 4
  %v1208 = vadd.f32 %v1206, %v1207
  %v1209 = vrot.slane %v1208, 2
  %v1210 = vadd.f32 %v1208, %v1209
  %v1211 = vrot.slane %v1210, 1
  %v1212 = vadd.f32 %v1210, %v1211
  %v1213 = vsel %vm322, %v1161, 0.0
  %v1214 = vrot.slane %v1213, 4
  %v1215 = vadd.f32 %v1213, %v1214
  %v1216 = vrot.slane %v1215, 2
  %v1217 = vadd.f32 %v1215, %v1216
  %v1218 = vrot.slane %v1217, 1
  %v1219 = vadd.f32 %v1217, %v1218
  %v1220 = vsel %vm322, %v1162, 0.0
  %v1221 = vrot.slane %v1220, 4
  %v1222 = vadd.f32 %v1220, %v1221
  %v1223 = vrot.slane %v1222, 2
  %v1224 = vadd.f32 %v1222, %v1223
  %v1225 = vrot.slane %v1224, 1
  %v1226 = vadd.f32 %v1224, %v1225
  %v1227 = vsel %vm322, %v1163, 0.0
  %v1228 = vrot.slane %v1227, 4
  %v1229 = vadd.f32 %v1227, %v1228
  %v1230 = vrot.slane %v1229, 2
  %v1231 = vadd.f32 %v1229, %v1230
  %v1232 = vrot.slane %v1231, 1
  %v1233 = vadd.f32 %v1231, %v1232
  %v1234 = vsel %vm322, %v1164, 0.0
  %v1235 = vrot.slane %v1234, 4
  %v1236 = vadd.f32 %v1234, %v1235
  %v1237 = vrot.slane %v1236, 2
  %v1238 = vadd.f32 %v1236, %v1237
  %v1239 = vrot.slane %v1238, 1
  %v1240 = vadd.f32 %v1238, %v1239
  %v1241 = vsel %vm322, %v1165, 0.0
  %v1242 = vrot.slane %v1241, 4
  %v1243 = vadd.f32 %v1241, %v1242
  %v1244 = vrot.slane %v1243, 2
  %v1245 = vadd.f32 %v1243, %v1244
  %v1246 = vrot.slane %v1245, 1
  %v1247 = vadd.f32 %v1245, %v1246
  %v1248 = vsel %vm322, %v1166, 0.0
  %v1249 = vrot.slane %v1248, 4
  %v1250 = vadd.f32 %v1248, %v1249
  %v1251 = vrot.slane %v1250, 2
  %v1252 = vadd.f32 %v1250, %v1251
  %v1253 = vrot.slane %v1252, 1
  %v1254 = vadd.f32 %v1252, %v1253
  %v1255 = vsel %vm322, %v1167, 0.0
  %v1256 = vrot.slane %v1255, 4
  %v1257 = vadd.f32 %v1255, %v1256
  %v1258 = vrot.slane %v1257, 2
  %v1259 = vadd.f32 %v1257, %v1258
  %v1260 = vrot.slane %v1259, 1
  %v1261 = vadd.f32 %v1259, %v1260
  %v1262 = vsel %vm322, %v1168, 0.0
  %v1263 = vrot.slane %v1262, 4
  %v1264 = vadd.f32 %v1262, %v1263
  %v1265 = vrot.slane %v1264, 2
  %v1266 = vadd.f32 %v1264, %v1265
  %v1267 = vrot.slane %v1266, 1
  %v1268 = vadd.f32 %v1266, %v1267
  %v1269 = vsel %vm322, %v1169, 0.0
  %v1270 = vrot.slane %v1269, 4
  %v1271 = vadd.f32 %v1269, %v1270
  %v1272 = vrot.slane %v1271, 2
  %v1273 = vadd.f32 %v1271, %v1272
  %v1274 = vrot.slane %v1273, 1
  %v1275 = vadd.f32 %v1273, %v1274
  %v1276 = vsel %vm322, %v1170, 0.0
  %v1277 = vrot.slane %v1276, 4
  %v1278 = vadd.f32 %v1276, %v1277
  %v1279 = vrot.slane %v1278, 2
  %v1280 = vadd.f32 %v1278, %v1279
  %v1281 = vrot.slane %v1280, 1
  %v1282 = vadd.f32 %v1280, %v1281
  %v1283 = vunpack.c.l.bf16 %v24
  %v1284 = vunpack.c.l.bf16 %v25
  %v1301 = vsel %vm651, %v1184, %v1177
  %v1302 = vsel %vm653, %v1191, %v1301
  %v1303 = vsel %vm655, %v1198, %v1302
  %v1304 = vsel %vm657, %v1205, %v1303
  %v1305 = vsel %vm659, %v1212, %v1304
  %v1306 = vsel %vm661, %v1219, %v1305
  %v1307 = vsel %vm663, %v1226, %v1306
  %v1308 = vsel %vm651, %v1240, %v1233
  %v1309 = vsel %vm653, %v1247, %v1308
  %v1310 = vsel %vm655, %v1254, %v1309
  %v1311 = vsel %vm657, %v1261, %v1310
  %v1312 = vsel %vm659, %v1268, %v1311
  %v1313 = vsel %vm661, %v1275, %v1312
  %v1314 = vsel %vm663, %v1282, %v1313
  %v1317 = vadd.f32 %v1283, %v1307
  %v1318 = vadd.f32 %v1284, %v1314
  %v1319 = vsel %vm81, %v1317, 0.0
  %1320 = vadd.xlane.f32.xlu0 %v1319
  %v1321 = vpop.xlane.xlu0 %1320
  %v1322 = vsel %vm81, %v1318, 0.0
  %1323 = vadd.xlane.f32.xlu0 %v1322
  %v1324 = vpop.xlane.xlu0 %1323
  %v1325 = vrcp.pop 32.0
  %v1326 = vmul.f32 %v1321, %v1325
  %v1327 = vmul.f32 %v1324, %v1325
  %v1328 = vsub.f32 %v1317, %v1326
  %v1329 = vsub.f32 %v1318, %v1327
  %v1330 = vmul.f32 %v1328, %v1328
  %v1331 = vmul.f32 %v1329, %v1329
  %v1332 = vsel %vm81, %v1330, 0.0
  %1333 = vadd.xlane.f32.xlu0 %v1332
  %v1334 = vpop.xlane.xlu0 %1333
  %v1335 = vsel %vm81, %v1331, 0.0
  %1336 = vadd.xlane.f32.xlu0 %v1335
  %v1337 = vpop.xlane.xlu0 %1336
  %v1338 = vmul.f32 %v1334, %v1325
  %v1339 = vmul.f32 %v1337, %v1325
  %v1340 = vadd.f32 %v1338, 1e-12
  %v1341 = vadd.f32 %v1339, 1e-12
  %v1342 = vrsqrt.pop %v1340
  %v1343 = vrsqrt.pop %v1341
  %v1344 = vmul.f32 %v1328, %v1342
  %v1345 = vmul.f32 %v1329, %v1343
  %v1346 = vld [vmem:[%s4] sm:$0x1]
  %v1348 = vlaneseq
  %v1349 = vshrl.u32 %v1348, 7
  %v1350 = vsub.s32 0, %v1349
  %v1351 = vrot.slane %v1346, %v1350
  %v1353 = vmul.f32 %v1344, %v1351
  %v1354 = vmul.f32 %v1345, %v1351
  %v1355 = vld [vmem:[%s5] sm:$0x1]
  %v1357 = vlaneseq
  %v1358 = vshrl.u32 %v1357, 7
  %v1359 = vsub.s32 0, %v1358
  %v1360 = vrot.slane %v1355, %v1359
  %v1362 = vadd.f32 %v1353, %v1360
  %v1363 = vadd.f32 %v1354, %v1360
  %v1364 = vpack.c.bf16 %v1363, %v1362
  %v1366 = vunpack.c.l.b16 %v1364
  %v1367 = vunpack.c.h.b16 %v1364
  %v1368 = vpack.c.b16 %v1366, %v1366
  %v1369 = vpack.c.b16 %v1367, %v1367
  %1372 = vst.msk [vmem:[%s6] sm:$0xf] %vm322, %v1368
  %1373 = vst.msk [vmem:[%s6 + $0x4] sm:$0xf] %vm322, %v1369
  // Predicated region
  $region26: #{bert_encoder_forward.19} parent=0 // pred_check
    _
  $region27: #{bert_encoder_forward.19} parent=0 // pred_check_branch
    %1375 = sbr.rel (0) target = $region29
  $region28: #{bert_encoder_forward.19} parent=0 // pred_region
    _
  $region29: #{bert_encoder_forward.19} parent=0 // pred_fallthru
    _
  // Predicated region
  $region30: #{bert_encoder_forward.19} parent=0 // pred_check
    _
  $region31: #{bert_encoder_forward.19} parent=0 // pred_check_branch
    %1377 = sbr.rel (0) target = $region33
  $region32: #{bert_encoder_forward.19} parent=0 // pred_region
    _
  $region33: #{bert_encoder_forward.19} parent=0 // pred_fallthru
    _

</llo_original>
